<compile_context>
chip_gen: v7x
topology: tpu7x:2x2x1
jax: 0.10.0
libtpu: 0.0.40
codegen_flags: <defaults>
</compile_context>

<pallas_src>
import math
from functools import partial

import jax
import jax.numpy as jnp
from jax import lax
from jax.experimental import pallas as pl
from jax.experimental.pallas import tpu as pltpu


# --------------------------------- kernel ------------------------------------

def _cross_attention_kernel(x_ref, ctx_ref, wq_ref, wkv_ref, wo_ref, bo_ref,
                            o_ref, ctx_acc_ref, *, n_heads, d_head, skv_actual):
    """CrossAttention forward for one (batch, Sq-tile) block."""
    hd = n_heads * d_head

    xb = x_ref[...].astype(jnp.bfloat16)        # (TSq, Dq)
    cb = ctx_ref[...].astype(jnp.bfloat16)      # (Skv_pad, Dc)
    skv_pad = cb.shape[0]

    # Projections: softmax scale is pre-folded into wq; K and V come from one
    # fused (Dc, 2*hd) matmul.  bf16 MXU operands, f32 accumulation, then a
    # single cast of q / k / v to bf16.
    q = jnp.dot(xb, wq_ref[...],
                preferred_element_type=jnp.float32).astype(jnp.bfloat16)   # (TSq, hd)
    kv = jnp.dot(cb, wkv_ref[...], preferred_element_type=jnp.float32)     # (Skv, 2*hd)
    k = kv[:, :hd].astype(jnp.bfloat16)
    v = kv[:, hd:].astype(jnp.bfloat16)

    # One transpose for all heads -> per-head sublane slices feed the score
    # matmul directly (no per-head vxpose).
    kT = k.T                                    # (hd, Skv_pad) bf16

    # Key-padding mask (padded columns -> -inf before softmax).
    if skv_pad != skv_actual:
        key_idx = lax.broadcasted_iota(jnp.int32, (1, skv_pad), 1)
        neg_mask = jnp.where(key_idx < skv_actual, 0.0, -jnp.inf).astype(jnp.float32)
    else:
        neg_mask = None

    for h in range(n_heads):                    # static unroll over heads
        lo = h * d_head
        qh = q[:, lo:lo + d_head]               # (TSq, d)   bf16
        kTh = kT[lo:lo + d_head, :]             # (d, Skv)   bf16 (sublane slice)
        vh = v[:, lo:lo + d_head]               # (Skv, d)   bf16

        s = jnp.dot(qh, kTh, preferred_element_type=jnp.float32)   # (TSq, Skv)
        if neg_mask is not None:
            s = s + neg_mask
        m = jnp.max(s, axis=-1, keepdims=True)
        e = jnp.exp(s - m)
        l = jnp.sum(e, axis=-1, keepdims=True)

        # Normalize after PV: the reciprocal multiply touches (TSq, d_head),
        # not (TSq, Skv).
        oh = jnp.dot(e.astype(jnp.bfloat16), vh,
                     preferred_element_type=jnp.float32)            # (TSq, d)
        oh = oh * pl.reciprocal(l, approx=True)
        ctx_acc_ref[:, lo:lo + d_head] = oh.astype(jnp.bfloat16)

    # Single output projection with K = hd (full MXU depth) + bias epilogue.
    out = jnp.dot(ctx_acc_ref[...], wo_ref[...],
                  preferred_element_type=jnp.float32)                # (TSq, Dq)
    o_ref[...] = (out + bo_ref[...]).astype(o_ref.dtype)


# -------------------------------- wrapper -------------------------------------

def _pick_sq_tile(sq):
    for t in (512, 256, 128):
        if sq % t == 0:
            return t
    return sq


def cross_attention(x, context, params, *, n_heads, d_head):
    """x: (B, Sq, query_dim) f32; context: (B, Skv, context_dim) f32 or None."""
    if context is None:
        context = x

    B, Sq, Dq = x.shape
    Bc, Skv, Dc = context.shape
    assert Bc == B
    # Reference quirk: to_v = nn.Linear(query_dim, ...) applied to `context`.
    assert Dc == Dq, "reference CrossAttention requires context_dim == query_dim"
    hd = n_heads * d_head

    # Pad keys/values up to a lane-dense multiple of 128; mask in-kernel.
    skv_pad = ((Skv + 127) // 128) * 128
    if skv_pad != Skv:
        context = jnp.pad(context, ((0, 0), (0, skv_pad - Skv), (0, 0)))

    tsq = _pick_sq_tile(Sq)
    n_sq = Sq // tsq

    wq, wkv = params["wq"], params["wkv"]
    wo, bo = params["wo"], params["bo"]

    kernel = partial(_cross_attention_kernel,
                     n_heads=n_heads, d_head=d_head, skv_actual=Skv)

    flops = 2 * B * (Sq * Dq * hd                       # q proj
                     + n_sq * skv_pad * Dc * 2 * hd     # kv proj (per Sq tile)
                     + Sq * skv_pad * hd                # q @ k^T
                     + Sq * skv_pad * hd                # e @ v
                     + Sq * hd * Dq)                    # out proj
    transcendentals = B * n_heads * Sq * skv_pad
    bytes_accessed = int(
        x.size * x.dtype.itemsize
        + B * skv_pad * Dc * 4
        + sum(int(w.size) * w.dtype.itemsize for w in (wq, wkv, wo, bo))
        + B * Sq * Dq * 4)

    # VMEM budget: double-buffered pipeline blocks + scratch + in-kernel
    # temporaries, with 2x headroom (clamped well below v7x's 64 MiB).
    blk_bytes = 2 * (tsq * Dq * 4 + skv_pad * Dc * 4 + tsq * Dq * 4
                     + (Dq * hd + Dc * 2 * hd + hd * Dq) * 2 + Dq * 4)
    tmp_bytes = (tsq * hd * 2                  # q bf16
                 + skv_pad * 2 * hd * 4        # kv f32
                 + 2 * skv_pad * hd * 2        # k, v bf16
                 + hd * skv_pad * 2            # kT bf16
                 + 3 * tsq * skv_pad * 4       # s / e / temporaries f32
                 + tsq * hd * 6)               # ctx_acc scratch + out f32
    vmem_limit = int(min(48 * 1024 * 1024,
                         max(8 * 1024 * 1024, 2 * (blk_bytes + tmp_bytes))))

    return pl.pallas_call(
        kernel,
        out_shape=jax.ShapeDtypeStruct((B, Sq, Dq), x.dtype),
        grid_spec=pltpu.PrefetchScalarGridSpec(
            num_scalar_prefetch=0,
            grid=(B, n_sq),
            in_specs=[
                pl.BlockSpec((None, tsq, Dq), lambda b, i: (b, i, 0)),
                pl.BlockSpec((None, skv_pad, Dc), lambda b, i: (b, 0, 0)),
                pl.BlockSpec((Dq, hd), lambda b, i: (0, 0)),
                pl.BlockSpec((Dc, 2 * hd), lambda b, i: (0, 0)),
                pl.BlockSpec((hd, Dq), lambda b, i: (0, 0)),
                pl.BlockSpec((1, Dq), lambda b, i: (0, 0)),
            ],
            out_specs=pl.BlockSpec((None, tsq, Dq), lambda b, i: (b, i, 0)),
            scratch_shapes=[pltpu.VMEM((tsq, hd), jnp.bfloat16)],
        ),
        compiler_params=pltpu.CompilerParams(
            dimension_semantics=("parallel", "parallel"),
            vmem_limit_bytes=vmem_limit),
        cost_estimate=pl.CostEstimate(flops=int(flops),
                                      transcendentals=int(transcendentals),
                                      bytes_accessed=bytes_accessed),
    )(x, context, wq, wkv, wo, bo)


# --------------------------- params & JAX reference ---------------------------

def init_params(key, query_dim, context_dim, n_heads, d_head):
    hd = n_heads * d_head
    scale = d_head ** (-0.5)
    ks = jax.random.split(key, 5)

    def nrm(k, shape, fan_in):
        return (fan_in ** -0.5) * jax.random.normal(k, shape, dtype=jnp.float32)

    # Weights pre-transposed to (in, out); stored bf16 (f32 accumulation
    # in-kernel).  Softmax scale folded into wq; wk & wv packed into wkv.
    wq = (nrm(ks[0], (query_dim, hd), query_dim) * scale).astype(jnp.bfloat16)
    wk = nrm(ks[1], (context_dim, hd), context_dim)
    # reference: to_v = nn.Linear(query_dim, hd) (applied to context)
    wv = nrm(ks[2], (query_dim, hd), query_dim)
    wkv = jnp.concatenate([wk, wv], axis=1).astype(jnp.bfloat16)
    return {
        "wq": wq,
        "wkv": wkv,
        "wo": nrm(ks[3], (hd, query_dim), hd).astype(jnp.bfloat16),
        "bo": nrm(ks[4], (1, query_dim), hd),            # bias stays f32
    }


def cross_attention_ref(x, context, params, *, n_heads, d_head):
    """Pure-JAX f32 reference using the same (bf16-stored, scale-folded) weights."""
    if context is None:
        context = x
    B, Sq, Dq = x.shape
    hd = n_heads * d_head
    wq = params["wq"].astype(jnp.float32)     # scale already folded in
    wkv = params["wkv"].astype(jnp.float32)
    wo = params["wo"].astype(jnp.float32)
    bo = params["bo"]
    q = (x @ wq).reshape(B, Sq, n_heads, d_head).transpose(0, 2, 1, 3)
    kv = context @ wkv
    k = kv[..., :hd].reshape(B, -1, n_heads, d_head).transpose(0, 2, 1, 3)
    v = kv[..., hd:].reshape(B, -1, n_heads, d_head).transpose(0, 2, 1, 3)
    s = jnp.einsum("bhqd,bhkd->bhqk", q, k)
    p = jax.nn.softmax(s, axis=-1)
    o = jnp.einsum("bhqk,bhkd->bhqd", p, v).transpose(0, 2, 1, 3).reshape(B, Sq, -1)
    return o @ wo + bo


# ---------------------------------- main ---------------------------------------

if __name__ == "__main__":
    B, SQ, SKV = 2, 128, 77          # Skv=77 exercises the padding+mask path
    QUERY_DIM = 256
    CONTEXT_DIM = 256                # must equal QUERY_DIM (reference to_v quirk)
    N_HEADS, D_HEAD = 4, 64

    key = jax.random.PRNGKey(0)
    kx, kc, kp = jax.random.split(key, 3)
    x = jax.random.normal(kx, (B, SQ, QUERY_DIM), dtype=jnp.float32)
    context = jax.random.normal(kc, (B, SKV, CONTEXT_DIM), dtype=jnp.float32)
    params = init_params(kp, QUERY_DIM, CONTEXT_DIM, N_HEADS, D_HEAD)

    fwd = jax.jit(partial(cross_attention, n_heads=N_HEADS, d_head=D_HEAD))

    # self-attention path (context=None in the reference forward)
    out_self = jax.block_until_ready(fwd(x, x, params))
    # cross-attention path (ragged key length -> padded to 128 + masked)
    out_cross = jax.block_until_ready(fwd(x, context, params))

    assert out_self.shape == (B, SQ, QUERY_DIM), out_self.shape
    assert out_cross.shape == (B, SQ, QUERY_DIM), out_cross.shape
    assert bool(jnp.all(jnp.isfinite(out_self)))
    assert bool(jnp.all(jnp.isfinite(out_cross)))

    # loose tolerance: kernel runs the MXU in bf16 with f32 accumulation and
    # uses the EUP approximate reciprocal for the softmax denominator
    ref_self = cross_attention_ref(x, x, params, n_heads=N_HEADS, d_head=D_HEAD)
    ref_cross = cross_attention_ref(x, context, params, n_heads=N_HEADS, d_head=D_HEAD)
    assert bool(jnp.allclose(out_self, ref_self, atol=3e-2, rtol=3e-2))
    assert bool(jnp.allclose(out_cross, ref_cross, atol=3e-2, rtol=3e-2))

    print("KERNEL_OK")
</pallas_src>

<mosaic_0001>
module attributes {stable_mosaic.version = 11 : i64} {
  func.func @_cross_attention_kernel(%arg0: i32, %arg1: i32, %arg2: memref<1x128x256xf32, #tpu.memory_space<vmem>>, %arg3: memref<1x128x256xf32, #tpu.memory_space<vmem>>, %arg4: memref<256x256xbf16, #tpu.memory_space<vmem>>, %arg5: memref<256x512xbf16, #tpu.memory_space<vmem>>, %arg6: memref<256x256xbf16, #tpu.memory_space<vmem>>, %arg7: memref<1x256xf32, #tpu.memory_space<vmem>>, %arg8: memref<1x128x256xf32, #tpu.memory_space<vmem>>, %arg9: memref<128x256xbf16, #tpu.memory_space<vmem>>) attributes {dimension_semantics = [#tpu.dimension_semantics<parallel>, #tpu.dimension_semantics<parallel>], iteration_bounds = array<i64: 2, 1>, scalar_prefetch = 0 : i64, scratch_operands = 1 : i64, tpu.core_type = #tpu.core_type<tc>, window_params = [{transform_indices = @transform_0, window_bounds = array<i64: 1, 128, 256>}, {transform_indices = @transform_1, window_bounds = array<i64: 1, 128, 256>}, {pipeline_mode = #tpu.pipeline_mode<synchronous>, transform_indices = @transform_2, window_bounds = array<i64: 256, 256>}, {pipeline_mode = #tpu.pipeline_mode<synchronous>, transform_indices = @transform_3, window_bounds = array<i64: 256, 512>}, {pipeline_mode = #tpu.pipeline_mode<synchronous>, transform_indices = @transform_4, window_bounds = array<i64: 256, 256>}, {pipeline_mode = #tpu.pipeline_mode<synchronous>, transform_indices = @transform_5, window_bounds = array<i64: 1, 256>}, {transform_indices = @transform_6, window_bounds = array<i64: 1, 128, 256>}]} {
    %c0 = arith.constant 0 : index
    %c0_0 = arith.constant 0 : index
    %c0_1 = arith.constant 0 : index
    %0 = vector.load %arg2[%c0, %c0_0, %c0_1] : memref<1x128x256xf32, #tpu.memory_space<vmem>>, vector<1x128x256xf32>
    %1 = vector.shape_cast %0 : vector<1x128x256xf32> to vector<128x256xf32>
    %2 = arith.truncf %1 : vector<128x256xf32> to vector<128x256xbf16>
    %c0_2 = arith.constant 0 : index
    %c0_3 = arith.constant 0 : index
    %c0_4 = arith.constant 0 : index
    %3 = vector.load %arg3[%c0_2, %c0_3, %c0_4] : memref<1x128x256xf32, #tpu.memory_space<vmem>>, vector<1x128x256xf32>
    %4 = vector.shape_cast %3 : vector<1x128x256xf32> to vector<128x256xf32>
    %5 = arith.truncf %4 : vector<128x256xf32> to vector<128x256xbf16>
    %c0_5 = arith.constant 0 : index
    %c0_6 = arith.constant 0 : index
    %6 = vector.load %arg4[%c0_5, %c0_6] : memref<256x256xbf16, #tpu.memory_space<vmem>>, vector<256x256xbf16>
    %cst = arith.constant dense<0.000000e+00> : vector<128x256xf32>
    %7 = tpu.matmul %2, %6, %cst {dimension_numbers = #tpu.dot_dimension_numbers<[1], [0], [0], [1], [0, 0, 1, 1], [], []>} : vector<128x256xbf16>, vector<256x256xbf16>, vector<128x256xf32> -> vector<128x256xf32>
    %8 = arith.truncf %7 : vector<128x256xf32> to vector<128x256xbf16>
    %c0_7 = arith.constant 0 : index
    %c0_8 = arith.constant 0 : index
    %9 = vector.load %arg5[%c0_7, %c0_8] : memref<256x512xbf16, #tpu.memory_space<vmem>>, vector<256x512xbf16>
    %cst_9 = arith.constant dense<0.000000e+00> : vector<128x512xf32>
    %10 = tpu.matmul %5, %9, %cst_9 {dimension_numbers = #tpu.dot_dimension_numbers<[1], [0], [0], [1], [0, 0, 1, 1], [], []>} : vector<128x256xbf16>, vector<256x512xbf16>, vector<128x512xf32> -> vector<128x512xf32>
    %11 = vector.extract_strided_slice %10 {offsets = [0, 0], sizes = [128, 256], strides = [1, 1]} : vector<128x512xf32> to vector<128x256xf32>
    %12 = arith.truncf %11 : vector<128x256xf32> to vector<128x256xbf16>
    %13 = vector.extract_strided_slice %10 {offsets = [0, 256], sizes = [128, 256], strides = [1, 1]} : vector<128x512xf32> to vector<128x256xf32>
    %14 = arith.truncf %13 : vector<128x256xf32> to vector<128x256xbf16>
    %15 = tpu.transpose %12, [1, 0] : vector<128x256xbf16> -> vector<256x128xbf16>
    %16 = vector.extract_strided_slice %8 {offsets = [0, 0], sizes = [128, 64], strides = [1, 1]} : vector<128x256xbf16> to vector<128x64xbf16>
    %17 = vector.extract_strided_slice %15 {offsets = [0, 0], sizes = [64, 128], strides = [1, 1]} : vector<256x128xbf16> to vector<64x128xbf16>
    %18 = vector.extract_strided_slice %14 {offsets = [0, 0], sizes = [128, 64], strides = [1, 1]} : vector<128x256xbf16> to vector<128x64xbf16>
    %cst_10 = arith.constant dense<0.000000e+00> : vector<128x128xf32>
    %19 = tpu.matmul %16, %17, %cst_10 {dimension_numbers = #tpu.dot_dimension_numbers<[1], [0], [0], [1], [0, 0, 1, 1], [], []>} : vector<128x64xbf16>, vector<64x128xbf16>, vector<128x128xf32> -> vector<128x128xf32>
    %cst_11 = arith.constant dense<0xFF800000> : vector<128xf32>
    %20 = vector.multi_reduction <maximumf>, %19, %cst_11 [1] : vector<128x128xf32> to vector<128xf32>
    %21 = vector.shape_cast %20 : vector<128xf32> to vector<128x1xf32>
    %22 = vector.broadcast %21 : vector<128x1xf32> to vector<128x128xf32>
    %23 = arith.subf %19, %22 : vector<128x128xf32>
    %24 = math.exp %23 : vector<128x128xf32>
    %cst_12 = arith.constant dense<0.000000e+00> : vector<128xf32>
    %25 = vector.multi_reduction <add>, %24, %cst_12 [1] : vector<128x128xf32> to vector<128xf32>
    %26 = vector.shape_cast %25 : vector<128xf32> to vector<128x1xf32>
    %27 = arith.truncf %24 : vector<128x128xf32> to vector<128x128xbf16>
    %cst_13 = arith.constant dense<0.000000e+00> : vector<128x64xf32>
    %28 = tpu.matmul %27, %18, %cst_13 {dimension_numbers = #tpu.dot_dimension_numbers<[1], [0], [0], [1], [0, 0, 1, 1], [], []>} : vector<128x128xbf16>, vector<128x64xbf16>, vector<128x64xf32> -> vector<128x64xf32>
    %29 = tpu.reciprocal %26 {approx = true} : vector<128x1xf32> -> vector<128x1xf32>
    %30 = vector.broadcast %29 : vector<128x1xf32> to vector<128x64xf32>
    %31 = arith.mulf %28, %30 : vector<128x64xf32>
    %32 = arith.truncf %31 : vector<128x64xf32> to vector<128x64xbf16>
    %c0_14 = arith.constant 0 : index
    %c0_15 = arith.constant 0 : index
    %33 = vector.load %arg9[%c0_14, %c0_15] : memref<128x256xbf16, #tpu.memory_space<vmem>>, vector<128x64xbf16>
    tpu.vector_store %arg9[%c0_14, %c0_15], %32 {strides = array<i32>} : memref<128x256xbf16, #tpu.memory_space<vmem>>, vector<128x64xbf16>,
    %34 = vector.extract_strided_slice %8 {offsets = [0, 64], sizes = [128, 64], strides = [1, 1]} : vector<128x256xbf16> to vector<128x64xbf16>
    %35 = vector.extract_strided_slice %15 {offsets = [64, 0], sizes = [64, 128], strides = [1, 1]} : vector<256x128xbf16> to vector<64x128xbf16>
    %36 = vector.extract_strided_slice %14 {offsets = [0, 64], sizes = [128, 64], strides = [1, 1]} : vector<128x256xbf16> to vector<128x64xbf16>
    %cst_16 = arith.constant dense<0.000000e+00> : vector<128x128xf32>
    %37 = tpu.matmul %34, %35, %cst_16 {dimension_numbers = #tpu.dot_dimension_numbers<[1], [0], [0], [1], [0, 0, 1, 1], [], []>} : vector<128x64xbf16>, vector<64x128xbf16>, vector<128x128xf32> -> vector<128x128xf32>
    %cst_17 = arith.constant dense<0xFF800000> : vector<128xf32>
    %38 = vector.multi_reduction <maximumf>, %37, %cst_17 [1] : vector<128x128xf32> to vector<128xf32>
    %39 = vector.shape_cast %38 : vector<128xf32> to vector<128x1xf32>
    %40 = vector.broadcast %39 : vector<128x1xf32> to vector<128x128xf32>
    %41 = arith.subf %37, %40 : vector<128x128xf32>
    %42 = math.exp %41 : vector<128x128xf32>
    %cst_18 = arith.constant dense<0.000000e+00> : vector<128xf32>
    %43 = vector.multi_reduction <add>, %42, %cst_18 [1] : vector<128x128xf32> to vector<128xf32>
    %44 = vector.shape_cast %43 : vector<128xf32> to vector<128x1xf32>
    %45 = arith.truncf %42 : vector<128x128xf32> to vector<128x128xbf16>
    %cst_19 = arith.constant dense<0.000000e+00> : vector<128x64xf32>
    %46 = tpu.matmul %45, %36, %cst_19 {dimension_numbers = #tpu.dot_dimension_numbers<[1], [0], [0], [1], [0, 0, 1, 1], [], []>} : vector<128x128xbf16>, vector<128x64xbf16>, vector<128x64xf32> -> vector<128x64xf32>
    %47 = tpu.reciprocal %44 {approx = true} : vector<128x1xf32> -> vector<128x1xf32>
    %48 = vector.broadcast %47 : vector<128x1xf32> to vector<128x64xf32>
    %49 = arith.mulf %46, %48 : vector<128x64xf32>
    %50 = arith.truncf %49 : vector<128x64xf32> to vector<128x64xbf16>
    %c0_20 = arith.constant 0 : index
    %c64 = arith.constant 64 : index
    %51 = vector.load %arg9[%c0_20, %c64] : memref<128x256xbf16, #tpu.memory_space<vmem>>, vector<128x64xbf16>
    tpu.vector_store %arg9[%c0_20, %c64], %50 {strides = array<i32>} : memref<128x256xbf16, #tpu.memory_space<vmem>>, vector<128x64xbf16>,
    %52 = vector.extract_strided_slice %8 {offsets = [0, 128], sizes = [128, 64], strides = [1, 1]} : vector<128x256xbf16> to vector<128x64xbf16>
    %53 = vector.extract_strided_slice %15 {offsets = [128, 0], sizes = [64, 128], strides = [1, 1]} : vector<256x128xbf16> to vector<64x128xbf16>
    %54 = vector.extract_strided_slice %14 {offsets = [0, 128], sizes = [128, 64], strides = [1, 1]} : vector<128x256xbf16> to vector<128x64xbf16>
    %cst_21 = arith.constant dense<0.000000e+00> : vector<128x128xf32>
    %55 = tpu.matmul %52, %53, %cst_21 {dimension_numbers = #tpu.dot_dimension_numbers<[1], [0], [0], [1], [0, 0, 1, 1], [], []>} : vector<128x64xbf16>, vector<64x128xbf16>, vector<128x128xf32> -> vector<128x128xf32>
    %cst_22 = arith.constant dense<0xFF800000> : vector<128xf32>
    %56 = vector.multi_reduction <maximumf>, %55, %cst_22 [1] : vector<128x128xf32> to vector<128xf32>
    %57 = vector.shape_cast %56 : vector<128xf32> to vector<128x1xf32>
    %58 = vector.broadcast %57 : vector<128x1xf32> to vector<128x128xf32>
    %59 = arith.subf %55, %58 : vector<128x128xf32>
    %60 = math.exp %59 : vector<128x128xf32>
    %cst_23 = arith.constant dense<0.000000e+00> : vector<128xf32>
    %61 = vector.multi_reduction <add>, %60, %cst_23 [1] : vector<128x128xf32> to vector<128xf32>
    %62 = vector.shape_cast %61 : vector<128xf32> to vector<128x1xf32>
    %63 = arith.truncf %60 : vector<128x128xf32> to vector<128x128xbf16>
    %cst_24 = arith.constant dense<0.000000e+00> : vector<128x64xf32>
    %64 = tpu.matmul %63, %54, %cst_24 {dimension_numbers = #tpu.dot_dimension_numbers<[1], [0], [0], [1], [0, 0, 1, 1], [], []>} : vector<128x128xbf16>, vector<128x64xbf16>, vector<128x64xf32> -> vector<128x64xf32>
    %65 = tpu.reciprocal %62 {approx = true} : vector<128x1xf32> -> vector<128x1xf32>
    %66 = vector.broadcast %65 : vector<128x1xf32> to vector<128x64xf32>
    %67 = arith.mulf %64, %66 : vector<128x64xf32>
    %68 = arith.truncf %67 : vector<128x64xf32> to vector<128x64xbf16>
    %c0_25 = arith.constant 0 : index
    %c128 = arith.constant 128 : index
    %69 = vector.load %arg9[%c0_25, %c128] : memref<128x256xbf16, #tpu.memory_space<vmem>>, vector<128x64xbf16>
    tpu.vector_store %arg9[%c0_25, %c128], %68 {strides = array<i32>} : memref<128x256xbf16, #tpu.memory_space<vmem>>, vector<128x64xbf16>,
    %70 = vector.extract_strided_slice %8 {offsets = [0, 192], sizes = [128, 64], strides = [1, 1]} : vector<128x256xbf16> to vector<128x64xbf16>
    %71 = vector.extract_strided_slice %15 {offsets = [192, 0], sizes = [64, 128], strides = [1, 1]} : vector<256x128xbf16> to vector<64x128xbf16>
    %72 = vector.extract_strided_slice %14 {offsets = [0, 192], sizes = [128, 64], strides = [1, 1]} : vector<128x256xbf16> to vector<128x64xbf16>
    %cst_26 = arith.constant dense<0.000000e+00> : vector<128x128xf32>
    %73 = tpu.matmul %70, %71, %cst_26 {dimension_numbers = #tpu.dot_dimension_numbers<[1], [0], [0], [1], [0, 0, 1, 1], [], []>} : vector<128x64xbf16>, vector<64x128xbf16>, vector<128x128xf32> -> vector<128x128xf32>
    %cst_27 = arith.constant dense<0xFF800000> : vector<128xf32>
    %74 = vector.multi_reduction <maximumf>, %73, %cst_27 [1] : vector<128x128xf32> to vector<128xf32>
    %75 = vector.shape_cast %74 : vector<128xf32> to vector<128x1xf32>
    %76 = vector.broadcast %75 : vector<128x1xf32> to vector<128x128xf32>
    %77 = arith.subf %73, %76 : vector<128x128xf32>
    %78 = math.exp %77 : vector<128x128xf32>
    %cst_28 = arith.constant dense<0.000000e+00> : vector<128xf32>
    %79 = vector.multi_reduction <add>, %78, %cst_28 [1] : vector<128x128xf32> to vector<128xf32>
    %80 = vector.shape_cast %79 : vector<128xf32> to vector<128x1xf32>
    %81 = arith.truncf %78 : vector<128x128xf32> to vector<128x128xbf16>
    %cst_29 = arith.constant dense<0.000000e+00> : vector<128x64xf32>
    %82 = tpu.matmul %81, %72, %cst_29 {dimension_numbers = #tpu.dot_dimension_numbers<[1], [0], [0], [1], [0, 0, 1, 1], [], []>} : vector<128x128xbf16>, vector<128x64xbf16>, vector<128x64xf32> -> vector<128x64xf32>
    %83 = tpu.reciprocal %80 {approx = true} : vector<128x1xf32> -> vector<128x1xf32>
    %84 = vector.broadcast %83 : vector<128x1xf32> to vector<128x64xf32>
    %85 = arith.mulf %82, %84 : vector<128x64xf32>
    %86 = arith.truncf %85 : vector<128x64xf32> to vector<128x64xbf16>
    %c0_30 = arith.constant 0 : index
    %c192 = arith.constant 192 : index
    %87 = vector.load %arg9[%c0_30, %c192] : memref<128x256xbf16, #tpu.memory_space<vmem>>, vector<128x64xbf16>
    tpu.vector_store %arg9[%c0_30, %c192], %86 {strides = array<i32>} : memref<128x256xbf16, #tpu.memory_space<vmem>>, vector<128x64xbf16>,
    %c0_31 = arith.constant 0 : index
    %c0_32 = arith.constant 0 : index
    %88 = vector.load %arg9[%c0_31, %c0_32] : memref<128x256xbf16, #tpu.memory_space<vmem>>, vector<128x256xbf16>
    %c0_33 = arith.constant 0 : index
    %c0_34 = arith.constant 0 : index
    %89 = vector.load %arg6[%c0_33, %c0_34] : memref<256x256xbf16, #tpu.memory_space<vmem>>, vector<256x256xbf16>
    %cst_35 = arith.constant dense<0.000000e+00> : vector<128x256xf32>
    %90 = tpu.matmul %88, %89, %cst_35 {dimension_numbers = #tpu.dot_dimension_numbers<[1], [0], [0], [1], [0, 0, 1, 1], [], []>} : vector<128x256xbf16>, vector<256x256xbf16>, vector<128x256xf32> -> vector<128x256xf32>
    %c0_36 = arith.constant 0 : index
    %c0_37 = arith.constant 0 : index
    %91 = vector.load %arg7[%c0_36, %c0_37] : memref<1x256xf32, #tpu.memory_space<vmem>>, vector<1x256xf32>
    %92 = vector.broadcast %91 : vector<1x256xf32> to vector<128x256xf32>
    %93 = arith.addf %90, %92 : vector<128x256xf32>
    %c0_38 = arith.constant 0 : index
    %c0_39 = arith.constant 0 : index
    %c0_40 = arith.constant 0 : index
    %94 = vector.load %arg8[%c0_38, %c0_39, %c0_40] : memref<1x128x256xf32, #tpu.memory_space<vmem>>, vector<1x128x256xf32>
    %95 = vector.shape_cast %94 : vector<1x128x256xf32> to vector<128x256xf32>
    %96 = vector.shape_cast %93 : vector<128x256xf32> to vector<1x128x256xf32>
    tpu.vector_store %arg8[%c0_38, %c0_39, %c0_40], %96 {strides = array<i32>} : memref<1x128x256xf32, #tpu.memory_space<vmem>>, vector<1x128x256xf32>,
    return
  }
  func.func @transform_0(%arg0: i32, %arg1: i32) -> (i32, i32, i32) {
    %c0_i32 = arith.constant 0 : i32
    %c0_i32_0 = arith.constant 0 : i32
    return %arg0, %arg1, %c0_i32 : i32, i32, i32
  }
  func.func @transform_1(%arg0: i32, %arg1: i32) -> (i32, i32, i32) {
    %c0_i32 = arith.constant 0 : i32
    %c0_i32_0 = arith.constant 0 : i32
    %c0_i32_1 = arith.constant 0 : i32
    return %arg0, %c0_i32, %c0_i32_0 : i32, i32, i32
  }
  func.func @transform_2(%arg0: i32, %arg1: i32) -> (i32, i32) {
    %c0_i32 = arith.constant 0 : i32
    %c0_i32_0 = arith.constant 0 : i32
    %c0_i32_1 = arith.constant 0 : i32
    return %c0_i32, %c0_i32_0 : i32, i32
  }
  func.func @transform_3(%arg0: i32, %arg1: i32) -> (i32, i32) {
    %c0_i32 = arith.constant 0 : i32
    %c0_i32_0 = arith.constant 0 : i32
    %c0_i32_1 = arith.constant 0 : i32
    return %c0_i32, %c0_i32_0 : i32, i32
  }
  func.func @transform_4(%arg0: i32, %arg1: i32) -> (i32, i32) {
    %c0_i32 = arith.constant 0 : i32
    %c0_i32_0 = arith.constant 0 : i32
    %c0_i32_1 = arith.constant 0 : i32
    return %c0_i32, %c0_i32_0 : i32, i32
  }
  func.func @transform_5(%arg0: i32, %arg1: i32) -> (i32, i32) {
    %c0_i32 = arith.constant 0 : i32
    %c0_i32_0 = arith.constant 0 : i32
    %c0_i32_1 = arith.constant 0 : i32
    return %c0_i32, %c0_i32_0 : i32, i32
  }
  func.func @transform_6(%arg0: i32, %arg1: i32) -> (i32, i32, i32) {
    %c0_i32 = arith.constant 0 : i32
    %c0_i32_0 = arith.constant 0 : i32
    return %arg0, %arg1, %c0_i32 : i32, i32, i32
  }
}

</mosaic_0001>

<llo_original>
// kernel: cross_attention.1
$region0: #{cross_attention.1}
  #allocation0 [shape = 'u32[]', space=smem, size = 0x4, offset = 0x4, fixed_abs, tag = 'smem constant byte address 0x4 - core index']
  #allocation1 [shape = 'u32[144,128]{1,0:T(1,128)}', space=vmem, size = 0x12000, scoped, tag = 'internal scratch']
  #allocation2 [shape = 'bf16[128,256]{1,0:T(16,128)(2,1)}', space=vmem, size = 0x10000, scoped, tag = 'scratch operand']
  %s0 = inlined_call_operand.hbm [shape: f32[2,128,256], index: 0, kind: input, shape index: {}]
  %s1 = inlined_call_operand.hbm [shape: f32[2,128,256], index: 1, kind: input, shape index: {}]
  %s2 = inlined_call_operand.hbm [shape: bf16[256,256], index: 2, kind: input, shape index: {}]
  %s3 = inlined_call_operand.hbm [shape: bf16[256,512], index: 3, kind: input, shape index: {}]
  %s4 = inlined_call_operand.hbm [shape: bf16[256,256], index: 4, kind: input, shape index: {}]
  %s5 = inlined_call_operand.vmem [shape: f32[1,256], index: 5, kind: input, shape index: {}]
  %s6 = inlined_call_operand.hbm [shape: f32[2,128,256], index: 6, kind: output, shape index: {}]
  %s7 = sld [smem:[#allocation0]]
  $region77: #{cross_attention.1} parent=0
    _
  %s9 = ssub.s32 1, %s7
  %s10 = scalar_select 0, %s9, %s7
  $region1: #{cross_attention.1} parent=0
    #allocation3 [shape = 'u8[262144]{0}', space=vmem, size = 0x40000, scoped, tag = 'input window, operand 0']
    #allocation4 [shape = 's32[2]{0}', space=sflag, size = 0x8, scoped, tag = 'scoped memory for cross_attention.1']
    #allocation5 [shape = 's32[2]{0}', space=sflag, size = 0x8, scoped, tag = 'scoped memory for cross_attention.1']
    #allocation6 [shape = 'u8[262144]{0}', space=vmem, size = 0x40000, scoped, tag = 'input window, operand 1']
    #allocation7 [shape = 's32[2]{0}', space=sflag, size = 0x8, scoped, tag = 'scoped memory for cross_attention.1']
    #allocation8 [shape = 'u8[131072]{0}', space=vmem, size = 0x20000, scoped, tag = 'input window, operand 2, single buffered']
    #allocation9 [shape = 'u8[262144]{0}', space=vmem, size = 0x40000, scoped, tag = 'input window, operand 3, single buffered']
    #allocation10 [shape = 's32[1]{0}', space=sflag, size = 0x4, scoped, tag = 'scoped memory for cross_attention.1']
    #allocation11 [shape = 'u8[131072]{0}', space=vmem, size = 0x20000, scoped, tag = 'input window, operand 4, single buffered']
    #allocation12 [shape = 'u8[262144]{0}', space=vmem, size = 0x40000, scoped, tag = 'output window, operand 0']
    %11 = vsyncpa [#allocation4], 0
    %s12 = scalar_lea.sflag [#allocation4], 1
    %13 = vsyncpa %s12, 0
    %14 = vsyncpa [#allocation7], 0
    %s15 = scalar_lea.sflag [#allocation7], 1
    %16 = vsyncpa %s15, 0
    %17 = vsyncpa [#allocation10], 0
    %18 = vsyncpa [#allocation5], 0
    %s19 = scalar_lea.sflag [#allocation5], 1
    %20 = vsyncpa %s19, 0
    loop: start=0, step=1, limit=4
    $region2: #{cross_attention.1} parent=1 // loop_pre_header
      _
    $region3: #{cross_attention.1} parent=1 // loop_header
      %s22 = sphi 0, %s26
      %p23 = scmp.ge.s32.totalorder %s22, 4
      %s29 = sphi 0, %s41
      %s30 = sphi 0, %s37
      %s31 = sphi 0, %s29
      %s32 = sphi 0, %s30
      %s33 = sphi 0, %s31
      %s34 = sphi 0, %s32
      %s46 = sphi 0, %s48
      %s49 = sphi 0, %s46
      %s50 = sphi 0, %s49
      %s66 = sphi 0, %s50
      %s72 = sphi 0, %s74
      %s75 = sphi 0, %s72
      %s76 = sphi 0, %s75
      %s92 = sphi 0, %s76
      %s96 = sphi 0, %s96
      %s98 = sphi 0, %s96
      %s99 = sphi 0, %s98
      %s113 = sphi 0, %s99
      %s117 = sphi 0, %s117
      %s119 = sphi 0, %s117
      %s120 = sphi 0, %s119
      %s134 = sphi 0, %s120
      %s138 = sphi 0, %s138
      %s140 = sphi 0, %s138
      %s141 = sphi 0, %s140
      %s155 = sphi 0, %s141
      %s159 = sphi 0, %s159
      %s161 = sphi 0, %s159
      %s162 = sphi 0, %s161
      %s176 = sphi 0, %s162
      %s184 = sphi 0, %s186
      %s187 = sphi 0, %s184
      %s188 = sphi 0, %s187
      %s204 = sphi 0, %s188
    $region4: #{cross_attention.1} parent=1 // loop_header_branch
      %25 = sbr.rel (%p23) target = $region8
    $region5: #{cross_attention.1} parent=1 // loop_body
      %s27 = ssub.s32 %s22, 1
      %s28 = ssub.s32 %s22, 2
      %s35 = sadd.s32 1, %s30
      %p36 = scmp.ge.s32.totalorder %s35, 1
      %s37 = scalar_select %p36, 0, %s35
      %s38 = sadd.s32 1, %s29
      %s39 = scalar_select %p36, %s38, %s29
      %p40 = scmp.ge.s32.totalorder %s39, 2
      %s41 = scalar_select %p40, 0, %s39
      %s42 = ssub.s32 %s29, %s41
      %s43 = ssub.s32 %s30, %s37
      %s44 = sor.u32 %s42, %s43
      %p45 = scmp.eq.s32.totalorder %s44, 0
      %s47 = sadd.s32 %s46, 1
      %s48 = scalar_select %p45, %s46, %s47
      %p51 = pneg %p45
      %p52 = scmp.eq.s32.totalorder %s22, 1
      %p53 = por %p51, %p52
      %p54 = scmp.ne.s32.totalorder %s46, %s49
      %p55 = scmp.eq.s32.totalorder %s22, 0
      %p56 = por %p54, %p55
      %p57 = scmp.ne.s32.totalorder %s46, %s49
      %p58 = scmp.eq.s32.totalorder %s27, 1
      %p59 = por %p57, %p58
      %p60 = scmp.ne.s32.totalorder %s49, %s50
      %p61 = scmp.eq.s32.totalorder %s27, 0
      %p62 = por %p60, %p61
      %p63 = scmp.ne.s32.totalorder %s49, %s50
      %p64 = scmp.eq.s32.totalorder %s28, 1
      %p65 = por %p63, %p64
      %p67 = scmp.ne.s32.totalorder %s50, %s66
      %p68 = scmp.eq.s32.totalorder %s28, 0
      %p69 = por %p67, %p68
      %s70 = ssub.s32 %s29, %s41
      %p71 = scmp.eq.s32.totalorder %s70, 0
      %s73 = sadd.s32 %s72, 1
      %s74 = scalar_select %p71, %s72, %s73
      %p77 = pneg %p71
      %p78 = scmp.eq.s32.totalorder %s22, 1
      %p79 = por %p77, %p78
      %p80 = scmp.ne.s32.totalorder %s72, %s75
      %p81 = scmp.eq.s32.totalorder %s22, 0
      %p82 = por %p80, %p81
      %p83 = scmp.ne.s32.totalorder %s72, %s75
      %p84 = scmp.eq.s32.totalorder %s27, 1
      %p85 = por %p83, %p84
      %p86 = scmp.ne.s32.totalorder %s75, %s76
      %p87 = scmp.eq.s32.totalorder %s27, 0
      %p88 = por %p86, %p87
      %p89 = scmp.ne.s32.totalorder %s75, %s76
      %p90 = scmp.eq.s32.totalorder %s28, 1
      %p91 = por %p89, %p90
      %p93 = scmp.ne.s32.totalorder %s76, %s92
      %p94 = scmp.eq.s32.totalorder %s28, 0
      %p95 = por %p93, %p94
      %s97 = sadd.s32 %s96, 1
      %p100 = scmp.eq.s32.totalorder %s22, 1
      %p101 = scmp.ne.s32.totalorder %s96, %s98
      %p102 = scmp.eq.s32.totalorder %s22, 0
      %p103 = por %p101, %p102
      %p104 = scmp.ne.s32.totalorder %s96, %s98
      %p105 = scmp.eq.s32.totalorder %s27, 1
      %p106 = por %p104, %p105
      %p107 = scmp.ne.s32.totalorder %s98, %s99
      %p108 = scmp.eq.s32.totalorder %s27, 0
      %p109 = por %p107, %p108
      %p110 = scmp.ne.s32.totalorder %s98, %s99
      %p111 = scmp.eq.s32.totalorder %s28, 1
      %p112 = por %p110, %p111
      %p114 = scmp.ne.s32.totalorder %s99, %s113
      %p115 = scmp.eq.s32.totalorder %s28, 0
      %p116 = por %p114, %p115
      %s118 = sadd.s32 %s117, 1
      %p121 = scmp.eq.s32.totalorder %s22, 1
      %p122 = scmp.ne.s32.totalorder %s117, %s119
      %p123 = scmp.eq.s32.totalorder %s22, 0
      %p124 = por %p122, %p123
      %p125 = scmp.ne.s32.totalorder %s117, %s119
      %p126 = scmp.eq.s32.totalorder %s27, 1
      %p127 = por %p125, %p126
      %p128 = scmp.ne.s32.totalorder %s119, %s120
      %p129 = scmp.eq.s32.totalorder %s27, 0
      %p130 = por %p128, %p129
      %p131 = scmp.ne.s32.totalorder %s119, %s120
      %p132 = scmp.eq.s32.totalorder %s28, 1
      %p133 = por %p131, %p132
      %p135 = scmp.ne.s32.totalorder %s120, %s134
      %p136 = scmp.eq.s32.totalorder %s28, 0
      %p137 = por %p135, %p136
      %s139 = sadd.s32 %s138, 1
      %p142 = scmp.eq.s32.totalorder %s22, 1
      %p143 = scmp.ne.s32.totalorder %s138, %s140
      %p144 = scmp.eq.s32.totalorder %s22, 0
      %p145 = por %p143, %p144
      %p146 = scmp.ne.s32.totalorder %s138, %s140
      %p147 = scmp.eq.s32.totalorder %s27, 1
      %p148 = por %p146, %p147
      %p149 = scmp.ne.s32.totalorder %s140, %s141
      %p150 = scmp.eq.s32.totalorder %s27, 0
      %p151 = por %p149, %p150
      %p152 = scmp.ne.s32.totalorder %s140, %s141
      %p153 = scmp.eq.s32.totalorder %s28, 1
      %p154 = por %p152, %p153
      %p156 = scmp.ne.s32.totalorder %s141, %s155
      %p157 = scmp.eq.s32.totalorder %s28, 0
      %p158 = por %p156, %p157
      %s160 = sadd.s32 %s159, 1
      %p163 = scmp.eq.s32.totalorder %s22, 1
      %p164 = scmp.ne.s32.totalorder %s159, %s161
      %p165 = scmp.eq.s32.totalorder %s22, 0
      %p166 = por %p164, %p165
      %p167 = scmp.ne.s32.totalorder %s159, %s161
      %p168 = scmp.eq.s32.totalorder %s27, 1
      %p169 = por %p167, %p168
      %p170 = scmp.ne.s32.totalorder %s161, %s162
      %p171 = scmp.eq.s32.totalorder %s27, 0
      %p172 = por %p170, %p171
      %p173 = scmp.ne.s32.totalorder %s161, %s162
      %p174 = scmp.eq.s32.totalorder %s28, 1
      %p175 = por %p173, %p174
      %p177 = scmp.ne.s32.totalorder %s162, %s176
      %p178 = scmp.eq.s32.totalorder %s28, 0
      %p179 = por %p177, %p178
      %s180 = ssub.s32 %s29, %s41
      %s181 = ssub.s32 %s30, %s37
      %s182 = sor.u32 %s180, %s181
      %p183 = scmp.eq.s32.totalorder %s182, 0
      %s185 = sadd.s32 %s184, 1
      %s186 = scalar_select %p183, %s184, %s185
      %p189 = pneg %p183
      %p190 = scmp.eq.s32.totalorder %s22, 1
      %p191 = por %p189, %p190
      %p192 = scmp.ne.s32.totalorder %s184, %s187
      %p193 = scmp.eq.s32.totalorder %s22, 0
      %p194 = por %p192, %p193
      %p195 = scmp.ne.s32.totalorder %s184, %s187
      %p196 = scmp.eq.s32.totalorder %s27, 1
      %p197 = por %p195, %p196
      %p198 = scmp.ne.s32.totalorder %s187, %s188
      %p199 = scmp.eq.s32.totalorder %s27, 0
      %p200 = por %p198, %p199
      %p201 = scmp.ne.s32.totalorder %s187, %s188
      %p202 = scmp.eq.s32.totalorder %s28, 1
      %p203 = por %p201, %p202
      %p205 = scmp.ne.s32.totalorder %s188, %s204
      %p206 = scmp.eq.s32.totalorder %s28, 0
      %p207 = por %p205, %p206
      %p208 = scmp.le.s32.totalorder 1, %s22
      %p209 = scmp.lt.s32.totalorder %s22, 3
      %p210 = pnand %p208, %p209
      %p211 = pneg %p210
      // Predicated region
      $region9: #{cross_attention.1} parent=5 // pred_check
        _
      $region10: #{cross_attention.1} parent=5 // pred_check_branch
        %213 = sbr.rel (%p210) target = $region12
      $region11: #{cross_attention.1} parent=5 // pred_region
        %s214 = ssub.s32 %s22, 1
        // Predicated region
        $region13: #{cross_attention.1} parent=11 // pred_check
          %p215 = pneg %p109
        $region14: #{cross_attention.1} parent=11 // pred_check_branch
          %217 = sbr.rel (%p215) target = $region16
        $region15: #{cross_attention.1} parent=11 // pred_region
          %s219 = ssub.s32 4096, 4096
          %220 = vsyncadd [#allocation7], %s219
          %s221 = sshll.u32 [#allocation8], 4
          %s222 = int_to_ptr.vmem [resolvable:$true] %s221
          %227 = dma.hbm_to_vmem [thread:$0]  %s2, 4096, %s222, [#allocation7], 128, 128, 8
        $region16: #{cross_attention.1} parent=11 // pred_fallthru
          _
        // Predicated region
        $region17: #{cross_attention.1} parent=11 // pred_check
          %p228 = pneg %p130
        $region18: #{cross_attention.1} parent=11 // pred_check_branch
          %230 = sbr.rel (%p228) target = $region20
        $region19: #{cross_attention.1} parent=11 // pred_region
          %s232 = ssub.s32 8192, 8192
          %233 = vsyncadd [#allocation10], %s232
          %s234 = sshll.u32 [#allocation9], 4
          %s235 = int_to_ptr.vmem [resolvable:$true] %s234
          %240 = dma.hbm_to_vmem [thread:$0]  %s3, 8192, %s235, [#allocation10], 256, 256, 16
        $region20: #{cross_attention.1} parent=11 // pred_fallthru
          _
        // Predicated region
        $region21: #{cross_attention.1} parent=11 // pred_check
          %p241 = pneg %p151
        $region22: #{cross_attention.1} parent=11 // pred_check_branch
          %243 = sbr.rel (%p241) target = $region24
        $region23: #{cross_attention.1} parent=11 // pred_region
          %s245 = ssub.s32 4096, 4096
          %246 = vsyncadd [#allocation10], %s245
          %s247 = sshll.u32 [#allocation11], 4
          %s248 = int_to_ptr.vmem [resolvable:$true] %s247
          %253 = dma.hbm_to_vmem [thread:$0]  %s4, 4096, %s248, [#allocation10], 128, 128, 8
        $region24: #{cross_attention.1} parent=11 // pred_fallthru
          _
        // Predicated region
        $region25: #{cross_attention.1} parent=11 // pred_check
          %p254 = pneg %p172
        $region26: #{cross_attention.1} parent=11 // pred_check_branch
          %256 = sbr.rel (%p254) target = $region28
        $region27: #{cross_attention.1} parent=11 // pred_region
          _
        $region28: #{cross_attention.1} parent=11 // pred_fallthru
          _
      $region12: #{cross_attention.1} parent=5 // pred_fallthru
        _
      %p257 = scmp.lt.s32.totalorder %s22, 2
      // Predicated region
      $region29: #{cross_attention.1} parent=5 // pred_check
        %p258 = pneg %p257
      $region30: #{cross_attention.1} parent=5 // pred_check_branch
        %260 = sbr.rel (%p258) target = $region32
      $region31: #{cross_attention.1} parent=5 // pred_region
        // Predicated region
        $region33: #{cross_attention.1} parent=31 // pred_check
          %p261 = pneg %p56
        $region34: #{cross_attention.1} parent=31 // pred_check_branch
          %263 = sbr.rel (%p261) target = $region36
        $region35: #{cross_attention.1} parent=31 // pred_region
          %s264 = sand.u32 %s46, 1
          %s265 = scalar_lea.sflag [#allocation4], %s264
          %s266 = sand.u32 %s46, 1
          %s267 = smul.addr %s266, 256
          %s268 = scalar_lea.vmem [#allocation3], %s267
          %s269 = smul.u32 16, %s30
          %s271 = ssub.s32 4096, 4096
          %272 = vsyncadd %s265, %s271
          %s273 = smul.addr %s269, 2
          %s274 = smul.addr %s29, 32
          %s275 = sadd.s32 %s273, %s274
          %s276 = smul.addr %s275, 128
          %s277 = scalar_lea.hbm %s0, %s276
          %s278 = sshll.u32 %s268, 4
          %s279 = int_to_ptr.vmem [resolvable:$true] %s278
          %284 = dma.hbm_to_vmem [thread:$0]  %s277, 4096, %s279, %s265, 256, 256, 16
        $region36: #{cross_attention.1} parent=31 // pred_fallthru
          _
        // Predicated region
        $region37: #{cross_attention.1} parent=31 // pred_check
          %p285 = pneg %p82
        $region38: #{cross_attention.1} parent=31 // pred_check_branch
          %287 = sbr.rel (%p285) target = $region40
        $region39: #{cross_attention.1} parent=31 // pred_region
          %s288 = sand.u32 %s22, 1
          %s289 = scalar_lea.sflag [#allocation7], %s288
          %s290 = sand.u32 %s72, 1
          %s291 = smul.addr %s290, 256
          %s292 = scalar_lea.vmem [#allocation6], %s291
          %s294 = ssub.s32 4096, 4096
          %295 = vsyncadd %s289, %s294
          %s296 = smul.addr %s29, 32
          %s297 = smul.addr %s296, 128
          %s298 = scalar_lea.hbm %s1, %s297
          %s299 = sshll.u32 %s292, 4
          %s300 = int_to_ptr.vmem [resolvable:$true] %s299
          %305 = dma.hbm_to_vmem [thread:$0]  %s298, 4096, %s300, %s289, 256, 256, 16
        $region40: #{cross_attention.1} parent=31 // pred_fallthru
          _
      $region32: #{cross_attention.1} parent=5 // pred_fallthru
        _
      %p306 = scmp.le.s32.totalorder 1, %s22
      %p307 = scmp.lt.s32.totalorder %s22, 3
      %p308 = pnand %p306, %p307
      %p309 = pneg %p308
      // Predicated region
      $region41: #{cross_attention.1} parent=5 // pred_check
        _
      $region42: #{cross_attention.1} parent=5 // pred_check_branch
        %311 = sbr.rel (%p308) target = $region44
      $region43: #{cross_attention.1} parent=5 // pred_region
        %s312 = ssub.s32 %s22, 1
        %s313 = sand.u32 %s49, 1
        %s314 = scalar_lea.sflag [#allocation4], %s313
        %s315 = sand.u32 %s49, 1
        %s316 = smul.addr %s315, 256
        %s317 = scalar_lea.vmem [#allocation3], %s316
        // Predicated region
        $region45: #{cross_attention.1} parent=43 // pred_check
          %p318 = pneg %p62
        $region46: #{cross_attention.1} parent=43 // pred_check_branch
          %320 = sbr.rel (%p318) target = $region48
        $region47: #{cross_attention.1} parent=43 // pred_region
          %321 = dma.done %s314, 4096
        $region48: #{cross_attention.1} parent=43 // pred_fallthru
          _
        %s322 = sand.u32 %s27, 1
        %s323 = scalar_lea.sflag [#allocation7], %s322
        %s324 = sand.u32 %s75, 1
        %s325 = smul.addr %s324, 256
        %s326 = scalar_lea.vmem [#allocation6], %s325
        // Predicated region
        $region49: #{cross_attention.1} parent=43 // pred_check
          %p327 = pneg %p88
        $region50: #{cross_attention.1} parent=43 // pred_check_branch
          %329 = sbr.rel (%p327) target = $region52
        $region51: #{cross_attention.1} parent=43 // pred_region
          %330 = dma.done %s323, 4096
        $region52: #{cross_attention.1} parent=43 // pred_fallthru
          _
        // Predicated region
        $region53: #{cross_attention.1} parent=43 // pred_check
          %p331 = pneg %p109
        $region54: #{cross_attention.1} parent=43 // pred_check_branch
          %333 = sbr.rel (%p331) target = $region56
        $region55: #{cross_attention.1} parent=43 // pred_region
          %334 = dma.done [#allocation7], 4096
        $region56: #{cross_attention.1} parent=43 // pred_fallthru
          _
        // Predicated region
        $region57: #{cross_attention.1} parent=43 // pred_check
          %p335 = pneg %p130
        $region58: #{cross_attention.1} parent=43 // pred_check_branch
          %337 = sbr.rel (%p335) target = $region60
        $region59: #{cross_attention.1} parent=43 // pred_region
          %338 = dma.done [#allocation10], 8192
        $region60: #{cross_attention.1} parent=43 // pred_fallthru
          _
        // Predicated region
        $region61: #{cross_attention.1} parent=43 // pred_check
          %p339 = pneg %p151
        $region62: #{cross_attention.1} parent=43 // pred_check_branch
          %341 = sbr.rel (%p339) target = $region64
        $region63: #{cross_attention.1} parent=43 // pred_region
          %342 = dma.done [#allocation10], 4096
        $region64: #{cross_attention.1} parent=43 // pred_fallthru
          _
        %s343 = sand.u32 %s49, 1
        %s344 = scalar_lea.sflag [#allocation4], %s343
        %s345 = sand.u32 %s49, 1
        %s346 = smul.addr %s345, 256
        %s347 = scalar_lea.vmem [#allocation3], %s346
        %p348 = pneg %p62
        %p349 = pneg %p59
        %s350 = sand.u32 %s27, 1
        %s351 = scalar_lea.sflag [#allocation7], %s350
        %s352 = sand.u32 %s75, 1
        %s353 = smul.addr %s352, 256
        %s354 = scalar_lea.vmem [#allocation6], %s353
        %p355 = pneg %p88
        %p356 = pneg %p85
        %p357 = pneg %p109
        %p358 = pneg %p106
        %p359 = pneg %p130
        %p360 = pneg %p127
        %p361 = pneg %p151
        %p362 = pneg %p148
        %p363 = pneg %p172
        %p364 = pneg %p169
        %p365 = pneg %p200
        %p366 = pneg %p197
        %s367 = sand.u32 %s187, 1
        %s368 = scalar_lea.sflag [#allocation5], %s367
        %s369 = sand.u32 %s187, 1
        %s370 = smul.addr %s369, 256
        %s371 = scalar_lea.vmem [#allocation12], %s370
        %s372 = smul.u32 16, %s32
        %s373 = smul.u32 16, %s32
        %v375 = vld [vmem:[%s317] sm:$0xff]
        %v376 = vld [vmem:[%s317 + $0x8] sm:$0xff]
        %v377 = vld [vmem:[%s317 + $0x10] sm:$0xff]
        %v378 = vld [vmem:[%s317 + $0x18] sm:$0xff]
        %v379 = vld [vmem:[%s317 + $0x20] sm:$0xff]
        %v380 = vld [vmem:[%s317 + $0x28] sm:$0xff]
        %v381 = vld [vmem:[%s317 + $0x30] sm:$0xff]
        %v382 = vld [vmem:[%s317 + $0x38] sm:$0xff]
        %v383 = vld [vmem:[%s317 + $0x40] sm:$0xff]
        %v384 = vld [vmem:[%s317 + $0x48] sm:$0xff]
        %v385 = vld [vmem:[%s317 + $0x50] sm:$0xff]
        %v386 = vld [vmem:[%s317 + $0x58] sm:$0xff]
        %v387 = vld [vmem:[%s317 + $0x60] sm:$0xff]
        %v388 = vld [vmem:[%s317 + $0x68] sm:$0xff]
        %v389 = vld [vmem:[%s317 + $0x70] sm:$0xff]
        %v390 = vld [vmem:[%s317 + $0x78] sm:$0xff]
        %v391 = vld [vmem:[%s317 + $0x80] sm:$0xff]
        %v392 = vld [vmem:[%s317 + $0x88] sm:$0xff]
        %v393 = vld [vmem:[%s317 + $0x90] sm:$0xff]
        %v394 = vld [vmem:[%s317 + $0x98] sm:$0xff]
        %v395 = vld [vmem:[%s317 + $0xa0] sm:$0xff]
        %v396 = vld [vmem:[%s317 + $0xa8] sm:$0xff]
        %v397 = vld [vmem:[%s317 + $0xb0] sm:$0xff]
        %v398 = vld [vmem:[%s317 + $0xb8] sm:$0xff]
        %v399 = vld [vmem:[%s317 + $0xc0] sm:$0xff]
        %v400 = vld [vmem:[%s317 + $0xc8] sm:$0xff]
        %v401 = vld [vmem:[%s317 + $0xd0] sm:$0xff]
        %v402 = vld [vmem:[%s317 + $0xd8] sm:$0xff]
        %v403 = vld [vmem:[%s317 + $0xe0] sm:$0xff]
        %v404 = vld [vmem:[%s317 + $0xe8] sm:$0xff]
        %v405 = vld [vmem:[%s317 + $0xf0] sm:$0xff]
        %v406 = vld [vmem:[%s317 + $0xf8] sm:$0xff]
        %v407 = vpack.c.bf16 %v377, %v375
        %v408 = vpack.c.bf16 %v378, %v376
        %v409 = vpack.c.bf16 %v381, %v379
        %v410 = vpack.c.bf16 %v382, %v380
        %v411 = vpack.c.bf16 %v385, %v383
        %v412 = vpack.c.bf16 %v386, %v384
        %v413 = vpack.c.bf16 %v389, %v387
        %v414 = vpack.c.bf16 %v390, %v388
        %v415 = vpack.c.bf16 %v393, %v391
        %v416 = vpack.c.bf16 %v394, %v392
        %v417 = vpack.c.bf16 %v397, %v395
        %v418 = vpack.c.bf16 %v398, %v396
        %v419 = vpack.c.bf16 %v401, %v399
        %v420 = vpack.c.bf16 %v402, %v400
        %v421 = vpack.c.bf16 %v405, %v403
        %v422 = vpack.c.bf16 %v406, %v404
        %v423 = vld [vmem:[%s326] sm:$0xff]
        %v424 = vld [vmem:[%s326 + $0x8] sm:$0xff]
        %v425 = vld [vmem:[%s326 + $0x10] sm:$0xff]
        %v426 = vld [vmem:[%s326 + $0x18] sm:$0xff]
        %v427 = vld [vmem:[%s326 + $0x20] sm:$0xff]
        %v428 = vld [vmem:[%s326 + $0x28] sm:$0xff]
        %v429 = vld [vmem:[%s326 + $0x30] sm:$0xff]
        %v430 = vld [vmem:[%s326 + $0x38] sm:$0xff]
        %v431 = vld [vmem:[%s326 + $0x40] sm:$0xff]
        %v432 = vld [vmem:[%s326 + $0x48] sm:$0xff]
        %v433 = vld [vmem:[%s326 + $0x50] sm:$0xff]
        %v434 = vld [vmem:[%s326 + $0x58] sm:$0xff]
        %v435 = vld [vmem:[%s326 + $0x60] sm:$0xff]
        %v436 = vld [vmem:[%s326 + $0x68] sm:$0xff]
        %v437 = vld [vmem:[%s326 + $0x70] sm:$0xff]
        %v438 = vld [vmem:[%s326 + $0x78] sm:$0xff]
        %v439 = vld [vmem:[%s326 + $0x80] sm:$0xff]
        %v440 = vld [vmem:[%s326 + $0x88] sm:$0xff]
        %v441 = vld [vmem:[%s326 + $0x90] sm:$0xff]
        %v442 = vld [vmem:[%s326 + $0x98] sm:$0xff]
        %v443 = vld [vmem:[%s326 + $0xa0] sm:$0xff]
        %v444 = vld [vmem:[%s326 + $0xa8] sm:$0xff]
        %v445 = vld [vmem:[%s326 + $0xb0] sm:$0xff]
        %v446 = vld [vmem:[%s326 + $0xb8] sm:$0xff]
        %v447 = vld [vmem:[%s326 + $0xc0] sm:$0xff]
        %v448 = vld [vmem:[%s326 + $0xc8] sm:$0xff]
        %v449 = vld [vmem:[%s326 + $0xd0] sm:$0xff]
        %v450 = vld [vmem:[%s326 + $0xd8] sm:$0xff]
        %v451 = vld [vmem:[%s326 + $0xe0] sm:$0xff]
        %v452 = vld [vmem:[%s326 + $0xe8] sm:$0xff]
        %v453 = vld [vmem:[%s326 + $0xf0] sm:$0xff]
        %v454 = vld [vmem:[%s326 + $0xf8] sm:$0xff]
        %v455 = vpack.c.bf16 %v425, %v423
        %v456 = vpack.c.bf16 %v426, %v424
        %v457 = vpack.c.bf16 %v429, %v427
        %v458 = vpack.c.bf16 %v430, %v428
        %v459 = vpack.c.bf16 %v433, %v431
        %v460 = vpack.c.bf16 %v434, %v432
        %v461 = vpack.c.bf16 %v437, %v435
        %v462 = vpack.c.bf16 %v438, %v436
        %v463 = vpack.c.bf16 %v441, %v439
        %v464 = vpack.c.bf16 %v442, %v440
        %v465 = vpack.c.bf16 %v445, %v443
        %v466 = vpack.c.bf16 %v446, %v444
        %v467 = vpack.c.bf16 %v449, %v447
        %v468 = vpack.c.bf16 %v450, %v448
        %v469 = vpack.c.bf16 %v453, %v451
        %v470 = vpack.c.bf16 %v454, %v452
        %v471 = vld [vmem:[#allocation8] sm:$0xff]
        %v472 = vld [vmem:[#allocation8 + $0x8] sm:$0xff]
        %v473 = vld [vmem:[#allocation8 + $0x10] sm:$0xff]
        %v474 = vld [vmem:[#allocation8 + $0x18] sm:$0xff]
        %v475 = vld [vmem:[#allocation8 + $0x20] sm:$0xff]
        %v476 = vld [vmem:[#allocation8 + $0x28] sm:$0xff]
        %v477 = vld [vmem:[#allocation8 + $0x30] sm:$0xff]
        %v478 = vld [vmem:[#allocation8 + $0x38] sm:$0xff]
        %v479 = vld [vmem:[#allocation8 + $0x40] sm:$0xff]
        %v480 = vld [vmem:[#allocation8 + $0x48] sm:$0xff]
        %v481 = vld [vmem:[#allocation8 + $0x50] sm:$0xff]
        %v482 = vld [vmem:[#allocation8 + $0x58] sm:$0xff]
        %v483 = vld [vmem:[#allocation8 + $0x60] sm:$0xff]
        %v484 = vld [vmem:[#allocation8 + $0x68] sm:$0xff]
        %v485 = vld [vmem:[#allocation8 + $0x70] sm:$0xff]
        %v486 = vld [vmem:[#allocation8 + $0x78] sm:$0xff]
        %v487 = vld [vmem:[#allocation8 + $0x80] sm:$0xff]
        %v488 = vld [vmem:[#allocation8 + $0x88] sm:$0xff]
        %v489 = vld [vmem:[#allocation8 + $0x90] sm:$0xff]
        %v490 = vld [vmem:[#allocation8 + $0x98] sm:$0xff]
        %v491 = vld [vmem:[#allocation8 + $0xa0] sm:$0xff]
        %v492 = vld [vmem:[#allocation8 + $0xa8] sm:$0xff]
        %v493 = vld [vmem:[#allocation8 + $0xb0] sm:$0xff]
        %v494 = vld [vmem:[#allocation8 + $0xb8] sm:$0xff]
        %v495 = vld [vmem:[#allocation8 + $0xc0] sm:$0xff]
        %v496 = vld [vmem:[#allocation8 + $0xc8] sm:$0xff]
        %v497 = vld [vmem:[#allocation8 + $0xd0] sm:$0xff]
        %v498 = vld [vmem:[#allocation8 + $0xd8] sm:$0xff]
        %v499 = vld [vmem:[#allocation8 + $0xe0] sm:$0xff]
        %v500 = vld [vmem:[#allocation8 + $0xe8] sm:$0xff]
        %v501 = vld [vmem:[#allocation8 + $0xf0] sm:$0xff]
        %v502 = vld [vmem:[#allocation8 + $0xf8] sm:$0xff]
        %v535 = vunpack.c.l.b16 %v471
        %v536 = vunpack.c.h.b16 %v471
        %v537 = vunpack.c.l.b16 %v472
        %v538 = vunpack.c.h.b16 %v472
        %v539 = vunpack.c.l.b16 %v473
        %v540 = vunpack.c.h.b16 %v473
        %v541 = vunpack.c.l.b16 %v474
        %v542 = vunpack.c.h.b16 %v474
        %v543 = vunpack.c.l.b16 %v475
        %v544 = vunpack.c.h.b16 %v475
        %v545 = vunpack.c.l.b16 %v476
        %v546 = vunpack.c.h.b16 %v476
        %v547 = vunpack.c.l.b16 %v477
        %v548 = vunpack.c.h.b16 %v477
        %v549 = vunpack.c.l.b16 %v478
        %v550 = vunpack.c.h.b16 %v478
        %v551 = vunpack.c.l.b16 %v479
        %v552 = vunpack.c.h.b16 %v479
        %v553 = vunpack.c.l.b16 %v480
        %v554 = vunpack.c.h.b16 %v480
        %v555 = vunpack.c.l.b16 %v481
        %v556 = vunpack.c.h.b16 %v481
        %v557 = vunpack.c.l.b16 %v482
        %v558 = vunpack.c.h.b16 %v482
        %v559 = vunpack.c.l.b16 %v483
        %v560 = vunpack.c.h.b16 %v483
        %v561 = vunpack.c.l.b16 %v484
        %v562 = vunpack.c.h.b16 %v484
        %v563 = vunpack.c.l.b16 %v485
        %v564 = vunpack.c.h.b16 %v485
        %v565 = vunpack.c.l.b16 %v486
        %v566 = vunpack.c.h.b16 %v486
        %v567 = vunpack.c.l.b16 %v487
        %v568 = vunpack.c.h.b16 %v487
        %v569 = vunpack.c.l.b16 %v488
        %v570 = vunpack.c.h.b16 %v488
        %v571 = vunpack.c.l.b16 %v489
        %v572 = vunpack.c.h.b16 %v489
        %v573 = vunpack.c.l.b16 %v490
        %v574 = vunpack.c.h.b16 %v490
        %v575 = vunpack.c.l.b16 %v491
        %v576 = vunpack.c.h.b16 %v491
        %v577 = vunpack.c.l.b16 %v492
        %v578 = vunpack.c.h.b16 %v492
        %v579 = vunpack.c.l.b16 %v493
        %v580 = vunpack.c.h.b16 %v493
        %v581 = vunpack.c.l.b16 %v494
        %v582 = vunpack.c.h.b16 %v494
        %v583 = vunpack.c.l.b16 %v495
        %v584 = vunpack.c.h.b16 %v495
        %v585 = vunpack.c.l.b16 %v496
        %v586 = vunpack.c.h.b16 %v496
        %v587 = vunpack.c.l.b16 %v497
        %v588 = vunpack.c.h.b16 %v497
        %v589 = vunpack.c.l.b16 %v498
        %v590 = vunpack.c.h.b16 %v498
        %v591 = vunpack.c.l.b16 %v499
        %v592 = vunpack.c.h.b16 %v499
        %v593 = vunpack.c.l.b16 %v500
        %v594 = vunpack.c.h.b16 %v500
        %v595 = vunpack.c.l.b16 %v501
        %v596 = vunpack.c.h.b16 %v501
        %v597 = vunpack.c.l.b16 %v502
        %v598 = vunpack.c.h.b16 %v502
        %v599 = vpack.c.b16 %v537, %v535
        %v600 = vpack.c.b16 %v538, %v536
        %v601 = vpack.c.b16 %v541, %v539
        %v602 = vpack.c.b16 %v542, %v540
        %v603 = vpack.c.b16 %v545, %v543
        %v604 = vpack.c.b16 %v546, %v544
        %v605 = vpack.c.b16 %v549, %v547
        %v606 = vpack.c.b16 %v550, %v548
        %v607 = vpack.c.b16 %v553, %v551
        %v608 = vpack.c.b16 %v554, %v552
        %v609 = vpack.c.b16 %v557, %v555
        %v610 = vpack.c.b16 %v558, %v556
        %v611 = vpack.c.b16 %v561, %v559
        %v612 = vpack.c.b16 %v562, %v560
        %v613 = vpack.c.b16 %v565, %v563
        %v614 = vpack.c.b16 %v566, %v564
        %v615 = vpack.c.b16 %v569, %v567
        %v616 = vpack.c.b16 %v570, %v568
        %v617 = vpack.c.b16 %v573, %v571
        %v618 = vpack.c.b16 %v574, %v572
        %v619 = vpack.c.b16 %v577, %v575
        %v620 = vpack.c.b16 %v578, %v576
        %v621 = vpack.c.b16 %v581, %v579
        %v622 = vpack.c.b16 %v582, %v580
        %v623 = vpack.c.b16 %v585, %v583
        %v624 = vpack.c.b16 %v586, %v584
        %v625 = vpack.c.b16 %v589, %v587
        %v626 = vpack.c.b16 %v590, %v588
        %v627 = vpack.c.b16 %v593, %v591
        %v628 = vpack.c.b16 %v594, %v592
        %v629 = vpack.c.b16 %v597, %v595
        %v630 = vpack.c.b16 %v598, %v596
        %663 = vmatprep.subr.bf16.mxu0 %v600
        %664 = vmatpush1.bf16.msra.mxu0 %v599
        %665 = vmatprep.subr.bf16.mxu0 %v602
        %666 = vmatpush1.bf16.msra.mxu0 %v601
        %667 = vmatprep.subr.bf16.mxu0 %v604
        %668 = vmatpush1.bf16.msra.mxu0 %v603
        %669 = vmatprep.subr.bf16.mxu0 %v606
        %670 = vmatpush1.bf16.msra.mxu0 %v605
        %671 = vmatprep.subr.bf16.mxu0 %v608
        %672 = vmatpush1.bf16.msra.mxu0 %v607
        %673 = vmatprep.subr.bf16.mxu0 %v610
        %674 = vmatpush1.bf16.msra.mxu0 %v609
        %675 = vmatprep.subr.bf16.mxu0 %v612
        %676 = vmatpush1.bf16.msra.mxu0 %v611
        %677 = vmatprep.subr.bf16.mxu0 %v614
        %678 = vmatpush1.bf16.msra.mxu0 %v613
        %679 = vmatprep.subr.bf16.mxu0 %v616
        %680 = vmatpush1.bf16.msra.mxu0 %v615
        %681 = vmatprep.subr.bf16.mxu0 %v618
        %682 = vmatpush1.bf16.msra.mxu0 %v617
        %683 = vmatprep.subr.bf16.mxu0 %v620
        %684 = vmatpush1.bf16.msra.mxu0 %v619
        %685 = vmatprep.subr.bf16.mxu0 %v622
        %686 = vmatpush1.bf16.msra.mxu0 %v621
        %687 = vmatprep.subr.bf16.mxu0 %v624
        %688 = vmatpush1.bf16.msra.mxu0 %v623
        %689 = vmatprep.subr.bf16.mxu0 %v626
        %690 = vmatpush1.bf16.msra.mxu0 %v625
        %691 = vmatprep.subr.bf16.mxu0 %v628
        %692 = vmatpush1.bf16.msra.mxu0 %v627
        %693 = vmatprep.subr.bf16.mxu0 %v630
        %694 = vmatpush1.bf16.msra.mxu0 %v629
        %695 = vmatprep.mubr.bf16.mxu0 %v408
        %696 = vmatmul.mubr.bf16.gmra.mrb[0].mxu0 %v407
        %v697 = vpop.f32.mrb[0].mxu0
        %v698 = vadd.f32 0.0, %v697
        %v699 = vpop.f32.mrb[0].mxu0
        %v700 = vadd.f32 0.0, %v699
        %v701 = vpop.f32.mrb[0].mxu0
        %v702 = vadd.f32 0.0, %v701
        %v703 = vpop.f32.mrb[0].mxu0
        %v704 = vadd.f32 0.0, %v703
        %705 = vmatprep.mubr.bf16.mxu0 %v410
        %706 = vmatmul.mubr.bf16.gmra.mrb[0].mxu0 %v409
        %v707 = vpop.f32.mrb[0].mxu0
        %v708 = vadd.f32 0.0, %v707
        %v709 = vpop.f32.mrb[0].mxu0
        %v710 = vadd.f32 0.0, %v709
        %v711 = vpop.f32.mrb[0].mxu0
        %v712 = vadd.f32 0.0, %v711
        %v713 = vpop.f32.mrb[0].mxu0
        %v714 = vadd.f32 0.0, %v713
        %715 = vmatprep.mubr.bf16.mxu0 %v412
        %716 = vmatmul.mubr.bf16.gmra.mrb[0].mxu0 %v411
        %v717 = vpop.f32.mrb[0].mxu0
        %v718 = vadd.f32 0.0, %v717
        %v719 = vpop.f32.mrb[0].mxu0
        %v720 = vadd.f32 0.0, %v719
        %v721 = vpop.f32.mrb[0].mxu0
        %v722 = vadd.f32 0.0, %v721
        %v723 = vpop.f32.mrb[0].mxu0
        %v724 = vadd.f32 0.0, %v723
        %725 = vmatprep.mubr.bf16.mxu0 %v414
        %726 = vmatmul.mubr.bf16.gmra.mrb[0].mxu0 %v413
        %v727 = vpop.f32.mrb[0].mxu0
        %v728 = vadd.f32 0.0, %v727
        %v729 = vpop.f32.mrb[0].mxu0
        %v730 = vadd.f32 0.0, %v729
        %v731 = vpop.f32.mrb[0].mxu0
        %v732 = vadd.f32 0.0, %v731
        %v733 = vpop.f32.mrb[0].mxu0
        %v734 = vadd.f32 0.0, %v733
        %735 = vmatprep.mubr.bf16.mxu0 %v416
        %736 = vmatmul.mubr.bf16.gmra.mrb[0].mxu0 %v415
        %v737 = vpop.f32.mrb[0].mxu0
        %v738 = vadd.f32 0.0, %v737
        %v739 = vpop.f32.mrb[0].mxu0
        %v740 = vadd.f32 0.0, %v739
        %v741 = vpop.f32.mrb[0].mxu0
        %v742 = vadd.f32 0.0, %v741
        %v743 = vpop.f32.mrb[0].mxu0
        %v744 = vadd.f32 0.0, %v743
        %745 = vmatprep.mubr.bf16.mxu0 %v418
        %746 = vmatmul.mubr.bf16.gmra.mrb[0].mxu0 %v417
        %v747 = vpop.f32.mrb[0].mxu0
        %v748 = vadd.f32 0.0, %v747
        %v749 = vpop.f32.mrb[0].mxu0
        %v750 = vadd.f32 0.0, %v749
        %v751 = vpop.f32.mrb[0].mxu0
        %v752 = vadd.f32 0.0, %v751
        %v753 = vpop.f32.mrb[0].mxu0
        %v754 = vadd.f32 0.0, %v753
        %755 = vmatprep.mubr.bf16.mxu0 %v420
        %756 = vmatmul.mubr.bf16.gmra.mrb[0].mxu0 %v419
        %v757 = vpop.f32.mrb[0].mxu0
        %v758 = vadd.f32 0.0, %v757
        %v759 = vpop.f32.mrb[0].mxu0
        %v760 = vadd.f32 0.0, %v759
        %v761 = vpop.f32.mrb[0].mxu0
        %v762 = vadd.f32 0.0, %v761
        %v763 = vpop.f32.mrb[0].mxu0
        %v764 = vadd.f32 0.0, %v763
        %765 = vmatprep.mubr.bf16.mxu0 %v422
        %766 = vmatmul.mubr.bf16.gmra.mrb[0].mxu0 %v421
        %v767 = vpop.f32.mrb[0].mxu0
        %v768 = vadd.f32 0.0, %v767
        %v769 = vpop.f32.mrb[0].mxu0
        %v770 = vadd.f32 0.0, %v769
        %v771 = vpop.f32.mrb[0].mxu0
        %v772 = vadd.f32 0.0, %v771
        %v773 = vpop.f32.mrb[0].mxu0
        %v774 = vadd.f32 0.0, %v773
        %775 = vdwg.mxu0
        %v776 = vpack.c.bf16 %v702, %v698
        %v777 = vpack.c.bf16 %v704, %v700
        %v778 = vpack.c.bf16 %v712, %v708
        %v779 = vpack.c.bf16 %v714, %v710
        %v780 = vpack.c.bf16 %v722, %v718
        %v781 = vpack.c.bf16 %v724, %v720
        %v782 = vpack.c.bf16 %v732, %v728
        %v783 = vpack.c.bf16 %v734, %v730
        %v784 = vpack.c.bf16 %v742, %v738
        %v785 = vpack.c.bf16 %v744, %v740
        %v786 = vpack.c.bf16 %v752, %v748
        %v787 = vpack.c.bf16 %v754, %v750
        %v788 = vpack.c.bf16 %v762, %v758
        %v789 = vpack.c.bf16 %v764, %v760
        %v790 = vpack.c.bf16 %v772, %v768
        %v791 = vpack.c.bf16 %v774, %v770
        %v792 = vld [vmem:[#allocation9] sm:$0xff]
        %v793 = vld [vmem:[#allocation9 + $0x8] sm:$0xff]
        %v794 = vld [vmem:[#allocation9 + $0x10] sm:$0xff]
        %v795 = vld [vmem:[#allocation9 + $0x18] sm:$0xff]
        %v796 = vld [vmem:[#allocation9 + $0x20] sm:$0xff]
        %v797 = vld [vmem:[#allocation9 + $0x28] sm:$0xff]
        %v798 = vld [vmem:[#allocation9 + $0x30] sm:$0xff]
        %v799 = vld [vmem:[#allocation9 + $0x38] sm:$0xff]
        %v800 = vld [vmem:[#allocation9 + $0x40] sm:$0xff]
        %v801 = vld [vmem:[#allocation9 + $0x48] sm:$0xff]
        %v802 = vld [vmem:[#allocation9 + $0x50] sm:$0xff]
        %v803 = vld [vmem:[#allocation9 + $0x58] sm:$0xff]
        %v804 = vld [vmem:[#allocation9 + $0x60] sm:$0xff]
        %v805 = vld [vmem:[#allocation9 + $0x68] sm:$0xff]
        %v806 = vld [vmem:[#allocation9 + $0x70] sm:$0xff]
        %v807 = vld [vmem:[#allocation9 + $0x78] sm:$0xff]
        %v808 = vld [vmem:[#allocation9 + $0x80] sm:$0xff]
        %v809 = vld [vmem:[#allocation9 + $0x88] sm:$0xff]
        %v810 = vld [vmem:[#allocation9 + $0x90] sm:$0xff]
        %v811 = vld [vmem:[#allocation9 + $0x98] sm:$0xff]
        %v812 = vld [vmem:[#allocation9 + $0xa0] sm:$0xff]
        %v813 = vld [vmem:[#allocation9 + $0xa8] sm:$0xff]
        %v814 = vld [vmem:[#allocation9 + $0xb0] sm:$0xff]
        %v815 = vld [vmem:[#allocation9 + $0xb8] sm:$0xff]
        %v816 = vld [vmem:[#allocation9 + $0xc0] sm:$0xff]
        %v817 = vld [vmem:[#allocation9 + $0xc8] sm:$0xff]
        %v818 = vld [vmem:[#allocation9 + $0xd0] sm:$0xff]
        %v819 = vld [vmem:[#allocation9 + $0xd8] sm:$0xff]
        %v820 = vld [vmem:[#allocation9 + $0xe0] sm:$0xff]
        %v821 = vld [vmem:[#allocation9 + $0xe8] sm:$0xff]
        %v822 = vld [vmem:[#allocation9 + $0xf0] sm:$0xff]
        %v823 = vld [vmem:[#allocation9 + $0xf8] sm:$0xff]
        %v824 = vld [vmem:[#allocation9 + $0x100] sm:$0xff]
        %v825 = vld [vmem:[#allocation9 + $0x108] sm:$0xff]
        %v826 = vld [vmem:[#allocation9 + $0x110] sm:$0xff]
        %v827 = vld [vmem:[#allocation9 + $0x118] sm:$0xff]
        %v828 = vld [vmem:[#allocation9 + $0x120] sm:$0xff]
        %v829 = vld [vmem:[#allocation9 + $0x128] sm:$0xff]
        %v830 = vld [vmem:[#allocation9 + $0x130] sm:$0xff]
        %v831 = vld [vmem:[#allocation9 + $0x138] sm:$0xff]
        %v832 = vld [vmem:[#allocation9 + $0x140] sm:$0xff]
        %v833 = vld [vmem:[#allocation9 + $0x148] sm:$0xff]
        %v834 = vld [vmem:[#allocation9 + $0x150] sm:$0xff]
        %v835 = vld [vmem:[#allocation9 + $0x158] sm:$0xff]
        %v836 = vld [vmem:[#allocation9 + $0x160] sm:$0xff]
        %v837 = vld [vmem:[#allocation9 + $0x168] sm:$0xff]
        %v838 = vld [vmem:[#allocation9 + $0x170] sm:$0xff]
        %v839 = vld [vmem:[#allocation9 + $0x178] sm:$0xff]
        %v840 = vld [vmem:[#allocation9 + $0x180] sm:$0xff]
        %v841 = vld [vmem:[#allocation9 + $0x188] sm:$0xff]
        %v842 = vld [vmem:[#allocation9 + $0x190] sm:$0xff]
        %v843 = vld [vmem:[#allocation9 + $0x198] sm:$0xff]
        %v844 = vld [vmem:[#allocation9 + $0x1a0] sm:$0xff]
        %v845 = vld [vmem:[#allocation9 + $0x1a8] sm:$0xff]
        %v846 = vld [vmem:[#allocation9 + $0x1b0] sm:$0xff]
        %v847 = vld [vmem:[#allocation9 + $0x1b8] sm:$0xff]
        %v848 = vld [vmem:[#allocation9 + $0x1c0] sm:$0xff]
        %v849 = vld [vmem:[#allocation9 + $0x1c8] sm:$0xff]
        %v850 = vld [vmem:[#allocation9 + $0x1d0] sm:$0xff]
        %v851 = vld [vmem:[#allocation9 + $0x1d8] sm:$0xff]
        %v852 = vld [vmem:[#allocation9 + $0x1e0] sm:$0xff]
        %v853 = vld [vmem:[#allocation9 + $0x1e8] sm:$0xff]
        %v854 = vld [vmem:[#allocation9 + $0x1f0] sm:$0xff]
        %v855 = vld [vmem:[#allocation9 + $0x1f8] sm:$0xff]
        %v920 = vunpack.c.l.b16 %v792
        %v921 = vunpack.c.h.b16 %v792
        %v922 = vunpack.c.l.b16 %v793
        %v923 = vunpack.c.h.b16 %v793
        %v924 = vunpack.c.l.b16 %v794
        %v925 = vunpack.c.h.b16 %v794
        %v926 = vunpack.c.l.b16 %v795
        %v927 = vunpack.c.h.b16 %v795
        %v928 = vunpack.c.l.b16 %v796
        %v929 = vunpack.c.h.b16 %v796
        %v930 = vunpack.c.l.b16 %v797
        %v931 = vunpack.c.h.b16 %v797
        %v932 = vunpack.c.l.b16 %v798
        %v933 = vunpack.c.h.b16 %v798
        %v934 = vunpack.c.l.b16 %v799
        %v935 = vunpack.c.h.b16 %v799
        %v936 = vunpack.c.l.b16 %v800
        %v937 = vunpack.c.h.b16 %v800
        %v938 = vunpack.c.l.b16 %v801
        %v939 = vunpack.c.h.b16 %v801
        %v940 = vunpack.c.l.b16 %v802
        %v941 = vunpack.c.h.b16 %v802
        %v942 = vunpack.c.l.b16 %v803
        %v943 = vunpack.c.h.b16 %v803
        %v944 = vunpack.c.l.b16 %v804
        %v945 = vunpack.c.h.b16 %v804
        %v946 = vunpack.c.l.b16 %v805
        %v947 = vunpack.c.h.b16 %v805
        %v948 = vunpack.c.l.b16 %v806
        %v949 = vunpack.c.h.b16 %v806
        %v950 = vunpack.c.l.b16 %v807
        %v951 = vunpack.c.h.b16 %v807
        %v952 = vunpack.c.l.b16 %v808
        %v953 = vunpack.c.h.b16 %v808
        %v954 = vunpack.c.l.b16 %v809
        %v955 = vunpack.c.h.b16 %v809
        %v956 = vunpack.c.l.b16 %v810
        %v957 = vunpack.c.h.b16 %v810
        %v958 = vunpack.c.l.b16 %v811
        %v959 = vunpack.c.h.b16 %v811
        %v960 = vunpack.c.l.b16 %v812
        %v961 = vunpack.c.h.b16 %v812
        %v962 = vunpack.c.l.b16 %v813
        %v963 = vunpack.c.h.b16 %v813
        %v964 = vunpack.c.l.b16 %v814
        %v965 = vunpack.c.h.b16 %v814
        %v966 = vunpack.c.l.b16 %v815
        %v967 = vunpack.c.h.b16 %v815
        %v968 = vunpack.c.l.b16 %v816
        %v969 = vunpack.c.h.b16 %v816
        %v970 = vunpack.c.l.b16 %v817
        %v971 = vunpack.c.h.b16 %v817
        %v972 = vunpack.c.l.b16 %v818
        %v973 = vunpack.c.h.b16 %v818
        %v974 = vunpack.c.l.b16 %v819
        %v975 = vunpack.c.h.b16 %v819
        %v976 = vunpack.c.l.b16 %v820
        %v977 = vunpack.c.h.b16 %v820
        %v978 = vunpack.c.l.b16 %v821
        %v979 = vunpack.c.h.b16 %v821
        %v980 = vunpack.c.l.b16 %v822
        %v981 = vunpack.c.h.b16 %v822
        %v982 = vunpack.c.l.b16 %v823
        %v983 = vunpack.c.h.b16 %v823
        %v984 = vunpack.c.l.b16 %v824
        %v985 = vunpack.c.h.b16 %v824
        %v986 = vunpack.c.l.b16 %v825
        %v987 = vunpack.c.h.b16 %v825
        %v988 = vunpack.c.l.b16 %v826
        %v989 = vunpack.c.h.b16 %v826
        %v990 = vunpack.c.l.b16 %v827
        %v991 = vunpack.c.h.b16 %v827
        %v992 = vunpack.c.l.b16 %v828
        %v993 = vunpack.c.h.b16 %v828
        %v994 = vunpack.c.l.b16 %v829
        %v995 = vunpack.c.h.b16 %v829
        %v996 = vunpack.c.l.b16 %v830
        %v997 = vunpack.c.h.b16 %v830
        %v998 = vunpack.c.l.b16 %v831
        %v999 = vunpack.c.h.b16 %v831
        %v1000 = vunpack.c.l.b16 %v832
        %v1001 = vunpack.c.h.b16 %v832
        %v1002 = vunpack.c.l.b16 %v833
        %v1003 = vunpack.c.h.b16 %v833
        %v1004 = vunpack.c.l.b16 %v834
        %v1005 = vunpack.c.h.b16 %v834
        %v1006 = vunpack.c.l.b16 %v835
        %v1007 = vunpack.c.h.b16 %v835
        %v1008 = vunpack.c.l.b16 %v836
        %v1009 = vunpack.c.h.b16 %v836
        %v1010 = vunpack.c.l.b16 %v837
        %v1011 = vunpack.c.h.b16 %v837
        %v1012 = vunpack.c.l.b16 %v838
        %v1013 = vunpack.c.h.b16 %v838
        %v1014 = vunpack.c.l.b16 %v839
        %v1015 = vunpack.c.h.b16 %v839
        %v1016 = vunpack.c.l.b16 %v840
        %v1017 = vunpack.c.h.b16 %v840
        %v1018 = vunpack.c.l.b16 %v841
        %v1019 = vunpack.c.h.b16 %v841
        %v1020 = vunpack.c.l.b16 %v842
        %v1021 = vunpack.c.h.b16 %v842
        %v1022 = vunpack.c.l.b16 %v843
        %v1023 = vunpack.c.h.b16 %v843
        %v1024 = vunpack.c.l.b16 %v844
        %v1025 = vunpack.c.h.b16 %v844
        %v1026 = vunpack.c.l.b16 %v845
        %v1027 = vunpack.c.h.b16 %v845
        %v1028 = vunpack.c.l.b16 %v846
        %v1029 = vunpack.c.h.b16 %v846
        %v1030 = vunpack.c.l.b16 %v847
        %v1031 = vunpack.c.h.b16 %v847
        %v1032 = vunpack.c.l.b16 %v848
        %v1033 = vunpack.c.h.b16 %v848
        %v1034 = vunpack.c.l.b16 %v849
        %v1035 = vunpack.c.h.b16 %v849
        %v1036 = vunpack.c.l.b16 %v850
        %v1037 = vunpack.c.h.b16 %v850
        %v1038 = vunpack.c.l.b16 %v851
        %v1039 = vunpack.c.h.b16 %v851
        %v1040 = vunpack.c.l.b16 %v852
        %v1041 = vunpack.c.h.b16 %v852
        %v1042 = vunpack.c.l.b16 %v853
        %v1043 = vunpack.c.h.b16 %v853
        %v1044 = vunpack.c.l.b16 %v854
        %v1045 = vunpack.c.h.b16 %v854
        %v1046 = vunpack.c.l.b16 %v855
        %v1047 = vunpack.c.h.b16 %v855
        %v1048 = vpack.c.b16 %v924, %v920
        %v1049 = vpack.c.b16 %v925, %v921
        %v1050 = vpack.c.b16 %v926, %v922
        %v1051 = vpack.c.b16 %v927, %v923
        %v1052 = vpack.c.b16 %v932, %v928
        %v1053 = vpack.c.b16 %v933, %v929
        %v1054 = vpack.c.b16 %v934, %v930
        %v1055 = vpack.c.b16 %v935, %v931
        %v1056 = vpack.c.b16 %v940, %v936
        %v1057 = vpack.c.b16 %v941, %v937
        %v1058 = vpack.c.b16 %v942, %v938
        %v1059 = vpack.c.b16 %v943, %v939
        %v1060 = vpack.c.b16 %v948, %v944
        %v1061 = vpack.c.b16 %v949, %v945
        %v1062 = vpack.c.b16 %v950, %v946
        %v1063 = vpack.c.b16 %v951, %v947
        %v1064 = vpack.c.b16 %v956, %v952
        %v1065 = vpack.c.b16 %v957, %v953
        %v1066 = vpack.c.b16 %v958, %v954
        %v1067 = vpack.c.b16 %v959, %v955
        %v1068 = vpack.c.b16 %v964, %v960
        %v1069 = vpack.c.b16 %v965, %v961
        %v1070 = vpack.c.b16 %v966, %v962
        %v1071 = vpack.c.b16 %v967, %v963
        %v1072 = vpack.c.b16 %v972, %v968
        %v1073 = vpack.c.b16 %v973, %v969
        %v1074 = vpack.c.b16 %v974, %v970
        %v1075 = vpack.c.b16 %v975, %v971
        %v1076 = vpack.c.b16 %v980, %v976
        %v1077 = vpack.c.b16 %v981, %v977
        %v1078 = vpack.c.b16 %v982, %v978
        %v1079 = vpack.c.b16 %v983, %v979
        %v1080 = vpack.c.b16 %v988, %v984
        %v1081 = vpack.c.b16 %v989, %v985
        %v1082 = vpack.c.b16 %v990, %v986
        %v1083 = vpack.c.b16 %v991, %v987
        %v1084 = vpack.c.b16 %v996, %v992
        %v1085 = vpack.c.b16 %v997, %v993
        %v1086 = vpack.c.b16 %v998, %v994
        %v1087 = vpack.c.b16 %v999, %v995
        %v1088 = vpack.c.b16 %v1004, %v1000
        %v1089 = vpack.c.b16 %v1005, %v1001
        %v1090 = vpack.c.b16 %v1006, %v1002
        %v1091 = vpack.c.b16 %v1007, %v1003
        %v1092 = vpack.c.b16 %v1012, %v1008
        %v1093 = vpack.c.b16 %v1013, %v1009
        %v1094 = vpack.c.b16 %v1014, %v1010
        %v1095 = vpack.c.b16 %v1015, %v1011
        %v1096 = vpack.c.b16 %v1020, %v1016
        %v1097 = vpack.c.b16 %v1021, %v1017
        %v1098 = vpack.c.b16 %v1022, %v1018
        %v1099 = vpack.c.b16 %v1023, %v1019
        %v1100 = vpack.c.b16 %v1028, %v1024
        %v1101 = vpack.c.b16 %v1029, %v1025
        %v1102 = vpack.c.b16 %v1030, %v1026
        %v1103 = vpack.c.b16 %v1031, %v1027
        %v1104 = vpack.c.b16 %v1036, %v1032
        %v1105 = vpack.c.b16 %v1037, %v1033
        %v1106 = vpack.c.b16 %v1038, %v1034
        %v1107 = vpack.c.b16 %v1039, %v1035
        %v1108 = vpack.c.b16 %v1044, %v1040
        %v1109 = vpack.c.b16 %v1045, %v1041
        %v1110 = vpack.c.b16 %v1046, %v1042
        %v1111 = vpack.c.b16 %v1047, %v1043
        %1176 = vmatprep.subr.bf16.mxu0 %v1049
        %1177 = vmatpush1.bf16.msra.mxu0 %v1048
        %1178 = vmatprep.subr.bf16.mxu0 %v1053
        %1179 = vmatpush1.bf16.msra.mxu0 %v1052
        %1180 = vmatprep.subr.bf16.mxu0 %v1057
        %1181 = vmatpush1.bf16.msra.mxu0 %v1056
        %1182 = vmatprep.subr.bf16.mxu0 %v1061
        %1183 = vmatpush1.bf16.msra.mxu0 %v1060
        %1184 = vmatprep.subr.bf16.mxu0 %v1065
        %1185 = vmatpush1.bf16.msra.mxu0 %v1064
        %1186 = vmatprep.subr.bf16.mxu0 %v1069
        %1187 = vmatpush1.bf16.msra.mxu0 %v1068
        %1188 = vmatprep.subr.bf16.mxu0 %v1073
        %1189 = vmatpush1.bf16.msra.mxu0 %v1072
        %1190 = vmatprep.subr.bf16.mxu0 %v1077
        %1191 = vmatpush1.bf16.msra.mxu0 %v1076
        %1192 = vmatprep.subr.bf16.mxu0 %v1081
        %1193 = vmatpush1.bf16.msra.mxu0 %v1080
        %1194 = vmatprep.subr.bf16.mxu0 %v1085
        %1195 = vmatpush1.bf16.msra.mxu0 %v1084
        %1196 = vmatprep.subr.bf16.mxu0 %v1089
        %1197 = vmatpush1.bf16.msra.mxu0 %v1088
        %1198 = vmatprep.subr.bf16.mxu0 %v1093
        %1199 = vmatpush1.bf16.msra.mxu0 %v1092
        %1200 = vmatprep.subr.bf16.mxu0 %v1097
        %1201 = vmatpush1.bf16.msra.mxu0 %v1096
        %1202 = vmatprep.subr.bf16.mxu0 %v1101
        %1203 = vmatpush1.bf16.msra.mxu0 %v1100
        %1204 = vmatprep.subr.bf16.mxu0 %v1105
        %1205 = vmatpush1.bf16.msra.mxu0 %v1104
        %1206 = vmatprep.subr.bf16.mxu0 %v1109
        %1207 = vmatpush1.bf16.msra.mxu0 %v1108
        %1208 = vmatprep.mubr.bf16.mxu0 %v456
        %1209 = vmatmul.mubr.bf16.gmra.mrb[0].mxu0 %v455
        %v1210 = vpop.f32.mrb[0].mxu0
        %v1211 = vadd.f32 0.0, %v1210
        %v1212 = vpop.f32.mrb[0].mxu0
        %v1213 = vadd.f32 0.0, %v1212
        %v1214 = vpop.f32.mrb[0].mxu0
        %v1215 = vadd.f32 0.0, %v1214
        %v1216 = vpop.f32.mrb[0].mxu0
        %v1217 = vadd.f32 0.0, %v1216
        %1218 = vmatprep.mubr.bf16.mxu0 %v458
        %1219 = vmatmul.mubr.bf16.gmra.mrb[0].mxu0 %v457
        %v1220 = vpop.f32.mrb[0].mxu0
        %v1221 = vadd.f32 0.0, %v1220
        %v1222 = vpop.f32.mrb[0].mxu0
        %v1223 = vadd.f32 0.0, %v1222
        %v1224 = vpop.f32.mrb[0].mxu0
        %v1225 = vadd.f32 0.0, %v1224
        %v1226 = vpop.f32.mrb[0].mxu0
        %v1227 = vadd.f32 0.0, %v1226
        %1228 = vmatprep.mubr.bf16.mxu0 %v460
        %1229 = vmatmul.mubr.bf16.gmra.mrb[0].mxu0 %v459
        %v1230 = vpop.f32.mrb[0].mxu0
        %v1231 = vadd.f32 0.0, %v1230
        %v1232 = vpop.f32.mrb[0].mxu0
        %v1233 = vadd.f32 0.0, %v1232
        %v1234 = vpop.f32.mrb[0].mxu0
        %v1235 = vadd.f32 0.0, %v1234
        %v1236 = vpop.f32.mrb[0].mxu0
        %v1237 = vadd.f32 0.0, %v1236
        %1238 = vmatprep.mubr.bf16.mxu0 %v462
        %1239 = vmatmul.mubr.bf16.gmra.mrb[0].mxu0 %v461
        %v1240 = vpop.f32.mrb[0].mxu0
        %v1241 = vadd.f32 0.0, %v1240
        %v1242 = vpop.f32.mrb[0].mxu0
        %v1243 = vadd.f32 0.0, %v1242
        %v1244 = vpop.f32.mrb[0].mxu0
        %v1245 = vadd.f32 0.0, %v1244
        %v1246 = vpop.f32.mrb[0].mxu0
        %v1247 = vadd.f32 0.0, %v1246
        %1248 = vmatprep.mubr.bf16.mxu0 %v464
        %1249 = vmatmul.mubr.bf16.gmra.mrb[0].mxu0 %v463
        %v1250 = vpop.f32.mrb[0].mxu0
        %v1251 = vadd.f32 0.0, %v1250
        %v1252 = vpop.f32.mrb[0].mxu0
        %v1253 = vadd.f32 0.0, %v1252
        %v1254 = vpop.f32.mrb[0].mxu0
        %v1255 = vadd.f32 0.0, %v1254
        %v1256 = vpop.f32.mrb[0].mxu0
        %v1257 = vadd.f32 0.0, %v1256
        %1258 = vmatprep.mubr.bf16.mxu0 %v466
        %1259 = vmatmul.mubr.bf16.gmra.mrb[0].mxu0 %v465
        %v1260 = vpop.f32.mrb[0].mxu0
        %v1261 = vadd.f32 0.0, %v1260
        %v1262 = vpop.f32.mrb[0].mxu0
        %v1263 = vadd.f32 0.0, %v1262
        %v1264 = vpop.f32.mrb[0].mxu0
        %v1265 = vadd.f32 0.0, %v1264
        %v1266 = vpop.f32.mrb[0].mxu0
        %v1267 = vadd.f32 0.0, %v1266
        %1268 = vmatprep.mubr.bf16.mxu0 %v468
        %1269 = vmatmul.mubr.bf16.gmra.mrb[0].mxu0 %v467
        %v1270 = vpop.f32.mrb[0].mxu0
        %v1271 = vadd.f32 0.0, %v1270
        %v1272 = vpop.f32.mrb[0].mxu0
        %v1273 = vadd.f32 0.0, %v1272
        %v1274 = vpop.f32.mrb[0].mxu0
        %v1275 = vadd.f32 0.0, %v1274
        %v1276 = vpop.f32.mrb[0].mxu0
        %v1277 = vadd.f32 0.0, %v1276
        %1278 = vmatprep.mubr.bf16.mxu0 %v470
        %1279 = vmatmul.mubr.bf16.gmra.mrb[0].mxu0 %v469
        %v1280 = vpop.f32.mrb[0].mxu0
        %v1281 = vadd.f32 0.0, %v1280
        %v1282 = vpop.f32.mrb[0].mxu0
        %v1283 = vadd.f32 0.0, %v1282
        %v1284 = vpop.f32.mrb[0].mxu0
        %v1285 = vadd.f32 0.0, %v1284
        %v1286 = vpop.f32.mrb[0].mxu0
        %v1287 = vadd.f32 0.0, %v1286
        %1288 = vdwg.mxu0
        %1289 = vmatprep.subr.bf16.mxu0 %v1051
        %1290 = vmatpush1.bf16.msra.mxu0 %v1050
        %1291 = vmatprep.subr.bf16.mxu0 %v1055
        %1292 = vmatpush1.bf16.msra.mxu0 %v1054
        %1293 = vmatprep.subr.bf16.mxu0 %v1059
        %1294 = vmatpush1.bf16.msra.mxu0 %v1058
        %1295 = vmatprep.subr.bf16.mxu0 %v1063
        %1296 = vmatpush1.bf16.msra.mxu0 %v1062
        %1297 = vmatprep.subr.bf16.mxu0 %v1067
        %1298 = vmatpush1.bf16.msra.mxu0 %v1066
        %1299 = vmatprep.subr.bf16.mxu0 %v1071
        %1300 = vmatpush1.bf16.msra.mxu0 %v1070
        %1301 = vmatprep.subr.bf16.mxu0 %v1075
        %1302 = vmatpush1.bf16.msra.mxu0 %v1074
        %1303 = vmatprep.subr.bf16.mxu0 %v1079
        %1304 = vmatpush1.bf16.msra.mxu0 %v1078
        %1305 = vmatprep.subr.bf16.mxu0 %v1083
        %1306 = vmatpush1.bf16.msra.mxu0 %v1082
        %1307 = vmatprep.subr.bf16.mxu0 %v1087
        %1308 = vmatpush1.bf16.msra.mxu0 %v1086
        %1309 = vmatprep.subr.bf16.mxu0 %v1091
        %1310 = vmatpush1.bf16.msra.mxu0 %v1090
        %1311 = vmatprep.subr.bf16.mxu0 %v1095
        %1312 = vmatpush1.bf16.msra.mxu0 %v1094
        %1313 = vmatprep.subr.bf16.mxu0 %v1099
        %1314 = vmatpush1.bf16.msra.mxu0 %v1098
        %1315 = vmatprep.subr.bf16.mxu0 %v1103
        %1316 = vmatpush1.bf16.msra.mxu0 %v1102
        %1317 = vmatprep.subr.bf16.mxu0 %v1107
        %1318 = vmatpush1.bf16.msra.mxu0 %v1106
        %1319 = vmatprep.subr.bf16.mxu0 %v1111
        %1320 = vmatpush1.bf16.msra.mxu0 %v1110
        %1321 = vmatprep.mubr.bf16.mxu0 %v456
        %1322 = vmatmul.mubr.bf16.gmra.mrb[0].mxu0 %v455
        %v1323 = vpop.f32.mrb[0].mxu0
        %v1324 = vadd.f32 0.0, %v1323
        %v1325 = vpop.f32.mrb[0].mxu0
        %v1326 = vadd.f32 0.0, %v1325
        %v1327 = vpop.f32.mrb[0].mxu0
        %v1328 = vadd.f32 0.0, %v1327
        %v1329 = vpop.f32.mrb[0].mxu0
        %v1330 = vadd.f32 0.0, %v1329
        %1331 = vmatprep.mubr.bf16.mxu0 %v458
        %1332 = vmatmul.mubr.bf16.gmra.mrb[0].mxu0 %v457
        %v1333 = vpop.f32.mrb[0].mxu0
        %v1334 = vadd.f32 0.0, %v1333
        %v1335 = vpop.f32.mrb[0].mxu0
        %v1336 = vadd.f32 0.0, %v1335
        %v1337 = vpop.f32.mrb[0].mxu0
        %v1338 = vadd.f32 0.0, %v1337
        %v1339 = vpop.f32.mrb[0].mxu0
        %v1340 = vadd.f32 0.0, %v1339
        %1341 = vmatprep.mubr.bf16.mxu0 %v460
        %1342 = vmatmul.mubr.bf16.gmra.mrb[0].mxu0 %v459
        %v1343 = vpop.f32.mrb[0].mxu0
        %v1344 = vadd.f32 0.0, %v1343
        %v1345 = vpop.f32.mrb[0].mxu0
        %v1346 = vadd.f32 0.0, %v1345
        %v1347 = vpop.f32.mrb[0].mxu0
        %v1348 = vadd.f32 0.0, %v1347
        %v1349 = vpop.f32.mrb[0].mxu0
        %v1350 = vadd.f32 0.0, %v1349
        %1351 = vmatprep.mubr.bf16.mxu0 %v462
        %1352 = vmatmul.mubr.bf16.gmra.mrb[0].mxu0 %v461
        %v1353 = vpop.f32.mrb[0].mxu0
        %v1354 = vadd.f32 0.0, %v1353
        %v1355 = vpop.f32.mrb[0].mxu0
        %v1356 = vadd.f32 0.0, %v1355
        %v1357 = vpop.f32.mrb[0].mxu0
        %v1358 = vadd.f32 0.0, %v1357
        %v1359 = vpop.f32.mrb[0].mxu0
        %v1360 = vadd.f32 0.0, %v1359
        %1361 = vmatprep.mubr.bf16.mxu0 %v464
        %1362 = vmatmul.mubr.bf16.gmra.mrb[0].mxu0 %v463
        %v1363 = vpop.f32.mrb[0].mxu0
        %v1364 = vadd.f32 0.0, %v1363
        %v1365 = vpop.f32.mrb[0].mxu0
        %v1366 = vadd.f32 0.0, %v1365
        %v1367 = vpop.f32.mrb[0].mxu0
        %v1368 = vadd.f32 0.0, %v1367
        %v1369 = vpop.f32.mrb[0].mxu0
        %v1370 = vadd.f32 0.0, %v1369
        %1371 = vmatprep.mubr.bf16.mxu0 %v466
        %1372 = vmatmul.mubr.bf16.gmra.mrb[0].mxu0 %v465
        %v1373 = vpop.f32.mrb[0].mxu0
        %v1374 = vadd.f32 0.0, %v1373
        %v1375 = vpop.f32.mrb[0].mxu0
        %v1376 = vadd.f32 0.0, %v1375
        %v1377 = vpop.f32.mrb[0].mxu0
        %v1378 = vadd.f32 0.0, %v1377
        %v1379 = vpop.f32.mrb[0].mxu0
        %v1380 = vadd.f32 0.0, %v1379
        %1381 = vmatprep.mubr.bf16.mxu0 %v468
        %1382 = vmatmul.mubr.bf16.gmra.mrb[0].mxu0 %v467
        %v1383 = vpop.f32.mrb[0].mxu0
        %v1384 = vadd.f32 0.0, %v1383
        %v1385 = vpop.f32.mrb[0].mxu0
        %v1386 = vadd.f32 0.0, %v1385
        %v1387 = vpop.f32.mrb[0].mxu0
        %v1388 = vadd.f32 0.0, %v1387
        %v1389 = vpop.f32.mrb[0].mxu0
        %v1390 = vadd.f32 0.0, %v1389
        %1391 = vmatprep.mubr.bf16.mxu0 %v470
        %1392 = vmatmul.mubr.bf16.gmra.mrb[0].mxu0 %v469
        %v1393 = vpop.f32.mrb[0].mxu0
        %v1394 = vadd.f32 0.0, %v1393
        %v1395 = vpop.f32.mrb[0].mxu0
        %v1396 = vadd.f32 0.0, %v1395
        %v1397 = vpop.f32.mrb[0].mxu0
        %v1398 = vadd.f32 0.0, %v1397
        %v1399 = vpop.f32.mrb[0].mxu0
        %v1400 = vadd.f32 0.0, %v1399
        %1401 = vdwg.mxu0
        %v1402 = vpack.c.bf16 %v1215, %v1211
        %v1403 = vpack.c.bf16 %v1217, %v1213
        %v1404 = vpack.c.bf16 %v1225, %v1221
        %v1405 = vpack.c.bf16 %v1227, %v1223
        %v1406 = vpack.c.bf16 %v1235, %v1231
        %v1407 = vpack.c.bf16 %v1237, %v1233
        %v1408 = vpack.c.bf16 %v1245, %v1241
        %v1409 = vpack.c.bf16 %v1247, %v1243
        %v1410 = vpack.c.bf16 %v1255, %v1251
        %v1411 = vpack.c.bf16 %v1257, %v1253
        %v1412 = vpack.c.bf16 %v1265, %v1261
        %v1413 = vpack.c.bf16 %v1267, %v1263
        %v1414 = vpack.c.bf16 %v1275, %v1271
        %v1415 = vpack.c.bf16 %v1277, %v1273
        %v1416 = vpack.c.bf16 %v1285, %v1281
        %v1417 = vpack.c.bf16 %v1287, %v1283
        %v1418 = vpack.c.bf16 %v1328, %v1324
        %v1419 = vpack.c.bf16 %v1330, %v1326
        %v1420 = vpack.c.bf16 %v1338, %v1334
        %v1421 = vpack.c.bf16 %v1340, %v1336
        %v1422 = vpack.c.bf16 %v1348, %v1344
        %v1423 = vpack.c.bf16 %v1350, %v1346
        %v1424 = vpack.c.bf16 %v1358, %v1354
        %v1425 = vpack.c.bf16 %v1360, %v1356
        %v1426 = vpack.c.bf16 %v1368, %v1364
        %v1427 = vpack.c.bf16 %v1370, %v1366
        %v1428 = vpack.c.bf16 %v1378, %v1374
        %v1429 = vpack.c.bf16 %v1380, %v1376
        %v1430 = vpack.c.bf16 %v1388, %v1384
        %v1431 = vpack.c.bf16 %v1390, %v1386
        %v1432 = vpack.c.bf16 %v1398, %v1394
        %v1433 = vpack.c.bf16 %v1400, %v1396
        %vm1434 = vcmask 523264
        %v1436 = vsel %vm1434, %v776, 0
        %v1439 = vsel %vm1434, %v778, 0
        %v1442 = vsel %vm1434, %v780, 0
        %v1445 = vsel %vm1434, %v782, 0
        %v1448 = vsel %vm1434, %v784, 0
        %v1451 = vsel %vm1434, %v786, 0
        %v1454 = vsel %vm1434, %v788, 0
        %v1457 = vsel %vm1434, %v790, 0
        %v1460 = vsel %vm1434, %v1402, 0
        %v1463 = vsel %vm1434, %v1404, 0
        %v1466 = vsel %vm1434, %v1406, 0
        %v1469 = vsel %vm1434, %v1408, 0
        %v1472 = vsel %vm1434, %v1410, 0
        %v1475 = vsel %vm1434, %v1412, 0
        %v1478 = vsel %vm1434, %v1414, 0
        %v1481 = vsel %vm1434, %v1416, 0
        %1483 = vmatprep.subr.bf16.mxu0 0
        %1484 = vmatpush1.bf16.xpose.msra.mxu0 %v1460
        %1485 = vmatprep.subr.bf16.mxu0 0
        %1486 = vmatpush1.bf16.xpose.msra.mxu0 %v1463
        %1487 = vmatprep.subr.bf16.mxu0 0
        %1488 = vmatpush1.bf16.xpose.msra.mxu0 %v1466
        %1489 = vmatprep.subr.bf16.mxu0 0
        %1490 = vmatpush1.bf16.xpose.msra.mxu0 %v1469
        %1491 = vmatprep.subr.bf16.mxu0 0
        %1492 = vmatpush1.bf16.xpose.msra.mxu0 %v1472
        %1493 = vmatprep.subr.bf16.mxu0 0
        %1494 = vmatpush1.bf16.xpose.msra.mxu0 %v1475
        %1495 = vmatprep.subr.bf16.mxu0 0
        %1496 = vmatpush1.bf16.xpose.msra.mxu0 %v1478
        %1497 = vmatprep.subr.bf16.mxu0 0
        %1498 = vmatpush1.bf16.xpose.msra.mxu0 %v1481
        %1499 = vmatprep.subr.bf16.mxu0 0
        %1500 = vmatpush1.bf16.xpose.msra.mxu0 0
        %1501 = vmatprep.subr.bf16.mxu0 0
        %1502 = vmatpush1.bf16.xpose.msra.mxu0 0
        %1503 = vmatprep.subr.bf16.mxu0 0
        %1504 = vmatpush1.bf16.xpose.msra.mxu0 0
        %1505 = vmatprep.subr.bf16.mxu0 0
        %1506 = vmatpush1.bf16.xpose.msra.mxu0 0
        %1507 = vmatprep.subr.bf16.mxu0 0
        %1508 = vmatpush1.bf16.xpose.msra.mxu0 0
        %1509 = vmatprep.subr.bf16.mxu0 0
        %1510 = vmatpush1.bf16.xpose.msra.mxu0 0
        %1511 = vmatprep.subr.bf16.mxu0 0
        %1512 = vmatpush1.bf16.xpose.msra.mxu0 0
        %1513 = vmatprep.subr.bf16.mxu0 0
        %1514 = vmatpush1.bf16.xpose.msra.mxu0 0
        %1515 = vmatprep.mubr.bf16.mxu0 0
        %1516 = vmatmul.mubr.bf16.gmra.mrb[0].mxu0 %v1436
        %v1517 = vpop.f32.mrb[0].mxu0
        %v1518 = vadd.f32 0.0, %v1517
        %v1519 = vpop.f32.mrb[0].mxu0
        %v1520 = vpop.f32.mrb[0].mxu0
        %v1521 = vadd.f32 0.0, %v1520
        %v1522 = vpop.f32.mrb[0].mxu0
        %1523 = vmatprep.mubr.bf16.mxu0 0
        %1524 = vmatmul.mubr.bf16.gmra.mrb[0].mxu0 %v1439
        %v1525 = vpop.f32.mrb[0].mxu0
        %v1526 = vadd.f32 0.0, %v1525
        %v1527 = vpop.f32.mrb[0].mxu0
        %v1528 = vpop.f32.mrb[0].mxu0
        %v1529 = vadd.f32 0.0, %v1528
        %v1530 = vpop.f32.mrb[0].mxu0
        %1531 = vmatprep.mubr.bf16.mxu0 0
        %1532 = vmatmul.mubr.bf16.gmra.mrb[0].mxu0 %v1442
        %v1533 = vpop.f32.mrb[0].mxu0
        %v1534 = vadd.f32 0.0, %v1533
        %v1535 = vpop.f32.mrb[0].mxu0
        %v1536 = vpop.f32.mrb[0].mxu0
        %v1537 = vadd.f32 0.0, %v1536
        %v1538 = vpop.f32.mrb[0].mxu0
        %1539 = vmatprep.mubr.bf16.mxu0 0
        %1540 = vmatmul.mubr.bf16.gmra.mrb[0].mxu0 %v1445
        %v1541 = vpop.f32.mrb[0].mxu0
        %v1542 = vadd.f32 0.0, %v1541
        %v1543 = vpop.f32.mrb[0].mxu0
        %v1544 = vpop.f32.mrb[0].mxu0
        %v1545 = vadd.f32 0.0, %v1544
        %v1546 = vpop.f32.mrb[0].mxu0
        %1547 = vmatprep.mubr.bf16.mxu0 0
        %1548 = vmatmul.mubr.bf16.gmra.mrb[0].mxu0 %v1448
        %v1549 = vpop.f32.mrb[0].mxu0
        %v1550 = vadd.f32 0.0, %v1549
        %v1551 = vpop.f32.mrb[0].mxu0
        %v1552 = vpop.f32.mrb[0].mxu0
        %v1553 = vadd.f32 0.0, %v1552
        %v1554 = vpop.f32.mrb[0].mxu0
        %1555 = vmatprep.mubr.bf16.mxu0 0
        %1556 = vmatmul.mubr.bf16.gmra.mrb[0].mxu0 %v1451
        %v1557 = vpop.f32.mrb[0].mxu0
        %v1558 = vadd.f32 0.0, %v1557
        %v1559 = vpop.f32.mrb[0].mxu0
        %v1560 = vpop.f32.mrb[0].mxu0
        %v1561 = vadd.f32 0.0, %v1560
        %v1562 = vpop.f32.mrb[0].mxu0
        %1563 = vmatprep.mubr.bf16.mxu0 0
        %1564 = vmatmul.mubr.bf16.gmra.mrb[0].mxu0 %v1454
        %v1565 = vpop.f32.mrb[0].mxu0
        %v1566 = vadd.f32 0.0, %v1565
        %v1567 = vpop.f32.mrb[0].mxu0
        %v1568 = vpop.f32.mrb[0].mxu0
        %v1569 = vadd.f32 0.0, %v1568
        %v1570 = vpop.f32.mrb[0].mxu0
        %1571 = vmatprep.mubr.bf16.mxu0 0
        %1572 = vmatmul.mubr.bf16.gmra.mrb[0].mxu0 %v1457
        %v1573 = vpop.f32.mrb[0].mxu0
        %v1574 = vadd.f32 0.0, %v1573
        %v1575 = vpop.f32.mrb[0].mxu0
        %v1576 = vpop.f32.mrb[0].mxu0
        %v1577 = vadd.f32 0.0, %v1576
        %v1578 = vpop.f32.mrb[0].mxu0
        %1579 = vdwg.mxu0
        %1580 = vmax.xlane.f32.xlu0 %v1518
        %v1581 = vpop.xlane.xlu0 %1580
        %1582 = vmax.xlane.f32.xlu0 %v1521
        %v1583 = vpop.xlane.xlu0 %1582
        %1584 = vmax.xlane.f32.xlu0 %v1526
        %v1585 = vpop.xlane.xlu0 %1584
        %1586 = vmax.xlane.f32.xlu0 %v1529
        %v1587 = vpop.xlane.xlu0 %1586
        %1588 = vmax.xlane.f32.xlu0 %v1534
        %v1589 = vpop.xlane.xlu0 %1588
        %1590 = vmax.xlane.f32.xlu0 %v1537
        %v1591 = vpop.xlane.xlu0 %1590
        %1592 = vmax.xlane.f32.xlu0 %v1542
        %v1593 = vpop.xlane.xlu0 %1592
        %1594 = vmax.xlane.f32.xlu0 %v1545
        %v1595 = vpop.xlane.xlu0 %1594
        %1596 = vmax.xlane.f32.xlu0 %v1550
        %v1597 = vpop.xlane.xlu0 %1596
        %1598 = vmax.xlane.f32.xlu0 %v1553
        %v1599 = vpop.xlane.xlu0 %1598
        %1600 = vmax.xlane.f32.xlu0 %v1558
        %v1601 = vpop.xlane.xlu0 %1600
        %1602 = vmax.xlane.f32.xlu0 %v1561
        %v1603 = vpop.xlane.xlu0 %1602
        %1604 = vmax.xlane.f32.xlu0 %v1566
        %v1605 = vpop.xlane.xlu0 %1604
        %1606 = vmax.xlane.f32.xlu0 %v1569
        %v1607 = vpop.xlane.xlu0 %1606
        %1608 = vmax.xlane.f32.xlu0 %v1574
        %v1609 = vpop.xlane.xlu0 %1608
        %1610 = vmax.xlane.f32.xlu0 %v1577
        %v1611 = vpop.xlane.xlu0 %1610
        %v1612 = vsub.f32 %v1518, %v1581
        %v1613 = vsub.f32 %v1521, %v1583
        %v1614 = vsub.f32 %v1526, %v1585
        %v1615 = vsub.f32 %v1529, %v1587
        %v1616 = vsub.f32 %v1534, %v1589
        %v1617 = vsub.f32 %v1537, %v1591
        %v1618 = vsub.f32 %v1542, %v1593
        %v1619 = vsub.f32 %v1545, %v1595
        %v1620 = vsub.f32 %v1550, %v1597
        %v1621 = vsub.f32 %v1553, %v1599
        %v1622 = vsub.f32 %v1558, %v1601
        %v1623 = vsub.f32 %v1561, %v1603
        %v1624 = vsub.f32 %v1566, %v1605
        %v1625 = vsub.f32 %v1569, %v1607
        %v1626 = vsub.f32 %v1574, %v1609
        %v1627 = vsub.f32 %v1577, %v1611
        %v1628 = vmul.f32 %v1612, 1.442695
        %v1629 = vpow.pop %v1628
        %v1630 = vmul.f32 %v1613, 1.442695
        %v1631 = vpow.pop %v1630
        %v1632 = vmul.f32 %v1614, 1.442695
        %v1633 = vpow.pop %v1632
        %v1634 = vmul.f32 %v1615, 1.442695
        %v1635 = vpow.pop %v1634
        %v1636 = vmul.f32 %v1616, 1.442695
        %v1637 = vpow.pop %v1636
        %v1638 = vmul.f32 %v1617, 1.442695
        %v1639 = vpow.pop %v1638
        %v1640 = vmul.f32 %v1618, 1.442695
        %v1641 = vpow.pop %v1640
        %v1642 = vmul.f32 %v1619, 1.442695
        %v1643 = vpow.pop %v1642
        %v1644 = vmul.f32 %v1620, 1.442695
        %v1645 = vpow.pop %v1644
        %v1646 = vmul.f32 %v1621, 1.442695
        %v1647 = vpow.pop %v1646
        %v1648 = vmul.f32 %v1622, 1.442695
        %v1649 = vpow.pop %v1648
        %v1650 = vmul.f32 %v1623, 1.442695
        %v1651 = vpow.pop %v1650
        %v1652 = vmul.f32 %v1624, 1.442695
        %v1653 = vpow.pop %v1652
        %v1654 = vmul.f32 %v1625, 1.442695
        %v1655 = vpow.pop %v1654
        %v1656 = vmul.f32 %v1626, 1.442695
        %v1657 = vpow.pop %v1656
        %v1658 = vmul.f32 %v1627, 1.442695
        %v1659 = vpow.pop %v1658
        %1660 = vadd.xlane.f32.xlu0 %v1629
        %v1661 = vpop.xlane.xlu0 %1660
        %1662 = vadd.xlane.f32.xlu0 %v1631
        %v1663 = vpop.xlane.xlu0 %1662
        %1664 = vadd.xlane.f32.xlu0 %v1633
        %v1665 = vpop.xlane.xlu0 %1664
        %1666 = vadd.xlane.f32.xlu0 %v1635
        %v1667 = vpop.xlane.xlu0 %1666
        %1668 = vadd.xlane.f32.xlu0 %v1637
        %v1669 = vpop.xlane.xlu0 %1668
        %1670 = vadd.xlane.f32.xlu0 %v1639
        %v1671 = vpop.xlane.xlu0 %1670
        %1672 = vadd.xlane.f32.xlu0 %v1641
        %v1673 = vpop.xlane.xlu0 %1672
        %1674 = vadd.xlane.f32.xlu0 %v1643
        %v1675 = vpop.xlane.xlu0 %1674
        %1676 = vadd.xlane.f32.xlu0 %v1645
        %v1677 = vpop.xlane.xlu0 %1676
        %1678 = vadd.xlane.f32.xlu0 %v1647
        %v1679 = vpop.xlane.xlu0 %1678
        %1680 = vadd.xlane.f32.xlu0 %v1649
        %v1681 = vpop.xlane.xlu0 %1680
        %1682 = vadd.xlane.f32.xlu0 %v1651
        %v1683 = vpop.xlane.xlu0 %1682
        %1684 = vadd.xlane.f32.xlu0 %v1653
        %v1685 = vpop.xlane.xlu0 %1684
        %1686 = vadd.xlane.f32.xlu0 %v1655
        %v1687 = vpop.xlane.xlu0 %1686
        %1688 = vadd.xlane.f32.xlu0 %v1657
        %v1689 = vpop.xlane.xlu0 %1688
        %1690 = vadd.xlane.f32.xlu0 %v1659
        %v1691 = vpop.xlane.xlu0 %1690
        %v1692 = vpack.c.bf16 %v1631, %v1629
        %v1693 = vpack.c.bf16 %v1635, %v1633
        %v1694 = vpack.c.bf16 %v1639, %v1637
        %v1695 = vpack.c.bf16 %v1643, %v1641
        %v1696 = vpack.c.bf16 %v1647, %v1645
        %v1697 = vpack.c.bf16 %v1651, %v1649
        %v1698 = vpack.c.bf16 %v1655, %v1653
        %v1699 = vpack.c.bf16 %v1659, %v1657
        %1700 = vmatprep.subr.bf16.mxu0 0
        %1701 = vmatpush1.bf16.msra.mxu0 %v1418
        %1702 = vmatprep.subr.bf16.mxu0 0
        %1703 = vmatpush1.bf16.msra.mxu0 %v1420
        %1704 = vmatprep.subr.bf16.mxu0 0
        %1705 = vmatpush1.bf16.msra.mxu0 %v1422
        %1706 = vmatprep.subr.bf16.mxu0 0
        %1707 = vmatpush1.bf16.msra.mxu0 %v1424
        %1708 = vmatprep.subr.bf16.mxu0 0
        %1709 = vmatpush1.bf16.msra.mxu0 %v1426
        %1710 = vmatprep.subr.bf16.mxu0 0
        %1711 = vmatpush1.bf16.msra.mxu0 %v1428
        %1712 = vmatprep.subr.bf16.mxu0 0
        %1713 = vmatpush1.bf16.msra.mxu0 %v1430
        %1714 = vmatprep.subr.bf16.mxu0 0
        %1715 = vmatpush1.bf16.msra.mxu0 %v1432
        %1716 = vmatprep.subr.bf16.mxu0 0
        %1717 = vmatpush1.bf16.msra.mxu0 0
        %1718 = vmatprep.subr.bf16.mxu0 0
        %1719 = vmatpush1.bf16.msra.mxu0 0
        %1720 = vmatprep.subr.bf16.mxu0 0
        %1721 = vmatpush1.bf16.msra.mxu0 0
        %1722 = vmatprep.subr.bf16.mxu0 0
        %1723 = vmatpush1.bf16.msra.mxu0 0
        %1724 = vmatprep.subr.bf16.mxu0 0
        %1725 = vmatpush1.bf16.msra.mxu0 0
        %1726 = vmatprep.subr.bf16.mxu0 0
        %1727 = vmatpush1.bf16.msra.mxu0 0
        %1728 = vmatprep.subr.bf16.mxu0 0
        %1729 = vmatpush1.bf16.msra.mxu0 0
        %1730 = vmatprep.subr.bf16.mxu0 0
        %1731 = vmatpush1.bf16.msra.mxu0 0
        %1732 = vmatprep.mubr.bf16.mxu0 0
        %1733 = vmatmul.mubr.bf16.gmra.mrb[0].mxu0 %v1692
        %v1734 = vpop.f32.mrb[0].mxu0
        %v1735 = vadd.f32 0.0, %v1734
        %v1736 = vpop.f32.mrb[0].mxu0
        %v1737 = vpop.f32.mrb[0].mxu0
        %v1738 = vadd.f32 0.0, %v1737
        %v1739 = vpop.f32.mrb[0].mxu0
        %1740 = vmatprep.mubr.bf16.mxu0 0
        %1741 = vmatmul.mubr.bf16.gmra.mrb[0].mxu0 %v1693
        %v1742 = vpop.f32.mrb[0].mxu0
        %v1743 = vadd.f32 0.0, %v1742
        %v1744 = vpop.f32.mrb[0].mxu0
        %v1745 = vpop.f32.mrb[0].mxu0
        %v1746 = vadd.f32 0.0, %v1745
        %v1747 = vpop.f32.mrb[0].mxu0
        %1748 = vmatprep.mubr.bf16.mxu0 0
        %1749 = vmatmul.mubr.bf16.gmra.mrb[0].mxu0 %v1694
        %v1750 = vpop.f32.mrb[0].mxu0
        %v1751 = vadd.f32 0.0, %v1750
        %v1752 = vpop.f32.mrb[0].mxu0
        %v1753 = vpop.f32.mrb[0].mxu0
        %v1754 = vadd.f32 0.0, %v1753
        %v1755 = vpop.f32.mrb[0].mxu0
        %1756 = vmatprep.mubr.bf16.mxu0 0
        %1757 = vmatmul.mubr.bf16.gmra.mrb[0].mxu0 %v1695
        %v1758 = vpop.f32.mrb[0].mxu0
        %v1759 = vadd.f32 0.0, %v1758
        %v1760 = vpop.f32.mrb[0].mxu0
        %v1761 = vpop.f32.mrb[0].mxu0
        %v1762 = vadd.f32 0.0, %v1761
        %v1763 = vpop.f32.mrb[0].mxu0
        %1764 = vmatprep.mubr.bf16.mxu0 0
        %1765 = vmatmul.mubr.bf16.gmra.mrb[0].mxu0 %v1696
        %v1766 = vpop.f32.mrb[0].mxu0
        %v1767 = vadd.f32 0.0, %v1766
        %v1768 = vpop.f32.mrb[0].mxu0
        %v1769 = vpop.f32.mrb[0].mxu0
        %v1770 = vadd.f32 0.0, %v1769
        %v1771 = vpop.f32.mrb[0].mxu0
        %1772 = vmatprep.mubr.bf16.mxu0 0
        %1773 = vmatmul.mubr.bf16.gmra.mrb[0].mxu0 %v1697
        %v1774 = vpop.f32.mrb[0].mxu0
        %v1775 = vadd.f32 0.0, %v1774
        %v1776 = vpop.f32.mrb[0].mxu0
        %v1777 = vpop.f32.mrb[0].mxu0
        %v1778 = vadd.f32 0.0, %v1777
        %v1779 = vpop.f32.mrb[0].mxu0
        %1780 = vmatprep.mubr.bf16.mxu0 0
        %1781 = vmatmul.mubr.bf16.gmra.mrb[0].mxu0 %v1698
        %v1782 = vpop.f32.mrb[0].mxu0
        %v1783 = vadd.f32 0.0, %v1782
        %v1784 = vpop.f32.mrb[0].mxu0
        %v1785 = vpop.f32.mrb[0].mxu0
        %v1786 = vadd.f32 0.0, %v1785
        %v1787 = vpop.f32.mrb[0].mxu0
        %1788 = vmatprep.mubr.bf16.mxu0 0
        %1789 = vmatmul.mubr.bf16.gmra.mrb[0].mxu0 %v1699
        %v1790 = vpop.f32.mrb[0].mxu0
        %v1791 = vadd.f32 0.0, %v1790
        %v1792 = vpop.f32.mrb[0].mxu0
        %v1793 = vpop.f32.mrb[0].mxu0
        %v1794 = vadd.f32 0.0, %v1793
        %v1795 = vpop.f32.mrb[0].mxu0
        %1796 = vdwg.mxu0
        %v1797 = vrcp.pop %v1661
        %v1798 = vrcp.pop %v1663
        %v1799 = vrcp.pop %v1665
        %v1800 = vrcp.pop %v1667
        %v1801 = vrcp.pop %v1669
        %v1802 = vrcp.pop %v1671
        %v1803 = vrcp.pop %v1673
        %v1804 = vrcp.pop %v1675
        %v1805 = vrcp.pop %v1677
        %v1806 = vrcp.pop %v1679
        %v1807 = vrcp.pop %v1681
        %v1808 = vrcp.pop %v1683
        %v1809 = vrcp.pop %v1685
        %v1810 = vrcp.pop %v1687
        %v1811 = vrcp.pop %v1689
        %v1812 = vrcp.pop %v1691
        %v1813 = vmul.f32 %v1735, %v1797
        %v1814 = vmul.f32 %v1738, %v1798
        %v1815 = vmul.f32 %v1743, %v1799
        %v1816 = vmul.f32 %v1746, %v1800
        %v1817 = vmul.f32 %v1751, %v1801
        %v1818 = vmul.f32 %v1754, %v1802
        %v1819 = vmul.f32 %v1759, %v1803
        %v1820 = vmul.f32 %v1762, %v1804
        %v1821 = vmul.f32 %v1767, %v1805
        %v1822 = vmul.f32 %v1770, %v1806
        %v1823 = vmul.f32 %v1775, %v1807
        %v1824 = vmul.f32 %v1778, %v1808
        %v1825 = vmul.f32 %v1783, %v1809
        %v1826 = vmul.f32 %v1786, %v1810
        %v1827 = vmul.f32 %v1791, %v1811
        %v1828 = vmul.f32 %v1794, %v1812
        %v1829 = vpack.c.bf16 %v1814, %v1813
        %v1830 = vpack.c.bf16 %v1816, %v1815
        %v1831 = vpack.c.bf16 %v1818, %v1817
        %v1832 = vpack.c.bf16 %v1820, %v1819
        %v1833 = vpack.c.bf16 %v1822, %v1821
        %v1834 = vpack.c.bf16 %v1824, %v1823
        %v1835 = vpack.c.bf16 %v1826, %v1825
        %v1836 = vpack.c.bf16 %v1828, %v1827
        %1837 = vst.msk [vmem:[#allocation2] sm:$0xff] %vm1434, %v1829
        %1838 = vst.msk [vmem:[#allocation2 + $0x10] sm:$0xff] %vm1434, %v1830
        %1839 = vst.msk [vmem:[#allocation2 + $0x20] sm:$0xff] %vm1434, %v1831
        %1840 = vst.msk [vmem:[#allocation2 + $0x30] sm:$0xff] %vm1434, %v1832
        %1841 = vst.msk [vmem:[#allocation2 + $0x40] sm:$0xff] %vm1434, %v1833
        %1842 = vst.msk [vmem:[#allocation2 + $0x50] sm:$0xff] %vm1434, %v1834
        %1843 = vst.msk [vmem:[#allocation2 + $0x60] sm:$0xff] %vm1434, %v1835
        %1844 = vst.msk [vmem:[#allocation2 + $0x70] sm:$0xff] %vm1434, %v1836
        %1853 = vrot.lane.b32.xlu0 %v776, 64
        %v1854 = vpop.permute.xlu0 %1853
        %1855 = vrot.lane.b32.xlu0 %v778, 64
        %v1856 = vpop.permute.xlu0 %1855
        %1857 = vrot.lane.b32.xlu0 %v780, 64
        %v1858 = vpop.permute.xlu0 %1857
        %1859 = vrot.lane.b32.xlu0 %v782, 64
        %v1860 = vpop.permute.xlu0 %1859
        %1861 = vrot.lane.b32.xlu0 %v784, 64
        %v1862 = vpop.permute.xlu0 %1861
        %1863 = vrot.lane.b32.xlu0 %v786, 64
        %v1864 = vpop.permute.xlu0 %1863
        %1865 = vrot.lane.b32.xlu0 %v788, 64
        %v1866 = vpop.permute.xlu0 %1865
        %1867 = vrot.lane.b32.xlu0 %v790, 64
        %v1868 = vpop.permute.xlu0 %1867
        %1877 = vrot.lane.b32.xlu0 %v1402, 64
        %v1878 = vpop.permute.xlu0 %1877
        %1879 = vrot.lane.b32.xlu0 %v1404, 64
        %v1880 = vpop.permute.xlu0 %1879
        %1881 = vrot.lane.b32.xlu0 %v1406, 64
        %v1882 = vpop.permute.xlu0 %1881
        %1883 = vrot.lane.b32.xlu0 %v1408, 64
        %v1884 = vpop.permute.xlu0 %1883
        %1885 = vrot.lane.b32.xlu0 %v1410, 64
        %v1886 = vpop.permute.xlu0 %1885
        %1887 = vrot.lane.b32.xlu0 %v1412, 64
        %v1888 = vpop.permute.xlu0 %1887
        %1889 = vrot.lane.b32.xlu0 %v1414, 64
        %v1890 = vpop.permute.xlu0 %1889
        %1891 = vrot.lane.b32.xlu0 %v1416, 64
        %v1892 = vpop.permute.xlu0 %1891
        %v1894 = vsel %vm1434, %v1854, 0
        %v1897 = vsel %vm1434, %v1856, 0
        %v1900 = vsel %vm1434, %v1858, 0
        %v1903 = vsel %vm1434, %v1860, 0
        %v1906 = vsel %vm1434, %v1862, 0
        %v1909 = vsel %vm1434, %v1864, 0
        %v1912 = vsel %vm1434, %v1866, 0
        %v1915 = vsel %vm1434, %v1868, 0
        %v1918 = vsel %vm1434, %v1878, 0
        %v1921 = vsel %vm1434, %v1880, 0
        %v1924 = vsel %vm1434, %v1882, 0
        %v1927 = vsel %vm1434, %v1884, 0
        %v1930 = vsel %vm1434, %v1886, 0
        %v1933 = vsel %vm1434, %v1888, 0
        %v1936 = vsel %vm1434, %v1890, 0
        %v1939 = vsel %vm1434, %v1892, 0
        %1941 = vmatprep.subr.bf16.mxu0 0
        %1942 = vmatpush1.bf16.xpose.msra.mxu0 %v1918
        %1943 = vmatprep.subr.bf16.mxu0 0
        %1944 = vmatpush1.bf16.xpose.msra.mxu0 %v1921
        %1945 = vmatprep.subr.bf16.mxu0 0
        %1946 = vmatpush1.bf16.xpose.msra.mxu0 %v1924
        %1947 = vmatprep.subr.bf16.mxu0 0
        %1948 = vmatpush1.bf16.xpose.msra.mxu0 %v1927
        %1949 = vmatprep.subr.bf16.mxu0 0
        %1950 = vmatpush1.bf16.xpose.msra.mxu0 %v1930
        %1951 = vmatprep.subr.bf16.mxu0 0
        %1952 = vmatpush1.bf16.xpose.msra.mxu0 %v1933
        %1953 = vmatprep.subr.bf16.mxu0 0
        %1954 = vmatpush1.bf16.xpose.msra.mxu0 %v1936
        %1955 = vmatprep.subr.bf16.mxu0 0
        %1956 = vmatpush1.bf16.xpose.msra.mxu0 %v1939
        %1957 = vmatprep.subr.bf16.mxu0 0
        %1958 = vmatpush1.bf16.xpose.msra.mxu0 0
        %1959 = vmatprep.subr.bf16.mxu0 0
        %1960 = vmatpush1.bf16.xpose.msra.mxu0 0
        %1961 = vmatprep.subr.bf16.mxu0 0
        %1962 = vmatpush1.bf16.xpose.msra.mxu0 0
        %1963 = vmatprep.subr.bf16.mxu0 0
        %1964 = vmatpush1.bf16.xpose.msra.mxu0 0
        %1965 = vmatprep.subr.bf16.mxu0 0
        %1966 = vmatpush1.bf16.xpose.msra.mxu0 0
        %1967 = vmatprep.subr.bf16.mxu0 0
        %1968 = vmatpush1.bf16.xpose.msra.mxu0 0
        %1969 = vmatprep.subr.bf16.mxu0 0
        %1970 = vmatpush1.bf16.xpose.msra.mxu0 0
        %1971 = vmatprep.subr.bf16.mxu0 0
        %1972 = vmatpush1.bf16.xpose.msra.mxu0 0
        %1973 = vmatprep.mubr.bf16.mxu0 0
        %1974 = vmatmul.mubr.bf16.gmra.mrb[0].mxu0 %v1894
        %v1975 = vpop.f32.mrb[0].mxu0
        %v1976 = vadd.f32 0.0, %v1975
        %v1977 = vpop.f32.mrb[0].mxu0
        %v1978 = vpop.f32.mrb[0].mxu0
        %v1979 = vadd.f32 0.0, %v1978
        %v1980 = vpop.f32.mrb[0].mxu0
        %1981 = vmatprep.mubr.bf16.mxu0 0
        %1982 = vmatmul.mubr.bf16.gmra.mrb[0].mxu0 %v1897
        %v1983 = vpop.f32.mrb[0].mxu0
        %v1984 = vadd.f32 0.0, %v1983
        %v1985 = vpop.f32.mrb[0].mxu0
        %v1986 = vpop.f32.mrb[0].mxu0
        %v1987 = vadd.f32 0.0, %v1986
        %v1988 = vpop.f32.mrb[0].mxu0
        %1989 = vmatprep.mubr.bf16.mxu0 0
        %1990 = vmatmul.mubr.bf16.gmra.mrb[0].mxu0 %v1900
        %v1991 = vpop.f32.mrb[0].mxu0
        %v1992 = vadd.f32 0.0, %v1991
        %v1993 = vpop.f32.mrb[0].mxu0
        %v1994 = vpop.f32.mrb[0].mxu0
        %v1995 = vadd.f32 0.0, %v1994
        %v1996 = vpop.f32.mrb[0].mxu0
        %1997 = vmatprep.mubr.bf16.mxu0 0
        %1998 = vmatmul.mubr.bf16.gmra.mrb[0].mxu0 %v1903
        %v1999 = vpop.f32.mrb[0].mxu0
        %v2000 = vadd.f32 0.0, %v1999
        %v2001 = vpop.f32.mrb[0].mxu0
        %v2002 = vpop.f32.mrb[0].mxu0
        %v2003 = vadd.f32 0.0, %v2002
        %v2004 = vpop.f32.mrb[0].mxu0
        %2005 = vmatprep.mubr.bf16.mxu0 0
        %2006 = vmatmul.mubr.bf16.gmra.mrb[0].mxu0 %v1906
        %v2007 = vpop.f32.mrb[0].mxu0
        %v2008 = vadd.f32 0.0, %v2007
        %v2009 = vpop.f32.mrb[0].mxu0
        %v2010 = vpop.f32.mrb[0].mxu0
        %v2011 = vadd.f32 0.0, %v2010
        %v2012 = vpop.f32.mrb[0].mxu0
        %2013 = vmatprep.mubr.bf16.mxu0 0
        %2014 = vmatmul.mubr.bf16.gmra.mrb[0].mxu0 %v1909
        %v2015 = vpop.f32.mrb[0].mxu0
        %v2016 = vadd.f32 0.0, %v2015
        %v2017 = vpop.f32.mrb[0].mxu0
        %v2018 = vpop.f32.mrb[0].mxu0
        %v2019 = vadd.f32 0.0, %v2018
        %v2020 = vpop.f32.mrb[0].mxu0
        %2021 = vmatprep.mubr.bf16.mxu0 0
        %2022 = vmatmul.mubr.bf16.gmra.mrb[0].mxu0 %v1912
        %v2023 = vpop.f32.mrb[0].mxu0
        %v2024 = vadd.f32 0.0, %v2023
        %v2025 = vpop.f32.mrb[0].mxu0
        %v2026 = vpop.f32.mrb[0].mxu0
        %v2027 = vadd.f32 0.0, %v2026
        %v2028 = vpop.f32.mrb[0].mxu0
        %2029 = vmatprep.mubr.bf16.mxu0 0
        %2030 = vmatmul.mubr.bf16.gmra.mrb[0].mxu0 %v1915
        %v2031 = vpop.f32.mrb[0].mxu0
        %v2032 = vadd.f32 0.0, %v2031
        %v2033 = vpop.f32.mrb[0].mxu0
        %v2034 = vpop.f32.mrb[0].mxu0
        %v2035 = vadd.f32 0.0, %v2034
        %v2036 = vpop.f32.mrb[0].mxu0
        %2037 = vdwg.mxu0
        %2038 = vmax.xlane.f32.xlu0 %v1976
        %v2039 = vpop.xlane.xlu0 %2038
        %2040 = vmax.xlane.f32.xlu0 %v1979
        %v2041 = vpop.xlane.xlu0 %2040
        %2042 = vmax.xlane.f32.xlu0 %v1984
        %v2043 = vpop.xlane.xlu0 %2042
        %2044 = vmax.xlane.f32.xlu0 %v1987
        %v2045 = vpop.xlane.xlu0 %2044
        %2046 = vmax.xlane.f32.xlu0 %v1992
        %v2047 = vpop.xlane.xlu0 %2046
        %2048 = vmax.xlane.f32.xlu0 %v1995
        %v2049 = vpop.xlane.xlu0 %2048
        %2050 = vmax.xlane.f32.xlu0 %v2000
        %v2051 = vpop.xlane.xlu0 %2050
        %2052 = vmax.xlane.f32.xlu0 %v2003
        %v2053 = vpop.xlane.xlu0 %2052
        %2054 = vmax.xlane.f32.xlu0 %v2008
        %v2055 = vpop.xlane.xlu0 %2054
        %2056 = vmax.xlane.f32.xlu0 %v2011
        %v2057 = vpop.xlane.xlu0 %2056
        %2058 = vmax.xlane.f32.xlu0 %v2016
        %v2059 = vpop.xlane.xlu0 %2058
        %2060 = vmax.xlane.f32.xlu0 %v2019
        %v2061 = vpop.xlane.xlu0 %2060
        %2062 = vmax.xlane.f32.xlu0 %v2024
        %v2063 = vpop.xlane.xlu0 %2062
        %2064 = vmax.xlane.f32.xlu0 %v2027
        %v2065 = vpop.xlane.xlu0 %2064
        %2066 = vmax.xlane.f32.xlu0 %v2032
        %v2067 = vpop.xlane.xlu0 %2066
        %2068 = vmax.xlane.f32.xlu0 %v2035
        %v2069 = vpop.xlane.xlu0 %2068
        %v2070 = vsub.f32 %v1976, %v2039
        %v2071 = vsub.f32 %v1979, %v2041
        %v2072 = vsub.f32 %v1984, %v2043
        %v2073 = vsub.f32 %v1987, %v2045
        %v2074 = vsub.f32 %v1992, %v2047
        %v2075 = vsub.f32 %v1995, %v2049
        %v2076 = vsub.f32 %v2000, %v2051
        %v2077 = vsub.f32 %v2003, %v2053
        %v2078 = vsub.f32 %v2008, %v2055
        %v2079 = vsub.f32 %v2011, %v2057
        %v2080 = vsub.f32 %v2016, %v2059
        %v2081 = vsub.f32 %v2019, %v2061
        %v2082 = vsub.f32 %v2024, %v2063
        %v2083 = vsub.f32 %v2027, %v2065
        %v2084 = vsub.f32 %v2032, %v2067
        %v2085 = vsub.f32 %v2035, %v2069
        %v2086 = vmul.f32 %v2070, 1.442695
        %v2087 = vpow.pop %v2086
        %v2088 = vmul.f32 %v2071, 1.442695
        %v2089 = vpow.pop %v2088
        %v2090 = vmul.f32 %v2072, 1.442695
        %v2091 = vpow.pop %v2090
        %v2092 = vmul.f32 %v2073, 1.442695
        %v2093 = vpow.pop %v2092
        %v2094 = vmul.f32 %v2074, 1.442695
        %v2095 = vpow.pop %v2094
        %v2096 = vmul.f32 %v2075, 1.442695
        %v2097 = vpow.pop %v2096
        %v2098 = vmul.f32 %v2076, 1.442695
        %v2099 = vpow.pop %v2098
        %v2100 = vmul.f32 %v2077, 1.442695
        %v2101 = vpow.pop %v2100
        %v2102 = vmul.f32 %v2078, 1.442695
        %v2103 = vpow.pop %v2102
        %v2104 = vmul.f32 %v2079, 1.442695
        %v2105 = vpow.pop %v2104
        %v2106 = vmul.f32 %v2080, 1.442695
        %v2107 = vpow.pop %v2106
        %v2108 = vmul.f32 %v2081, 1.442695
        %v2109 = vpow.pop %v2108
        %v2110 = vmul.f32 %v2082, 1.442695
        %v2111 = vpow.pop %v2110
        %v2112 = vmul.f32 %v2083, 1.442695
        %v2113 = vpow.pop %v2112
        %v2114 = vmul.f32 %v2084, 1.442695
        %v2115 = vpow.pop %v2114
        %v2116 = vmul.f32 %v2085, 1.442695
        %v2117 = vpow.pop %v2116
        %2118 = vadd.xlane.f32.xlu0 %v2087
        %v2119 = vpop.xlane.xlu0 %2118
        %2120 = vadd.xlane.f32.xlu0 %v2089
        %v2121 = vpop.xlane.xlu0 %2120
        %2122 = vadd.xlane.f32.xlu0 %v2091
        %v2123 = vpop.xlane.xlu0 %2122
        %2124 = vadd.xlane.f32.xlu0 %v2093
        %v2125 = vpop.xlane.xlu0 %2124
        %2126 = vadd.xlane.f32.xlu0 %v2095
        %v2127 = vpop.xlane.xlu0 %2126
        %2128 = vadd.xlane.f32.xlu0 %v2097
        %v2129 = vpop.xlane.xlu0 %2128
        %2130 = vadd.xlane.f32.xlu0 %v2099
        %v2131 = vpop.xlane.xlu0 %2130
        %2132 = vadd.xlane.f32.xlu0 %v2101
        %v2133 = vpop.xlane.xlu0 %2132
        %2134 = vadd.xlane.f32.xlu0 %v2103
        %v2135 = vpop.xlane.xlu0 %2134
        %2136 = vadd.xlane.f32.xlu0 %v2105
        %v2137 = vpop.xlane.xlu0 %2136
        %2138 = vadd.xlane.f32.xlu0 %v2107
        %v2139 = vpop.xlane.xlu0 %2138
        %2140 = vadd.xlane.f32.xlu0 %v2109
        %v2141 = vpop.xlane.xlu0 %2140
        %2142 = vadd.xlane.f32.xlu0 %v2111
        %v2143 = vpop.xlane.xlu0 %2142
        %2144 = vadd.xlane.f32.xlu0 %v2113
        %v2145 = vpop.xlane.xlu0 %2144
        %2146 = vadd.xlane.f32.xlu0 %v2115
        %v2147 = vpop.xlane.xlu0 %2146
        %2148 = vadd.xlane.f32.xlu0 %v2117
        %v2149 = vpop.xlane.xlu0 %2148
        %v2150 = vpack.c.bf16 %v2089, %v2087
        %v2151 = vpack.c.bf16 %v2093, %v2091
        %v2152 = vpack.c.bf16 %v2097, %v2095
        %v2153 = vpack.c.bf16 %v2101, %v2099
        %v2154 = vpack.c.bf16 %v2105, %v2103
        %v2155 = vpack.c.bf16 %v2109, %v2107
        %v2156 = vpack.c.bf16 %v2113, %v2111
        %v2157 = vpack.c.bf16 %v2117, %v2115
        %2166 = vrot.lane.b32.xlu0 %v1418, 64
        %v2167 = vpop.permute.xlu0 %2166
        %2168 = vrot.lane.b32.xlu0 %v1420, 64
        %v2169 = vpop.permute.xlu0 %2168
        %2170 = vrot.lane.b32.xlu0 %v1422, 64
        %v2171 = vpop.permute.xlu0 %2170
        %2172 = vrot.lane.b32.xlu0 %v1424, 64
        %v2173 = vpop.permute.xlu0 %2172
        %2174 = vrot.lane.b32.xlu0 %v1426, 64
        %v2175 = vpop.permute.xlu0 %2174
        %2176 = vrot.lane.b32.xlu0 %v1428, 64
        %v2177 = vpop.permute.xlu0 %2176
        %2178 = vrot.lane.b32.xlu0 %v1430, 64
        %v2179 = vpop.permute.xlu0 %2178
        %2180 = vrot.lane.b32.xlu0 %v1432, 64
        %v2181 = vpop.permute.xlu0 %2180
        %2190 = vmatprep.subr.bf16.mxu0 0
        %2191 = vmatpush1.bf16.msra.mxu0 %v2167
        %2192 = vmatprep.subr.bf16.mxu0 0
        %2193 = vmatpush1.bf16.msra.mxu0 %v2169
        %2194 = vmatprep.subr.bf16.mxu0 0
        %2195 = vmatpush1.bf16.msra.mxu0 %v2171
        %2196 = vmatprep.subr.bf16.mxu0 0
        %2197 = vmatpush1.bf16.msra.mxu0 %v2173
        %2198 = vmatprep.subr.bf16.mxu0 0
        %2199 = vmatpush1.bf16.msra.mxu0 %v2175
        %2200 = vmatprep.subr.bf16.mxu0 0
        %2201 = vmatpush1.bf16.msra.mxu0 %v2177
        %2202 = vmatprep.subr.bf16.mxu0 0
        %2203 = vmatpush1.bf16.msra.mxu0 %v2179
        %2204 = vmatprep.subr.bf16.mxu0 0
        %2205 = vmatpush1.bf16.msra.mxu0 %v2181
        %2206 = vmatprep.subr.bf16.mxu0 0
        %2207 = vmatpush1.bf16.msra.mxu0 0
        %2208 = vmatprep.subr.bf16.mxu0 0
        %2209 = vmatpush1.bf16.msra.mxu0 0
        %2210 = vmatprep.subr.bf16.mxu0 0
        %2211 = vmatpush1.bf16.msra.mxu0 0
        %2212 = vmatprep.subr.bf16.mxu0 0
        %2213 = vmatpush1.bf16.msra.mxu0 0
        %2214 = vmatprep.subr.bf16.mxu0 0
        %2215 = vmatpush1.bf16.msra.mxu0 0
        %2216 = vmatprep.subr.bf16.mxu0 0
        %2217 = vmatpush1.bf16.msra.mxu0 0
        %2218 = vmatprep.subr.bf16.mxu0 0
        %2219 = vmatpush1.bf16.msra.mxu0 0
        %2220 = vmatprep.subr.bf16.mxu0 0
        %2221 = vmatpush1.bf16.msra.mxu0 0
        %2222 = vmatprep.mubr.bf16.mxu0 0
        %2223 = vmatmul.mubr.bf16.gmra.mrb[0].mxu0 %v2150
        %v2224 = vpop.f32.mrb[0].mxu0
        %v2225 = vadd.f32 0.0, %v2224
        %v2226 = vpop.f32.mrb[0].mxu0
        %v2227 = vpop.f32.mrb[0].mxu0
        %v2228 = vadd.f32 0.0, %v2227
        %v2229 = vpop.f32.mrb[0].mxu0
        %2230 = vmatprep.mubr.bf16.mxu0 0
        %2231 = vmatmul.mubr.bf16.gmra.mrb[0].mxu0 %v2151
        %v2232 = vpop.f32.mrb[0].mxu0
        %v2233 = vadd.f32 0.0, %v2232
        %v2234 = vpop.f32.mrb[0].mxu0
        %v2235 = vpop.f32.mrb[0].mxu0
        %v2236 = vadd.f32 0.0, %v2235
        %v2237 = vpop.f32.mrb[0].mxu0
        %2238 = vmatprep.mubr.bf16.mxu0 0
        %2239 = vmatmul.mubr.bf16.gmra.mrb[0].mxu0 %v2152
        %v2240 = vpop.f32.mrb[0].mxu0
        %v2241 = vadd.f32 0.0, %v2240
        %v2242 = vpop.f32.mrb[0].mxu0
        %v2243 = vpop.f32.mrb[0].mxu0
        %v2244 = vadd.f32 0.0, %v2243
        %v2245 = vpop.f32.mrb[0].mxu0
        %2246 = vmatprep.mubr.bf16.mxu0 0
        %2247 = vmatmul.mubr.bf16.gmra.mrb[0].mxu0 %v2153
        %v2248 = vpop.f32.mrb[0].mxu0
        %v2249 = vadd.f32 0.0, %v2248
        %v2250 = vpop.f32.mrb[0].mxu0
        %v2251 = vpop.f32.mrb[0].mxu0
        %v2252 = vadd.f32 0.0, %v2251
        %v2253 = vpop.f32.mrb[0].mxu0
        %2254 = vmatprep.mubr.bf16.mxu0 0
        %2255 = vmatmul.mubr.bf16.gmra.mrb[0].mxu0 %v2154
        %v2256 = vpop.f32.mrb[0].mxu0
        %v2257 = vadd.f32 0.0, %v2256
        %v2258 = vpop.f32.mrb[0].mxu0
        %v2259 = vpop.f32.mrb[0].mxu0
        %v2260 = vadd.f32 0.0, %v2259
        %v2261 = vpop.f32.mrb[0].mxu0
        %2262 = vmatprep.mubr.bf16.mxu0 0
        %2263 = vmatmul.mubr.bf16.gmra.mrb[0].mxu0 %v2155
        %v2264 = vpop.f32.mrb[0].mxu0
        %v2265 = vadd.f32 0.0, %v2264
        %v2266 = vpop.f32.mrb[0].mxu0
        %v2267 = vpop.f32.mrb[0].mxu0
        %v2268 = vadd.f32 0.0, %v2267
        %v2269 = vpop.f32.mrb[0].mxu0
        %2270 = vmatprep.mubr.bf16.mxu0 0
        %2271 = vmatmul.mubr.bf16.gmra.mrb[0].mxu0 %v2156
        %v2272 = vpop.f32.mrb[0].mxu0
        %v2273 = vadd.f32 0.0, %v2272
        %v2274 = vpop.f32.mrb[0].mxu0
        %v2275 = vpop.f32.mrb[0].mxu0
        %v2276 = vadd.f32 0.0, %v2275
        %v2277 = vpop.f32.mrb[0].mxu0
        %2278 = vmatprep.mubr.bf16.mxu0 0
        %2279 = vmatmul.mubr.bf16.gmra.mrb[0].mxu0 %v2157
        %v2280 = vpop.f32.mrb[0].mxu0
        %v2281 = vadd.f32 0.0, %v2280
        %v2282 = vpop.f32.mrb[0].mxu0
        %v2283 = vpop.f32.mrb[0].mxu0
        %v2284 = vadd.f32 0.0, %v2283
        %v2285 = vpop.f32.mrb[0].mxu0
        %2286 = vdwg.mxu0
        %v2287 = vrcp.pop %v2119
        %v2288 = vrcp.pop %v2121
        %v2289 = vrcp.pop %v2123
        %v2290 = vrcp.pop %v2125
        %v2291 = vrcp.pop %v2127
        %v2292 = vrcp.pop %v2129
        %v2293 = vrcp.pop %v2131
        %v2294 = vrcp.pop %v2133
        %v2295 = vrcp.pop %v2135
        %v2296 = vrcp.pop %v2137
        %v2297 = vrcp.pop %v2139
        %v2298 = vrcp.pop %v2141
        %v2299 = vrcp.pop %v2143
        %v2300 = vrcp.pop %v2145
        %v2301 = vrcp.pop %v2147
        %v2302 = vrcp.pop %v2149
        %v2303 = vmul.f32 %v2225, %v2287
        %v2304 = vmul.f32 %v2228, %v2288
        %v2305 = vmul.f32 %v2233, %v2289
        %v2306 = vmul.f32 %v2236, %v2290
        %v2307 = vmul.f32 %v2241, %v2291
        %v2308 = vmul.f32 %v2244, %v2292
        %v2309 = vmul.f32 %v2249, %v2293
        %v2310 = vmul.f32 %v2252, %v2294
        %v2311 = vmul.f32 %v2257, %v2295
        %v2312 = vmul.f32 %v2260, %v2296
        %v2313 = vmul.f32 %v2265, %v2297
        %v2314 = vmul.f32 %v2268, %v2298
        %v2315 = vmul.f32 %v2273, %v2299
        %v2316 = vmul.f32 %v2276, %v2300
        %v2317 = vmul.f32 %v2281, %v2301
        %v2318 = vmul.f32 %v2284, %v2302
        %v2319 = vpack.c.bf16 %v2304, %v2303
        %v2320 = vpack.c.bf16 %v2306, %v2305
        %v2321 = vpack.c.bf16 %v2308, %v2307
        %v2322 = vpack.c.bf16 %v2310, %v2309
        %v2323 = vpack.c.bf16 %v2312, %v2311
        %v2324 = vpack.c.bf16 %v2314, %v2313
        %v2325 = vpack.c.bf16 %v2316, %v2315
        %v2326 = vpack.c.bf16 %v2318, %v2317
        %2335 = vrot.lane.b32.xlu0 %v2319, 64
        %v2336 = vpop.permute.xlu0 %2335
        %2337 = vrot.lane.b32.xlu0 %v2320, 64
        %v2338 = vpop.permute.xlu0 %2337
        %2339 = vrot.lane.b32.xlu0 %v2321, 64
        %v2340 = vpop.permute.xlu0 %2339
        %2341 = vrot.lane.b32.xlu0 %v2322, 64
        %v2342 = vpop.permute.xlu0 %2341
        %2343 = vrot.lane.b32.xlu0 %v2323, 64
        %v2344 = vpop.permute.xlu0 %2343
        %2345 = vrot.lane.b32.xlu0 %v2324, 64
        %v2346 = vpop.permute.xlu0 %2345
        %2347 = vrot.lane.b32.xlu0 %v2325, 64
        %v2348 = vpop.permute.xlu0 %2347
        %2349 = vrot.lane.b32.xlu0 %v2326, 64
        %v2350 = vpop.permute.xlu0 %2349
        %vm2359 = vcmask 1048064
        %2360 = vst.msk [vmem:[#allocation2] sm:$0xff] %vm2359, %v2336
        %2361 = vst.msk [vmem:[#allocation2 + $0x10] sm:$0xff] %vm2359, %v2338
        %2362 = vst.msk [vmem:[#allocation2 + $0x20] sm:$0xff] %vm2359, %v2340
        %2363 = vst.msk [vmem:[#allocation2 + $0x30] sm:$0xff] %vm2359, %v2342
        %2364 = vst.msk [vmem:[#allocation2 + $0x40] sm:$0xff] %vm2359, %v2344
        %2365 = vst.msk [vmem:[#allocation2 + $0x50] sm:$0xff] %vm2359, %v2346
        %2366 = vst.msk [vmem:[#allocation2 + $0x60] sm:$0xff] %vm2359, %v2348
        %2367 = vst.msk [vmem:[#allocation2 + $0x70] sm:$0xff] %vm2359, %v2350
        %v2369 = vsel %vm1434, %v777, 0
        %v2372 = vsel %vm1434, %v779, 0
        %v2375 = vsel %vm1434, %v781, 0
        %v2378 = vsel %vm1434, %v783, 0
        %v2381 = vsel %vm1434, %v785, 0
        %v2384 = vsel %vm1434, %v787, 0
        %v2387 = vsel %vm1434, %v789, 0
        %v2390 = vsel %vm1434, %v791, 0
        %v2393 = vsel %vm1434, %v1403, 0
        %v2396 = vsel %vm1434, %v1405, 0
        %v2399 = vsel %vm1434, %v1407, 0
        %v2402 = vsel %vm1434, %v1409, 0
        %v2405 = vsel %vm1434, %v1411, 0
        %v2408 = vsel %vm1434, %v1413, 0
        %v2411 = vsel %vm1434, %v1415, 0
        %v2414 = vsel %vm1434, %v1417, 0
        %2416 = vmatprep.subr.bf16.mxu0 0
        %2417 = vmatpush1.bf16.xpose.msra.mxu0 %v2393
        %2418 = vmatprep.subr.bf16.mxu0 0
        %2419 = vmatpush1.bf16.xpose.msra.mxu0 %v2396
        %2420 = vmatprep.subr.bf16.mxu0 0
        %2421 = vmatpush1.bf16.xpose.msra.mxu0 %v2399
        %2422 = vmatprep.subr.bf16.mxu0 0
        %2423 = vmatpush1.bf16.xpose.msra.mxu0 %v2402
        %2424 = vmatprep.subr.bf16.mxu0 0
        %2425 = vmatpush1.bf16.xpose.msra.mxu0 %v2405
        %2426 = vmatprep.subr.bf16.mxu0 0
        %2427 = vmatpush1.bf16.xpose.msra.mxu0 %v2408
        %2428 = vmatprep.subr.bf16.mxu0 0
        %2429 = vmatpush1.bf16.xpose.msra.mxu0 %v2411
        %2430 = vmatprep.subr.bf16.mxu0 0
        %2431 = vmatpush1.bf16.xpose.msra.mxu0 %v2414
        %2432 = vmatprep.subr.bf16.mxu0 0
        %2433 = vmatpush1.bf16.xpose.msra.mxu0 0
        %2434 = vmatprep.subr.bf16.mxu0 0
        %2435 = vmatpush1.bf16.xpose.msra.mxu0 0
        %2436 = vmatprep.subr.bf16.mxu0 0
        %2437 = vmatpush1.bf16.xpose.msra.mxu0 0
        %2438 = vmatprep.subr.bf16.mxu0 0
        %2439 = vmatpush1.bf16.xpose.msra.mxu0 0
        %2440 = vmatprep.subr.bf16.mxu0 0
        %2441 = vmatpush1.bf16.xpose.msra.mxu0 0
        %2442 = vmatprep.subr.bf16.mxu0 0
        %2443 = vmatpush1.bf16.xpose.msra.mxu0 0
        %2444 = vmatprep.subr.bf16.mxu0 0
        %2445 = vmatpush1.bf16.xpose.msra.mxu0 0
        %2446 = vmatprep.subr.bf16.mxu0 0
        %2447 = vmatpush1.bf16.xpose.msra.mxu0 0
        %2448 = vmatprep.mubr.bf16.mxu0 0
        %2449 = vmatmul.mubr.bf16.gmra.mrb[0].mxu0 %v2369
        %v2450 = vpop.f32.mrb[0].mxu0
        %v2451 = vadd.f32 0.0, %v2450
        %v2452 = vpop.f32.mrb[0].mxu0
        %v2453 = vpop.f32.mrb[0].mxu0
        %v2454 = vadd.f32 0.0, %v2453
        %v2455 = vpop.f32.mrb[0].mxu0
        %2456 = vmatprep.mubr.bf16.mxu0 0
        %2457 = vmatmul.mubr.bf16.gmra.mrb[0].mxu0 %v2372
        %v2458 = vpop.f32.mrb[0].mxu0
        %v2459 = vadd.f32 0.0, %v2458
        %v2460 = vpop.f32.mrb[0].mxu0
        %v2461 = vpop.f32.mrb[0].mxu0
        %v2462 = vadd.f32 0.0, %v2461
        %v2463 = vpop.f32.mrb[0].mxu0
        %2464 = vmatprep.mubr.bf16.mxu0 0
        %2465 = vmatmul.mubr.bf16.gmra.mrb[0].mxu0 %v2375
        %v2466 = vpop.f32.mrb[0].mxu0
        %v2467 = vadd.f32 0.0, %v2466
        %v2468 = vpop.f32.mrb[0].mxu0
        %v2469 = vpop.f32.mrb[0].mxu0
        %v2470 = vadd.f32 0.0, %v2469
        %v2471 = vpop.f32.mrb[0].mxu0
        %2472 = vmatprep.mubr.bf16.mxu0 0
        %2473 = vmatmul.mubr.bf16.gmra.mrb[0].mxu0 %v2378
        %v2474 = vpop.f32.mrb[0].mxu0
        %v2475 = vadd.f32 0.0, %v2474
        %v2476 = vpop.f32.mrb[0].mxu0
        %v2477 = vpop.f32.mrb[0].mxu0
        %v2478 = vadd.f32 0.0, %v2477
        %v2479 = vpop.f32.mrb[0].mxu0
        %2480 = vmatprep.mubr.bf16.mxu0 0
        %2481 = vmatmul.mubr.bf16.gmra.mrb[0].mxu0 %v2381
        %v2482 = vpop.f32.mrb[0].mxu0
        %v2483 = vadd.f32 0.0, %v2482
        %v2484 = vpop.f32.mrb[0].mxu0
        %v2485 = vpop.f32.mrb[0].mxu0
        %v2486 = vadd.f32 0.0, %v2485
        %v2487 = vpop.f32.mrb[0].mxu0
        %2488 = vmatprep.mubr.bf16.mxu0 0
        %2489 = vmatmul.mubr.bf16.gmra.mrb[0].mxu0 %v2384
        %v2490 = vpop.f32.mrb[0].mxu0
        %v2491 = vadd.f32 0.0, %v2490
        %v2492 = vpop.f32.mrb[0].mxu0
        %v2493 = vpop.f32.mrb[0].mxu0
        %v2494 = vadd.f32 0.0, %v2493
        %v2495 = vpop.f32.mrb[0].mxu0
        %2496 = vmatprep.mubr.bf16.mxu0 0
        %2497 = vmatmul.mubr.bf16.gmra.mrb[0].mxu0 %v2387
        %v2498 = vpop.f32.mrb[0].mxu0
        %v2499 = vadd.f32 0.0, %v2498
        %v2500 = vpop.f32.mrb[0].mxu0
        %v2501 = vpop.f32.mrb[0].mxu0
        %v2502 = vadd.f32 0.0, %v2501
        %v2503 = vpop.f32.mrb[0].mxu0
        %2504 = vmatprep.mubr.bf16.mxu0 0
        %2505 = vmatmul.mubr.bf16.gmra.mrb[0].mxu0 %v2390
        %v2506 = vpop.f32.mrb[0].mxu0
        %v2507 = vadd.f32 0.0, %v2506
        %v2508 = vpop.f32.mrb[0].mxu0
        %v2509 = vpop.f32.mrb[0].mxu0
        %v2510 = vadd.f32 0.0, %v2509
        %v2511 = vpop.f32.mrb[0].mxu0
        %2512 = vdwg.mxu0
        %2513 = vmax.xlane.f32.xlu0 %v2451
        %v2514 = vpop.xlane.xlu0 %2513
        %2515 = vmax.xlane.f32.xlu0 %v2454
        %v2516 = vpop.xlane.xlu0 %2515
        %2517 = vmax.xlane.f32.xlu0 %v2459
        %v2518 = vpop.xlane.xlu0 %2517
        %2519 = vmax.xlane.f32.xlu0 %v2462
        %v2520 = vpop.xlane.xlu0 %2519
        %2521 = vmax.xlane.f32.xlu0 %v2467
        %v2522 = vpop.xlane.xlu0 %2521
        %2523 = vmax.xlane.f32.xlu0 %v2470
        %v2524 = vpop.xlane.xlu0 %2523
        %2525 = vmax.xlane.f32.xlu0 %v2475
        %v2526 = vpop.xlane.xlu0 %2525
        %2527 = vmax.xlane.f32.xlu0 %v2478
        %v2528 = vpop.xlane.xlu0 %2527
        %2529 = vmax.xlane.f32.xlu0 %v2483
        %v2530 = vpop.xlane.xlu0 %2529
        %2531 = vmax.xlane.f32.xlu0 %v2486
        %v2532 = vpop.xlane.xlu0 %2531
        %2533 = vmax.xlane.f32.xlu0 %v2491
        %v2534 = vpop.xlane.xlu0 %2533
        %2535 = vmax.xlane.f32.xlu0 %v2494
        %v2536 = vpop.xlane.xlu0 %2535
        %2537 = vmax.xlane.f32.xlu0 %v2499
        %v2538 = vpop.xlane.xlu0 %2537
        %2539 = vmax.xlane.f32.xlu0 %v2502
        %v2540 = vpop.xlane.xlu0 %2539
        %2541 = vmax.xlane.f32.xlu0 %v2507
        %v2542 = vpop.xlane.xlu0 %2541
        %2543 = vmax.xlane.f32.xlu0 %v2510
        %v2544 = vpop.xlane.xlu0 %2543
        %v2545 = vsub.f32 %v2451, %v2514
        %v2546 = vsub.f32 %v2454, %v2516
        %v2547 = vsub.f32 %v2459, %v2518
        %v2548 = vsub.f32 %v2462, %v2520
        %v2549 = vsub.f32 %v2467, %v2522
        %v2550 = vsub.f32 %v2470, %v2524
        %v2551 = vsub.f32 %v2475, %v2526
        %v2552 = vsub.f32 %v2478, %v2528
        %v2553 = vsub.f32 %v2483, %v2530
        %v2554 = vsub.f32 %v2486, %v2532
        %v2555 = vsub.f32 %v2491, %v2534
        %v2556 = vsub.f32 %v2494, %v2536
        %v2557 = vsub.f32 %v2499, %v2538
        %v2558 = vsub.f32 %v2502, %v2540
        %v2559 = vsub.f32 %v2507, %v2542
        %v2560 = vsub.f32 %v2510, %v2544
        %v2561 = vmul.f32 %v2545, 1.442695
        %v2562 = vpow.pop %v2561
        %v2563 = vmul.f32 %v2546, 1.442695
        %v2564 = vpow.pop %v2563
        %v2565 = vmul.f32 %v2547, 1.442695
        %v2566 = vpow.pop %v2565
        %v2567 = vmul.f32 %v2548, 1.442695
        %v2568 = vpow.pop %v2567
        %v2569 = vmul.f32 %v2549, 1.442695
        %v2570 = vpow.pop %v2569
        %v2571 = vmul.f32 %v2550, 1.442695
        %v2572 = vpow.pop %v2571
        %v2573 = vmul.f32 %v2551, 1.442695
        %v2574 = vpow.pop %v2573
        %v2575 = vmul.f32 %v2552, 1.442695
        %v2576 = vpow.pop %v2575
        %v2577 = vmul.f32 %v2553, 1.442695
        %v2578 = vpow.pop %v2577
        %v2579 = vmul.f32 %v2554, 1.442695
        %v2580 = vpow.pop %v2579
        %v2581 = vmul.f32 %v2555, 1.442695
        %v2582 = vpow.pop %v2581
        %v2583 = vmul.f32 %v2556, 1.442695
        %v2584 = vpow.pop %v2583
        %v2585 = vmul.f32 %v2557, 1.442695
        %v2586 = vpow.pop %v2585
        %v2587 = vmul.f32 %v2558, 1.442695
        %v2588 = vpow.pop %v2587
        %v2589 = vmul.f32 %v2559, 1.442695
        %v2590 = vpow.pop %v2589
        %v2591 = vmul.f32 %v2560, 1.442695
        %v2592 = vpow.pop %v2591
        %2593 = vadd.xlane.f32.xlu0 %v2562
        %v2594 = vpop.xlane.xlu0 %2593
        %2595 = vadd.xlane.f32.xlu0 %v2564
        %v2596 = vpop.xlane.xlu0 %2595
        %2597 = vadd.xlane.f32.xlu0 %v2566
        %v2598 = vpop.xlane.xlu0 %2597
        %2599 = vadd.xlane.f32.xlu0 %v2568
        %v2600 = vpop.xlane.xlu0 %2599
        %2601 = vadd.xlane.f32.xlu0 %v2570
        %v2602 = vpop.xlane.xlu0 %2601
        %2603 = vadd.xlane.f32.xlu0 %v2572
        %v2604 = vpop.xlane.xlu0 %2603
        %2605 = vadd.xlane.f32.xlu0 %v2574
        %v2606 = vpop.xlane.xlu0 %2605
        %2607 = vadd.xlane.f32.xlu0 %v2576
        %v2608 = vpop.xlane.xlu0 %2607
        %2609 = vadd.xlane.f32.xlu0 %v2578
        %v2610 = vpop.xlane.xlu0 %2609
        %2611 = vadd.xlane.f32.xlu0 %v2580
        %v2612 = vpop.xlane.xlu0 %2611
        %2613 = vadd.xlane.f32.xlu0 %v2582
        %v2614 = vpop.xlane.xlu0 %2613
        %2615 = vadd.xlane.f32.xlu0 %v2584
        %v2616 = vpop.xlane.xlu0 %2615
        %2617 = vadd.xlane.f32.xlu0 %v2586
        %v2618 = vpop.xlane.xlu0 %2617
        %2619 = vadd.xlane.f32.xlu0 %v2588
        %v2620 = vpop.xlane.xlu0 %2619
        %2621 = vadd.xlane.f32.xlu0 %v2590
        %v2622 = vpop.xlane.xlu0 %2621
        %2623 = vadd.xlane.f32.xlu0 %v2592
        %v2624 = vpop.xlane.xlu0 %2623
        %v2625 = vpack.c.bf16 %v2564, %v2562
        %v2626 = vpack.c.bf16 %v2568, %v2566
        %v2627 = vpack.c.bf16 %v2572, %v2570
        %v2628 = vpack.c.bf16 %v2576, %v2574
        %v2629 = vpack.c.bf16 %v2580, %v2578
        %v2630 = vpack.c.bf16 %v2584, %v2582
        %v2631 = vpack.c.bf16 %v2588, %v2586
        %v2632 = vpack.c.bf16 %v2592, %v2590
        %2633 = vmatprep.subr.bf16.mxu0 0
        %2634 = vmatpush1.bf16.msra.mxu0 %v1419
        %2635 = vmatprep.subr.bf16.mxu0 0
        %2636 = vmatpush1.bf16.msra.mxu0 %v1421
        %2637 = vmatprep.subr.bf16.mxu0 0
        %2638 = vmatpush1.bf16.msra.mxu0 %v1423
        %2639 = vmatprep.subr.bf16.mxu0 0
        %2640 = vmatpush1.bf16.msra.mxu0 %v1425
        %2641 = vmatprep.subr.bf16.mxu0 0
        %2642 = vmatpush1.bf16.msra.mxu0 %v1427
        %2643 = vmatprep.subr.bf16.mxu0 0
        %2644 = vmatpush1.bf16.msra.mxu0 %v1429
        %2645 = vmatprep.subr.bf16.mxu0 0
        %2646 = vmatpush1.bf16.msra.mxu0 %v1431
        %2647 = vmatprep.subr.bf16.mxu0 0
        %2648 = vmatpush1.bf16.msra.mxu0 %v1433
        %2649 = vmatprep.subr.bf16.mxu0 0
        %2650 = vmatpush1.bf16.msra.mxu0 0
        %2651 = vmatprep.subr.bf16.mxu0 0
        %2652 = vmatpush1.bf16.msra.mxu0 0
        %2653 = vmatprep.subr.bf16.mxu0 0
        %2654 = vmatpush1.bf16.msra.mxu0 0
        %2655 = vmatprep.subr.bf16.mxu0 0
        %2656 = vmatpush1.bf16.msra.mxu0 0
        %2657 = vmatprep.subr.bf16.mxu0 0
        %2658 = vmatpush1.bf16.msra.mxu0 0
        %2659 = vmatprep.subr.bf16.mxu0 0
        %2660 = vmatpush1.bf16.msra.mxu0 0
        %2661 = vmatprep.subr.bf16.mxu0 0
        %2662 = vmatpush1.bf16.msra.mxu0 0
        %2663 = vmatprep.subr.bf16.mxu0 0
        %2664 = vmatpush1.bf16.msra.mxu0 0
        %2665 = vmatprep.mubr.bf16.mxu0 0
        %2666 = vmatmul.mubr.bf16.gmra.mrb[0].mxu0 %v2625
        %v2667 = vpop.f32.mrb[0].mxu0
        %v2668 = vadd.f32 0.0, %v2667
        %v2669 = vpop.f32.mrb[0].mxu0
        %v2670 = vpop.f32.mrb[0].mxu0
        %v2671 = vadd.f32 0.0, %v2670
        %v2672 = vpop.f32.mrb[0].mxu0
        %2673 = vmatprep.mubr.bf16.mxu0 0
        %2674 = vmatmul.mubr.bf16.gmra.mrb[0].mxu0 %v2626
        %v2675 = vpop.f32.mrb[0].mxu0
        %v2676 = vadd.f32 0.0, %v2675
        %v2677 = vpop.f32.mrb[0].mxu0
        %v2678 = vpop.f32.mrb[0].mxu0
        %v2679 = vadd.f32 0.0, %v2678
        %v2680 = vpop.f32.mrb[0].mxu0
        %2681 = vmatprep.mubr.bf16.mxu0 0
        %2682 = vmatmul.mubr.bf16.gmra.mrb[0].mxu0 %v2627
        %v2683 = vpop.f32.mrb[0].mxu0
        %v2684 = vadd.f32 0.0, %v2683
        %v2685 = vpop.f32.mrb[0].mxu0
        %v2686 = vpop.f32.mrb[0].mxu0
        %v2687 = vadd.f32 0.0, %v2686
        %v2688 = vpop.f32.mrb[0].mxu0
        %2689 = vmatprep.mubr.bf16.mxu0 0
        %2690 = vmatmul.mubr.bf16.gmra.mrb[0].mxu0 %v2628
        %v2691 = vpop.f32.mrb[0].mxu0
        %v2692 = vadd.f32 0.0, %v2691
        %v2693 = vpop.f32.mrb[0].mxu0
        %v2694 = vpop.f32.mrb[0].mxu0
        %v2695 = vadd.f32 0.0, %v2694
        %v2696 = vpop.f32.mrb[0].mxu0
        %2697 = vmatprep.mubr.bf16.mxu0 0
        %2698 = vmatmul.mubr.bf16.gmra.mrb[0].mxu0 %v2629
        %v2699 = vpop.f32.mrb[0].mxu0
        %v2700 = vadd.f32 0.0, %v2699
        %v2701 = vpop.f32.mrb[0].mxu0
        %v2702 = vpop.f32.mrb[0].mxu0
        %v2703 = vadd.f32 0.0, %v2702
        %v2704 = vpop.f32.mrb[0].mxu0
        %2705 = vmatprep.mubr.bf16.mxu0 0
        %2706 = vmatmul.mubr.bf16.gmra.mrb[0].mxu0 %v2630
        %v2707 = vpop.f32.mrb[0].mxu0
        %v2708 = vadd.f32 0.0, %v2707
        %v2709 = vpop.f32.mrb[0].mxu0
        %v2710 = vpop.f32.mrb[0].mxu0
        %v2711 = vadd.f32 0.0, %v2710
        %v2712 = vpop.f32.mrb[0].mxu0
        %2713 = vmatprep.mubr.bf16.mxu0 0
        %2714 = vmatmul.mubr.bf16.gmra.mrb[0].mxu0 %v2631
        %v2715 = vpop.f32.mrb[0].mxu0
        %v2716 = vadd.f32 0.0, %v2715
        %v2717 = vpop.f32.mrb[0].mxu0
        %v2718 = vpop.f32.mrb[0].mxu0
        %v2719 = vadd.f32 0.0, %v2718
        %v2720 = vpop.f32.mrb[0].mxu0
        %2721 = vmatprep.mubr.bf16.mxu0 0
        %2722 = vmatmul.mubr.bf16.gmra.mrb[0].mxu0 %v2632
        %v2723 = vpop.f32.mrb[0].mxu0
        %v2724 = vadd.f32 0.0, %v2723
        %v2725 = vpop.f32.mrb[0].mxu0
        %v2726 = vpop.f32.mrb[0].mxu0
        %v2727 = vadd.f32 0.0, %v2726
        %v2728 = vpop.f32.mrb[0].mxu0
        %2729 = vdwg.mxu0
        %v2730 = vrcp.pop %v2594
        %v2731 = vrcp.pop %v2596
        %v2732 = vrcp.pop %v2598
        %v2733 = vrcp.pop %v2600
        %v2734 = vrcp.pop %v2602
        %v2735 = vrcp.pop %v2604
        %v2736 = vrcp.pop %v2606
        %v2737 = vrcp.pop %v2608
        %v2738 = vrcp.pop %v2610
        %v2739 = vrcp.pop %v2612
        %v2740 = vrcp.pop %v2614
        %v2741 = vrcp.pop %v2616
        %v2742 = vrcp.pop %v2618
        %v2743 = vrcp.pop %v2620
        %v2744 = vrcp.pop %v2622
        %v2745 = vrcp.pop %v2624
        %v2746 = vmul.f32 %v2668, %v2730
        %v2747 = vmul.f32 %v2671, %v2731
        %v2748 = vmul.f32 %v2676, %v2732
        %v2749 = vmul.f32 %v2679, %v2733
        %v2750 = vmul.f32 %v2684, %v2734
        %v2751 = vmul.f32 %v2687, %v2735
        %v2752 = vmul.f32 %v2692, %v2736
        %v2753 = vmul.f32 %v2695, %v2737
        %v2754 = vmul.f32 %v2700, %v2738
        %v2755 = vmul.f32 %v2703, %v2739
        %v2756 = vmul.f32 %v2708, %v2740
        %v2757 = vmul.f32 %v2711, %v2741
        %v2758 = vmul.f32 %v2716, %v2742
        %v2759 = vmul.f32 %v2719, %v2743
        %v2760 = vmul.f32 %v2724, %v2744
        %v2761 = vmul.f32 %v2727, %v2745
        %v2762 = vpack.c.bf16 %v2747, %v2746
        %v2763 = vpack.c.bf16 %v2749, %v2748
        %v2764 = vpack.c.bf16 %v2751, %v2750
        %v2765 = vpack.c.bf16 %v2753, %v2752
        %v2766 = vpack.c.bf16 %v2755, %v2754
        %v2767 = vpack.c.bf16 %v2757, %v2756
        %v2768 = vpack.c.bf16 %v2759, %v2758
        %v2769 = vpack.c.bf16 %v2761, %v2760
        %2770 = vst.msk [vmem:[#allocation2 + $0x8] sm:$0xff] %vm1434, %v2762
        %2771 = vst.msk [vmem:[#allocation2 + $0x18] sm:$0xff] %vm1434, %v2763
        %2772 = vst.msk [vmem:[#allocation2 + $0x28] sm:$0xff] %vm1434, %v2764
        %2773 = vst.msk [vmem:[#allocation2 + $0x38] sm:$0xff] %vm1434, %v2765
        %2774 = vst.msk [vmem:[#allocation2 + $0x48] sm:$0xff] %vm1434, %v2766
        %2775 = vst.msk [vmem:[#allocation2 + $0x58] sm:$0xff] %vm1434, %v2767
        %2776 = vst.msk [vmem:[#allocation2 + $0x68] sm:$0xff] %vm1434, %v2768
        %2777 = vst.msk [vmem:[#allocation2 + $0x78] sm:$0xff] %vm1434, %v2769
        %2786 = vrot.lane.b32.xlu0 %v777, 64
        %v2787 = vpop.permute.xlu0 %2786
        %2788 = vrot.lane.b32.xlu0 %v779, 64
        %v2789 = vpop.permute.xlu0 %2788
        %2790 = vrot.lane.b32.xlu0 %v781, 64
        %v2791 = vpop.permute.xlu0 %2790
        %2792 = vrot.lane.b32.xlu0 %v783, 64
        %v2793 = vpop.permute.xlu0 %2792
        %2794 = vrot.lane.b32.xlu0 %v785, 64
        %v2795 = vpop.permute.xlu0 %2794
        %2796 = vrot.lane.b32.xlu0 %v787, 64
        %v2797 = vpop.permute.xlu0 %2796
        %2798 = vrot.lane.b32.xlu0 %v789, 64
        %v2799 = vpop.permute.xlu0 %2798
        %2800 = vrot.lane.b32.xlu0 %v791, 64
        %v2801 = vpop.permute.xlu0 %2800
        %2810 = vrot.lane.b32.xlu0 %v1403, 64
        %v2811 = vpop.permute.xlu0 %2810
        %2812 = vrot.lane.b32.xlu0 %v1405, 64
        %v2813 = vpop.permute.xlu0 %2812
        %2814 = vrot.lane.b32.xlu0 %v1407, 64
        %v2815 = vpop.permute.xlu0 %2814
        %2816 = vrot.lane.b32.xlu0 %v1409, 64
        %v2817 = vpop.permute.xlu0 %2816
        %2818 = vrot.lane.b32.xlu0 %v1411, 64
        %v2819 = vpop.permute.xlu0 %2818
        %2820 = vrot.lane.b32.xlu0 %v1413, 64
        %v2821 = vpop.permute.xlu0 %2820
        %2822 = vrot.lane.b32.xlu0 %v1415, 64
        %v2823 = vpop.permute.xlu0 %2822
        %2824 = vrot.lane.b32.xlu0 %v1417, 64
        %v2825 = vpop.permute.xlu0 %2824
        %v2827 = vsel %vm1434, %v2787, 0
        %v2830 = vsel %vm1434, %v2789, 0
        %v2833 = vsel %vm1434, %v2791, 0
        %v2836 = vsel %vm1434, %v2793, 0
        %v2839 = vsel %vm1434, %v2795, 0
        %v2842 = vsel %vm1434, %v2797, 0
        %v2845 = vsel %vm1434, %v2799, 0
        %v2848 = vsel %vm1434, %v2801, 0
        %v2851 = vsel %vm1434, %v2811, 0
        %v2854 = vsel %vm1434, %v2813, 0
        %v2857 = vsel %vm1434, %v2815, 0
        %v2860 = vsel %vm1434, %v2817, 0
        %v2863 = vsel %vm1434, %v2819, 0
        %v2866 = vsel %vm1434, %v2821, 0
        %v2869 = vsel %vm1434, %v2823, 0
        %v2872 = vsel %vm1434, %v2825, 0
        %2874 = vmatprep.subr.bf16.mxu0 0
        %2875 = vmatpush1.bf16.xpose.msra.mxu0 %v2851
        %2876 = vmatprep.subr.bf16.mxu0 0
        %2877 = vmatpush1.bf16.xpose.msra.mxu0 %v2854
        %2878 = vmatprep.subr.bf16.mxu0 0
        %2879 = vmatpush1.bf16.xpose.msra.mxu0 %v2857
        %2880 = vmatprep.subr.bf16.mxu0 0
        %2881 = vmatpush1.bf16.xpose.msra.mxu0 %v2860
        %2882 = vmatprep.subr.bf16.mxu0 0
        %2883 = vmatpush1.bf16.xpose.msra.mxu0 %v2863
        %2884 = vmatprep.subr.bf16.mxu0 0
        %2885 = vmatpush1.bf16.xpose.msra.mxu0 %v2866
        %2886 = vmatprep.subr.bf16.mxu0 0
        %2887 = vmatpush1.bf16.xpose.msra.mxu0 %v2869
        %2888 = vmatprep.subr.bf16.mxu0 0
        %2889 = vmatpush1.bf16.xpose.msra.mxu0 %v2872
        %2890 = vmatprep.subr.bf16.mxu0 0
        %2891 = vmatpush1.bf16.xpose.msra.mxu0 0
        %2892 = vmatprep.subr.bf16.mxu0 0
        %2893 = vmatpush1.bf16.xpose.msra.mxu0 0
        %2894 = vmatprep.subr.bf16.mxu0 0
        %2895 = vmatpush1.bf16.xpose.msra.mxu0 0
        %2896 = vmatprep.subr.bf16.mxu0 0
        %2897 = vmatpush1.bf16.xpose.msra.mxu0 0
        %2898 = vmatprep.subr.bf16.mxu0 0
        %2899 = vmatpush1.bf16.xpose.msra.mxu0 0
        %2900 = vmatprep.subr.bf16.mxu0 0
        %2901 = vmatpush1.bf16.xpose.msra.mxu0 0
        %2902 = vmatprep.subr.bf16.mxu0 0
        %2903 = vmatpush1.bf16.xpose.msra.mxu0 0
        %2904 = vmatprep.subr.bf16.mxu0 0
        %2905 = vmatpush1.bf16.xpose.msra.mxu0 0
        %2906 = vmatprep.mubr.bf16.mxu0 0
        %2907 = vmatmul.mubr.bf16.gmra.mrb[0].mxu0 %v2827
        %v2908 = vpop.f32.mrb[0].mxu0
        %v2909 = vadd.f32 0.0, %v2908
        %v2910 = vpop.f32.mrb[0].mxu0
        %v2911 = vpop.f32.mrb[0].mxu0
        %v2912 = vadd.f32 0.0, %v2911
        %v2913 = vpop.f32.mrb[0].mxu0
        %2914 = vmatprep.mubr.bf16.mxu0 0
        %2915 = vmatmul.mubr.bf16.gmra.mrb[0].mxu0 %v2830
        %v2916 = vpop.f32.mrb[0].mxu0
        %v2917 = vadd.f32 0.0, %v2916
        %v2918 = vpop.f32.mrb[0].mxu0
        %v2919 = vpop.f32.mrb[0].mxu0
        %v2920 = vadd.f32 0.0, %v2919
        %v2921 = vpop.f32.mrb[0].mxu0
        %2922 = vmatprep.mubr.bf16.mxu0 0
        %2923 = vmatmul.mubr.bf16.gmra.mrb[0].mxu0 %v2833
        %v2924 = vpop.f32.mrb[0].mxu0
        %v2925 = vadd.f32 0.0, %v2924
        %v2926 = vpop.f32.mrb[0].mxu0
        %v2927 = vpop.f32.mrb[0].mxu0
        %v2928 = vadd.f32 0.0, %v2927
        %v2929 = vpop.f32.mrb[0].mxu0
        %2930 = vmatprep.mubr.bf16.mxu0 0
        %2931 = vmatmul.mubr.bf16.gmra.mrb[0].mxu0 %v2836
        %v2932 = vpop.f32.mrb[0].mxu0
        %v2933 = vadd.f32 0.0, %v2932
        %v2934 = vpop.f32.mrb[0].mxu0
        %v2935 = vpop.f32.mrb[0].mxu0
        %v2936 = vadd.f32 0.0, %v2935
        %v2937 = vpop.f32.mrb[0].mxu0
        %2938 = vmatprep.mubr.bf16.mxu0 0
        %2939 = vmatmul.mubr.bf16.gmra.mrb[0].mxu0 %v2839
        %v2940 = vpop.f32.mrb[0].mxu0
        %v2941 = vadd.f32 0.0, %v2940
        %v2942 = vpop.f32.mrb[0].mxu0
        %v2943 = vpop.f32.mrb[0].mxu0
        %v2944 = vadd.f32 0.0, %v2943
        %v2945 = vpop.f32.mrb[0].mxu0
        %2946 = vmatprep.mubr.bf16.mxu0 0
        %2947 = vmatmul.mubr.bf16.gmra.mrb[0].mxu0 %v2842
        %v2948 = vpop.f32.mrb[0].mxu0
        %v2949 = vadd.f32 0.0, %v2948
        %v2950 = vpop.f32.mrb[0].mxu0
        %v2951 = vpop.f32.mrb[0].mxu0
        %v2952 = vadd.f32 0.0, %v2951
        %v2953 = vpop.f32.mrb[0].mxu0
        %2954 = vmatprep.mubr.bf16.mxu0 0
        %2955 = vmatmul.mubr.bf16.gmra.mrb[0].mxu0 %v2845
        %v2956 = vpop.f32.mrb[0].mxu0
        %v2957 = vadd.f32 0.0, %v2956
        %v2958 = vpop.f32.mrb[0].mxu0
        %v2959 = vpop.f32.mrb[0].mxu0
        %v2960 = vadd.f32 0.0, %v2959
        %v2961 = vpop.f32.mrb[0].mxu0
        %2962 = vmatprep.mubr.bf16.mxu0 0
        %2963 = vmatmul.mubr.bf16.gmra.mrb[0].mxu0 %v2848
        %v2964 = vpop.f32.mrb[0].mxu0
        %v2965 = vadd.f32 0.0, %v2964
        %v2966 = vpop.f32.mrb[0].mxu0
        %v2967 = vpop.f32.mrb[0].mxu0
        %v2968 = vadd.f32 0.0, %v2967
        %v2969 = vpop.f32.mrb[0].mxu0
        %2970 = vdwg.mxu0
        %2971 = vmax.xlane.f32.xlu0 %v2909
        %v2972 = vpop.xlane.xlu0 %2971
        %2973 = vmax.xlane.f32.xlu0 %v2912
        %v2974 = vpop.xlane.xlu0 %2973
        %2975 = vmax.xlane.f32.xlu0 %v2917
        %v2976 = vpop.xlane.xlu0 %2975
        %2977 = vmax.xlane.f32.xlu0 %v2920
        %v2978 = vpop.xlane.xlu0 %2977
        %2979 = vmax.xlane.f32.xlu0 %v2925
        %v2980 = vpop.xlane.xlu0 %2979
        %2981 = vmax.xlane.f32.xlu0 %v2928
        %v2982 = vpop.xlane.xlu0 %2981
        %2983 = vmax.xlane.f32.xlu0 %v2933
        %v2984 = vpop.xlane.xlu0 %2983
        %2985 = vmax.xlane.f32.xlu0 %v2936
        %v2986 = vpop.xlane.xlu0 %2985
        %2987 = vmax.xlane.f32.xlu0 %v2941
        %v2988 = vpop.xlane.xlu0 %2987
        %2989 = vmax.xlane.f32.xlu0 %v2944
        %v2990 = vpop.xlane.xlu0 %2989
        %2991 = vmax.xlane.f32.xlu0 %v2949
        %v2992 = vpop.xlane.xlu0 %2991
        %2993 = vmax.xlane.f32.xlu0 %v2952
        %v2994 = vpop.xlane.xlu0 %2993
        %2995 = vmax.xlane.f32.xlu0 %v2957
        %v2996 = vpop.xlane.xlu0 %2995
        %2997 = vmax.xlane.f32.xlu0 %v2960
        %v2998 = vpop.xlane.xlu0 %2997
        %2999 = vmax.xlane.f32.xlu0 %v2965
        %v3000 = vpop.xlane.xlu0 %2999
        %3001 = vmax.xlane.f32.xlu0 %v2968
        %v3002 = vpop.xlane.xlu0 %3001
        %v3003 = vsub.f32 %v2909, %v2972
        %v3004 = vsub.f32 %v2912, %v2974
        %v3005 = vsub.f32 %v2917, %v2976
        %v3006 = vsub.f32 %v2920, %v2978
        %v3007 = vsub.f32 %v2925, %v2980
        %v3008 = vsub.f32 %v2928, %v2982
        %v3009 = vsub.f32 %v2933, %v2984
        %v3010 = vsub.f32 %v2936, %v2986
        %v3011 = vsub.f32 %v2941, %v2988
        %v3012 = vsub.f32 %v2944, %v2990
        %v3013 = vsub.f32 %v2949, %v2992
        %v3014 = vsub.f32 %v2952, %v2994
        %v3015 = vsub.f32 %v2957, %v2996
        %v3016 = vsub.f32 %v2960, %v2998
        %v3017 = vsub.f32 %v2965, %v3000
        %v3018 = vsub.f32 %v2968, %v3002
        %v3019 = vmul.f32 %v3003, 1.442695
        %v3020 = vpow.pop %v3019
        %v3021 = vmul.f32 %v3004, 1.442695
        %v3022 = vpow.pop %v3021
        %v3023 = vmul.f32 %v3005, 1.442695
        %v3024 = vpow.pop %v3023
        %v3025 = vmul.f32 %v3006, 1.442695
        %v3026 = vpow.pop %v3025
        %v3027 = vmul.f32 %v3007, 1.442695
        %v3028 = vpow.pop %v3027
        %v3029 = vmul.f32 %v3008, 1.442695
        %v3030 = vpow.pop %v3029
        %v3031 = vmul.f32 %v3009, 1.442695
        %v3032 = vpow.pop %v3031
        %v3033 = vmul.f32 %v3010, 1.442695
        %v3034 = vpow.pop %v3033
        %v3035 = vmul.f32 %v3011, 1.442695
        %v3036 = vpow.pop %v3035
        %v3037 = vmul.f32 %v3012, 1.442695
        %v3038 = vpow.pop %v3037
        %v3039 = vmul.f32 %v3013, 1.442695
        %v3040 = vpow.pop %v3039
        %v3041 = vmul.f32 %v3014, 1.442695
        %v3042 = vpow.pop %v3041
        %v3043 = vmul.f32 %v3015, 1.442695
        %v3044 = vpow.pop %v3043
        %v3045 = vmul.f32 %v3016, 1.442695
        %v3046 = vpow.pop %v3045
        %v3047 = vmul.f32 %v3017, 1.442695
        %v3048 = vpow.pop %v3047
        %v3049 = vmul.f32 %v3018, 1.442695
        %v3050 = vpow.pop %v3049
        %3051 = vadd.xlane.f32.xlu0 %v3020
        %v3052 = vpop.xlane.xlu0 %3051
        %3053 = vadd.xlane.f32.xlu0 %v3022
        %v3054 = vpop.xlane.xlu0 %3053
        %3055 = vadd.xlane.f32.xlu0 %v3024
        %v3056 = vpop.xlane.xlu0 %3055
        %3057 = vadd.xlane.f32.xlu0 %v3026
        %v3058 = vpop.xlane.xlu0 %3057
        %3059 = vadd.xlane.f32.xlu0 %v3028
        %v3060 = vpop.xlane.xlu0 %3059
        %3061 = vadd.xlane.f32.xlu0 %v3030
        %v3062 = vpop.xlane.xlu0 %3061
        %3063 = vadd.xlane.f32.xlu0 %v3032
        %v3064 = vpop.xlane.xlu0 %3063
        %3065 = vadd.xlane.f32.xlu0 %v3034
        %v3066 = vpop.xlane.xlu0 %3065
        %3067 = vadd.xlane.f32.xlu0 %v3036
        %v3068 = vpop.xlane.xlu0 %3067
        %3069 = vadd.xlane.f32.xlu0 %v3038
        %v3070 = vpop.xlane.xlu0 %3069
        %3071 = vadd.xlane.f32.xlu0 %v3040
        %v3072 = vpop.xlane.xlu0 %3071
        %3073 = vadd.xlane.f32.xlu0 %v3042
        %v3074 = vpop.xlane.xlu0 %3073
        %3075 = vadd.xlane.f32.xlu0 %v3044
        %v3076 = vpop.xlane.xlu0 %3075
        %3077 = vadd.xlane.f32.xlu0 %v3046
        %v3078 = vpop.xlane.xlu0 %3077
        %3079 = vadd.xlane.f32.xlu0 %v3048
        %v3080 = vpop.xlane.xlu0 %3079
        %3081 = vadd.xlane.f32.xlu0 %v3050
        %v3082 = vpop.xlane.xlu0 %3081
        %v3083 = vpack.c.bf16 %v3022, %v3020
        %v3084 = vpack.c.bf16 %v3026, %v3024
        %v3085 = vpack.c.bf16 %v3030, %v3028
        %v3086 = vpack.c.bf16 %v3034, %v3032
        %v3087 = vpack.c.bf16 %v3038, %v3036
        %v3088 = vpack.c.bf16 %v3042, %v3040
        %v3089 = vpack.c.bf16 %v3046, %v3044
        %v3090 = vpack.c.bf16 %v3050, %v3048
        %3099 = vrot.lane.b32.xlu0 %v1419, 64
        %v3100 = vpop.permute.xlu0 %3099
        %3101 = vrot.lane.b32.xlu0 %v1421, 64
        %v3102 = vpop.permute.xlu0 %3101
        %3103 = vrot.lane.b32.xlu0 %v1423, 64
        %v3104 = vpop.permute.xlu0 %3103
        %3105 = vrot.lane.b32.xlu0 %v1425, 64
        %v3106 = vpop.permute.xlu0 %3105
        %3107 = vrot.lane.b32.xlu0 %v1427, 64
        %v3108 = vpop.permute.xlu0 %3107
        %3109 = vrot.lane.b32.xlu0 %v1429, 64
        %v3110 = vpop.permute.xlu0 %3109
        %3111 = vrot.lane.b32.xlu0 %v1431, 64
        %v3112 = vpop.permute.xlu0 %3111
        %3113 = vrot.lane.b32.xlu0 %v1433, 64
        %v3114 = vpop.permute.xlu0 %3113
        %3123 = vmatprep.subr.bf16.mxu0 0
        %3124 = vmatpush1.bf16.msra.mxu0 %v3100
        %3125 = vmatprep.subr.bf16.mxu0 0
        %3126 = vmatpush1.bf16.msra.mxu0 %v3102
        %3127 = vmatprep.subr.bf16.mxu0 0
        %3128 = vmatpush1.bf16.msra.mxu0 %v3104
        %3129 = vmatprep.subr.bf16.mxu0 0
        %3130 = vmatpush1.bf16.msra.mxu0 %v3106
        %3131 = vmatprep.subr.bf16.mxu0 0
        %3132 = vmatpush1.bf16.msra.mxu0 %v3108
        %3133 = vmatprep.subr.bf16.mxu0 0
        %3134 = vmatpush1.bf16.msra.mxu0 %v3110
        %3135 = vmatprep.subr.bf16.mxu0 0
        %3136 = vmatpush1.bf16.msra.mxu0 %v3112
        %3137 = vmatprep.subr.bf16.mxu0 0
        %3138 = vmatpush1.bf16.msra.mxu0 %v3114
        %3139 = vmatprep.subr.bf16.mxu0 0
        %3140 = vmatpush1.bf16.msra.mxu0 0
        %3141 = vmatprep.subr.bf16.mxu0 0
        %3142 = vmatpush1.bf16.msra.mxu0 0
        %3143 = vmatprep.subr.bf16.mxu0 0
        %3144 = vmatpush1.bf16.msra.mxu0 0
        %3145 = vmatprep.subr.bf16.mxu0 0
        %3146 = vmatpush1.bf16.msra.mxu0 0
        %3147 = vmatprep.subr.bf16.mxu0 0
        %3148 = vmatpush1.bf16.msra.mxu0 0
        %3149 = vmatprep.subr.bf16.mxu0 0
        %3150 = vmatpush1.bf16.msra.mxu0 0
        %3151 = vmatprep.subr.bf16.mxu0 0
        %3152 = vmatpush1.bf16.msra.mxu0 0
        %3153 = vmatprep.subr.bf16.mxu0 0
        %3154 = vmatpush1.bf16.msra.mxu0 0
        %3155 = vmatprep.mubr.bf16.mxu0 0
        %3156 = vmatmul.mubr.bf16.gmra.mrb[0].mxu0 %v3083
        %v3157 = vpop.f32.mrb[0].mxu0
        %v3158 = vadd.f32 0.0, %v3157
        %v3159 = vpop.f32.mrb[0].mxu0
        %v3160 = vpop.f32.mrb[0].mxu0
        %v3161 = vadd.f32 0.0, %v3160
        %v3162 = vpop.f32.mrb[0].mxu0
        %3163 = vmatprep.mubr.bf16.mxu0 0
        %3164 = vmatmul.mubr.bf16.gmra.mrb[0].mxu0 %v3084
        %v3165 = vpop.f32.mrb[0].mxu0
        %v3166 = vadd.f32 0.0, %v3165
        %v3167 = vpop.f32.mrb[0].mxu0
        %v3168 = vpop.f32.mrb[0].mxu0
        %v3169 = vadd.f32 0.0, %v3168
        %v3170 = vpop.f32.mrb[0].mxu0
        %3171 = vmatprep.mubr.bf16.mxu0 0
        %3172 = vmatmul.mubr.bf16.gmra.mrb[0].mxu0 %v3085
        %v3173 = vpop.f32.mrb[0].mxu0
        %v3174 = vadd.f32 0.0, %v3173
        %v3175 = vpop.f32.mrb[0].mxu0
        %v3176 = vpop.f32.mrb[0].mxu0
        %v3177 = vadd.f32 0.0, %v3176
        %v3178 = vpop.f32.mrb[0].mxu0
        %3179 = vmatprep.mubr.bf16.mxu0 0
        %3180 = vmatmul.mubr.bf16.gmra.mrb[0].mxu0 %v3086
        %v3181 = vpop.f32.mrb[0].mxu0
        %v3182 = vadd.f32 0.0, %v3181
        %v3183 = vpop.f32.mrb[0].mxu0
        %v3184 = vpop.f32.mrb[0].mxu0
        %v3185 = vadd.f32 0.0, %v3184
        %v3186 = vpop.f32.mrb[0].mxu0
        %3187 = vmatprep.mubr.bf16.mxu0 0
        %3188 = vmatmul.mubr.bf16.gmra.mrb[0].mxu0 %v3087
        %v3189 = vpop.f32.mrb[0].mxu0
        %v3190 = vadd.f32 0.0, %v3189
        %v3191 = vpop.f32.mrb[0].mxu0
        %v3192 = vpop.f32.mrb[0].mxu0
        %v3193 = vadd.f32 0.0, %v3192
        %v3194 = vpop.f32.mrb[0].mxu0
        %3195 = vmatprep.mubr.bf16.mxu0 0
        %3196 = vmatmul.mubr.bf16.gmra.mrb[0].mxu0 %v3088
        %v3197 = vpop.f32.mrb[0].mxu0
        %v3198 = vadd.f32 0.0, %v3197
        %v3199 = vpop.f32.mrb[0].mxu0
        %v3200 = vpop.f32.mrb[0].mxu0
        %v3201 = vadd.f32 0.0, %v3200
        %v3202 = vpop.f32.mrb[0].mxu0
        %3203 = vmatprep.mubr.bf16.mxu0 0
        %3204 = vmatmul.mubr.bf16.gmra.mrb[0].mxu0 %v3089
        %v3205 = vpop.f32.mrb[0].mxu0
        %v3206 = vadd.f32 0.0, %v3205
        %v3207 = vpop.f32.mrb[0].mxu0
        %v3208 = vpop.f32.mrb[0].mxu0
        %v3209 = vadd.f32 0.0, %v3208
        %v3210 = vpop.f32.mrb[0].mxu0
        %3211 = vmatprep.mubr.bf16.mxu0 0
        %3212 = vmatmul.mubr.bf16.gmra.mrb[0].mxu0 %v3090
        %v3213 = vpop.f32.mrb[0].mxu0
        %v3214 = vadd.f32 0.0, %v3213
        %v3215 = vpop.f32.mrb[0].mxu0
        %v3216 = vpop.f32.mrb[0].mxu0
        %v3217 = vadd.f32 0.0, %v3216
        %v3218 = vpop.f32.mrb[0].mxu0
        %3219 = vdwg.mxu0
        %v3220 = vrcp.pop %v3052
        %v3221 = vrcp.pop %v3054
        %v3222 = vrcp.pop %v3056
        %v3223 = vrcp.pop %v3058
        %v3224 = vrcp.pop %v3060
        %v3225 = vrcp.pop %v3062
        %v3226 = vrcp.pop %v3064
        %v3227 = vrcp.pop %v3066
        %v3228 = vrcp.pop %v3068
        %v3229 = vrcp.pop %v3070
        %v3230 = vrcp.pop %v3072
        %v3231 = vrcp.pop %v3074
        %v3232 = vrcp.pop %v3076
        %v3233 = vrcp.pop %v3078
        %v3234 = vrcp.pop %v3080
        %v3235 = vrcp.pop %v3082
        %v3236 = vmul.f32 %v3158, %v3220
        %v3237 = vmul.f32 %v3161, %v3221
        %v3238 = vmul.f32 %v3166, %v3222
        %v3239 = vmul.f32 %v3169, %v3223
        %v3240 = vmul.f32 %v3174, %v3224
        %v3241 = vmul.f32 %v3177, %v3225
        %v3242 = vmul.f32 %v3182, %v3226
        %v3243 = vmul.f32 %v3185, %v3227
        %v3244 = vmul.f32 %v3190, %v3228
        %v3245 = vmul.f32 %v3193, %v3229
        %v3246 = vmul.f32 %v3198, %v3230
        %v3247 = vmul.f32 %v3201, %v3231
        %v3248 = vmul.f32 %v3206, %v3232
        %v3249 = vmul.f32 %v3209, %v3233
        %v3250 = vmul.f32 %v3214, %v3234
        %v3251 = vmul.f32 %v3217, %v3235
        %v3252 = vpack.c.bf16 %v3237, %v3236
        %v3253 = vpack.c.bf16 %v3239, %v3238
        %v3254 = vpack.c.bf16 %v3241, %v3240
        %v3255 = vpack.c.bf16 %v3243, %v3242
        %v3256 = vpack.c.bf16 %v3245, %v3244
        %v3257 = vpack.c.bf16 %v3247, %v3246
        %v3258 = vpack.c.bf16 %v3249, %v3248
        %v3259 = vpack.c.bf16 %v3251, %v3250
        %3268 = vrot.lane.b32.xlu0 %v3252, 64
        %v3269 = vpop.permute.xlu0 %3268
        %3270 = vrot.lane.b32.xlu0 %v3253, 64
        %v3271 = vpop.permute.xlu0 %3270
        %3272 = vrot.lane.b32.xlu0 %v3254, 64
        %v3273 = vpop.permute.xlu0 %3272
        %3274 = vrot.lane.b32.xlu0 %v3255, 64
        %v3275 = vpop.permute.xlu0 %3274
        %3276 = vrot.lane.b32.xlu0 %v3256, 64
        %v3277 = vpop.permute.xlu0 %3276
        %3278 = vrot.lane.b32.xlu0 %v3257, 64
        %v3279 = vpop.permute.xlu0 %3278
        %3280 = vrot.lane.b32.xlu0 %v3258, 64
        %v3281 = vpop.permute.xlu0 %3280
        %3282 = vrot.lane.b32.xlu0 %v3259, 64
        %v3283 = vpop.permute.xlu0 %3282
        %3292 = vst.msk [vmem:[#allocation2 + $0x8] sm:$0xff] %vm2359, %v3269
        %3293 = vst.msk [vmem:[#allocation2 + $0x18] sm:$0xff] %vm2359, %v3271
        %3294 = vst.msk [vmem:[#allocation2 + $0x28] sm:$0xff] %vm2359, %v3273
        %3295 = vst.msk [vmem:[#allocation2 + $0x38] sm:$0xff] %vm2359, %v3275
        %3296 = vst.msk [vmem:[#allocation2 + $0x48] sm:$0xff] %vm2359, %v3277
        %3297 = vst.msk [vmem:[#allocation2 + $0x58] sm:$0xff] %vm2359, %v3279
        %3298 = vst.msk [vmem:[#allocation2 + $0x68] sm:$0xff] %vm2359, %v3281
        %3299 = vst.msk [vmem:[#allocation2 + $0x78] sm:$0xff] %vm2359, %v3283
        %v3300 = vld [vmem:[#allocation2] sm:$0xff]
        %v3301 = vld [vmem:[#allocation2 + $0x8] sm:$0xff]
        %v3302 = vld [vmem:[#allocation2 + $0x10] sm:$0xff]
        %v3303 = vld [vmem:[#allocation2 + $0x18] sm:$0xff]
        %v3304 = vld [vmem:[#allocation2 + $0x20] sm:$0xff]
        %v3305 = vld [vmem:[#allocation2 + $0x28] sm:$0xff]
        %v3306 = vld [vmem:[#allocation2 + $0x30] sm:$0xff]
        %v3307 = vld [vmem:[#allocation2 + $0x38] sm:$0xff]
        %v3308 = vld [vmem:[#allocation2 + $0x40] sm:$0xff]
        %v3309 = vld [vmem:[#allocation2 + $0x48] sm:$0xff]
        %v3310 = vld [vmem:[#allocation2 + $0x50] sm:$0xff]
        %v3311 = vld [vmem:[#allocation2 + $0x58] sm:$0xff]
        %v3312 = vld [vmem:[#allocation2 + $0x60] sm:$0xff]
        %v3313 = vld [vmem:[#allocation2 + $0x68] sm:$0xff]
        %v3314 = vld [vmem:[#allocation2 + $0x70] sm:$0xff]
        %v3315 = vld [vmem:[#allocation2 + $0x78] sm:$0xff]
        %v3316 = vld [vmem:[#allocation11] sm:$0xff]
        %v3317 = vld [vmem:[#allocation11 + $0x8] sm:$0xff]
        %v3318 = vld [vmem:[#allocation11 + $0x10] sm:$0xff]
        %v3319 = vld [vmem:[#allocation11 + $0x18] sm:$0xff]
        %v3320 = vld [vmem:[#allocation11 + $0x20] sm:$0xff]
        %v3321 = vld [vmem:[#allocation11 + $0x28] sm:$0xff]
        %v3322 = vld [vmem:[#allocation11 + $0x30] sm:$0xff]
        %v3323 = vld [vmem:[#allocation11 + $0x38] sm:$0xff]
        %v3324 = vld [vmem:[#allocation11 + $0x40] sm:$0xff]
        %v3325 = vld [vmem:[#allocation11 + $0x48] sm:$0xff]
        %v3326 = vld [vmem:[#allocation11 + $0x50] sm:$0xff]
        %v3327 = vld [vmem:[#allocation11 + $0x58] sm:$0xff]
        %v3328 = vld [vmem:[#allocation11 + $0x60] sm:$0xff]
        %v3329 = vld [vmem:[#allocation11 + $0x68] sm:$0xff]
        %v3330 = vld [vmem:[#allocation11 + $0x70] sm:$0xff]
        %v3331 = vld [vmem:[#allocation11 + $0x78] sm:$0xff]
        %v3332 = vld [vmem:[#allocation11 + $0x80] sm:$0xff]
        %v3333 = vld [vmem:[#allocation11 + $0x88] sm:$0xff]
        %v3334 = vld [vmem:[#allocation11 + $0x90] sm:$0xff]
        %v3335 = vld [vmem:[#allocation11 + $0x98] sm:$0xff]
        %v3336 = vld [vmem:[#allocation11 + $0xa0] sm:$0xff]
        %v3337 = vld [vmem:[#allocation11 + $0xa8] sm:$0xff]
        %v3338 = vld [vmem:[#allocation11 + $0xb0] sm:$0xff]
        %v3339 = vld [vmem:[#allocation11 + $0xb8] sm:$0xff]
        %v3340 = vld [vmem:[#allocation11 + $0xc0] sm:$0xff]
        %v3341 = vld [vmem:[#allocation11 + $0xc8] sm:$0xff]
        %v3342 = vld [vmem:[#allocation11 + $0xd0] sm:$0xff]
        %v3343 = vld [vmem:[#allocation11 + $0xd8] sm:$0xff]
        %v3344 = vld [vmem:[#allocation11 + $0xe0] sm:$0xff]
        %v3345 = vld [vmem:[#allocation11 + $0xe8] sm:$0xff]
        %v3346 = vld [vmem:[#allocation11 + $0xf0] sm:$0xff]
        %v3347 = vld [vmem:[#allocation11 + $0xf8] sm:$0xff]
        %v3348 = vld [vmem:[%s5] sm:$0x3]
        %v3350 = vlaneseq
        %v3351 = vshrl.u32 %v3350, 7
        %v3352 = vsub.s32 0, %v3351
        %v3353 = vrot.slane %v3348, %v3352
        %v3354 = vlaneseq
        %v3355 = vshrl.u32 %v3354, 7
        %v3356 = vsub.s32 1, %v3355
        %v3357 = vrot.slane %v3348, %v3356
        %v3392 = vunpack.c.l.b16 %v3316
        %v3393 = vunpack.c.h.b16 %v3316
        %v3394 = vunpack.c.l.b16 %v3317
        %v3395 = vunpack.c.h.b16 %v3317
        %v3396 = vunpack.c.l.b16 %v3318
        %v3397 = vunpack.c.h.b16 %v3318
        %v3398 = vunpack.c.l.b16 %v3319
        %v3399 = vunpack.c.h.b16 %v3319
        %v3400 = vunpack.c.l.b16 %v3320
        %v3401 = vunpack.c.h.b16 %v3320
        %v3402 = vunpack.c.l.b16 %v3321
        %v3403 = vunpack.c.h.b16 %v3321
        %v3404 = vunpack.c.l.b16 %v3322
        %v3405 = vunpack.c.h.b16 %v3322
        %v3406 = vunpack.c.l.b16 %v3323
        %v3407 = vunpack.c.h.b16 %v3323
        %v3408 = vunpack.c.l.b16 %v3324
        %v3409 = vunpack.c.h.b16 %v3324
        %v3410 = vunpack.c.l.b16 %v3325
        %v3411 = vunpack.c.h.b16 %v3325
        %v3412 = vunpack.c.l.b16 %v3326
        %v3413 = vunpack.c.h.b16 %v3326
        %v3414 = vunpack.c.l.b16 %v3327
        %v3415 = vunpack.c.h.b16 %v3327
        %v3416 = vunpack.c.l.b16 %v3328
        %v3417 = vunpack.c.h.b16 %v3328
        %v3418 = vunpack.c.l.b16 %v3329
        %v3419 = vunpack.c.h.b16 %v3329
        %v3420 = vunpack.c.l.b16 %v3330
        %v3421 = vunpack.c.h.b16 %v3330
        %v3422 = vunpack.c.l.b16 %v3331
        %v3423 = vunpack.c.h.b16 %v3331
        %v3424 = vunpack.c.l.b16 %v3332
        %v3425 = vunpack.c.h.b16 %v3332
        %v3426 = vunpack.c.l.b16 %v3333
        %v3427 = vunpack.c.h.b16 %v3333
        %v3428 = vunpack.c.l.b16 %v3334
        %v3429 = vunpack.c.h.b16 %v3334
        %v3430 = vunpack.c.l.b16 %v3335
        %v3431 = vunpack.c.h.b16 %v3335
        %v3432 = vunpack.c.l.b16 %v3336
        %v3433 = vunpack.c.h.b16 %v3336
        %v3434 = vunpack.c.l.b16 %v3337
        %v3435 = vunpack.c.h.b16 %v3337
        %v3436 = vunpack.c.l.b16 %v3338
        %v3437 = vunpack.c.h.b16 %v3338
        %v3438 = vunpack.c.l.b16 %v3339
        %v3439 = vunpack.c.h.b16 %v3339
        %v3440 = vunpack.c.l.b16 %v3340
        %v3441 = vunpack.c.h.b16 %v3340
        %v3442 = vunpack.c.l.b16 %v3341
        %v3443 = vunpack.c.h.b16 %v3341
        %v3444 = vunpack.c.l.b16 %v3342
        %v3445 = vunpack.c.h.b16 %v3342
        %v3446 = vunpack.c.l.b16 %v3343
        %v3447 = vunpack.c.h.b16 %v3343
        %v3448 = vunpack.c.l.b16 %v3344
        %v3449 = vunpack.c.h.b16 %v3344
        %v3450 = vunpack.c.l.b16 %v3345
        %v3451 = vunpack.c.h.b16 %v3345
        %v3452 = vunpack.c.l.b16 %v3346
        %v3453 = vunpack.c.h.b16 %v3346
        %v3454 = vunpack.c.l.b16 %v3347
        %v3455 = vunpack.c.h.b16 %v3347
        %v3456 = vpack.c.b16 %v3394, %v3392
        %v3457 = vpack.c.b16 %v3395, %v3393
        %v3458 = vpack.c.b16 %v3398, %v3396
        %v3459 = vpack.c.b16 %v3399, %v3397
        %v3460 = vpack.c.b16 %v3402, %v3400
        %v3461 = vpack.c.b16 %v3403, %v3401
        %v3462 = vpack.c.b16 %v3406, %v3404
        %v3463 = vpack.c.b16 %v3407, %v3405
        %v3464 = vpack.c.b16 %v3410, %v3408
        %v3465 = vpack.c.b16 %v3411, %v3409
        %v3466 = vpack.c.b16 %v3414, %v3412
        %v3467 = vpack.c.b16 %v3415, %v3413
        %v3468 = vpack.c.b16 %v3418, %v3416
        %v3469 = vpack.c.b16 %v3419, %v3417
        %v3470 = vpack.c.b16 %v3422, %v3420
        %v3471 = vpack.c.b16 %v3423, %v3421
        %v3472 = vpack.c.b16 %v3426, %v3424
        %v3473 = vpack.c.b16 %v3427, %v3425
        %v3474 = vpack.c.b16 %v3430, %v3428
        %v3475 = vpack.c.b16 %v3431, %v3429
        %v3476 = vpack.c.b16 %v3434, %v3432
        %v3477 = vpack.c.b16 %v3435, %v3433
        %v3478 = vpack.c.b16 %v3438, %v3436
        %v3479 = vpack.c.b16 %v3439, %v3437
        %v3480 = vpack.c.b16 %v3442, %v3440
        %v3481 = vpack.c.b16 %v3443, %v3441
        %v3482 = vpack.c.b16 %v3446, %v3444
        %v3483 = vpack.c.b16 %v3447, %v3445
        %v3484 = vpack.c.b16 %v3450, %v3448
        %v3485 = vpack.c.b16 %v3451, %v3449
        %v3486 = vpack.c.b16 %v3454, %v3452
        %v3487 = vpack.c.b16 %v3455, %v3453
        %3520 = vmatprep.subr.bf16.mxu0 %v3457
        %3521 = vmatpush1.bf16.msra.mxu0 %v3456
        %3522 = vmatprep.subr.bf16.mxu0 %v3459
        %3523 = vmatpush1.bf16.msra.mxu0 %v3458
        %3524 = vmatprep.subr.bf16.mxu0 %v3461
        %3525 = vmatpush1.bf16.msra.mxu0 %v3460
        %3526 = vmatprep.subr.bf16.mxu0 %v3463
        %3527 = vmatpush1.bf16.msra.mxu0 %v3462
        %3528 = vmatprep.subr.bf16.mxu0 %v3465
        %3529 = vmatpush1.bf16.msra.mxu0 %v3464
        %3530 = vmatprep.subr.bf16.mxu0 %v3467
        %3531 = vmatpush1.bf16.msra.mxu0 %v3466
        %3532 = vmatprep.subr.bf16.mxu0 %v3469
        %3533 = vmatpush1.bf16.msra.mxu0 %v3468
        %3534 = vmatprep.subr.bf16.mxu0 %v3471
        %3535 = vmatpush1.bf16.msra.mxu0 %v3470
        %3536 = vmatprep.subr.bf16.mxu0 %v3473
        %3537 = vmatpush1.bf16.msra.mxu0 %v3472
        %3538 = vmatprep.subr.bf16.mxu0 %v3475
        %3539 = vmatpush1.bf16.msra.mxu0 %v3474
        %3540 = vmatprep.subr.bf16.mxu0 %v3477
        %3541 = vmatpush1.bf16.msra.mxu0 %v3476
        %3542 = vmatprep.subr.bf16.mxu0 %v3479
        %3543 = vmatpush1.bf16.msra.mxu0 %v3478
        %3544 = vmatprep.subr.bf16.mxu0 %v3481
        %3545 = vmatpush1.bf16.msra.mxu0 %v3480
        %3546 = vmatprep.subr.bf16.mxu0 %v3483
        %3547 = vmatpush1.bf16.msra.mxu0 %v3482
        %3548 = vmatprep.subr.bf16.mxu0 %v3485
        %3549 = vmatpush1.bf16.msra.mxu0 %v3484
        %3550 = vmatprep.subr.bf16.mxu0 %v3487
        %3551 = vmatpush1.bf16.msra.mxu0 %v3486
        %3552 = vmatprep.mubr.bf16.mxu0 %v3301
        %3553 = vmatmul.mubr.bf16.gmra.mrb[0].mxu0 %v3300
        %v3554 = vpop.f32.mrb[0].mxu0
        %v3555 = vadd.f32 %v3353, %v3554
        %v3556 = vpop.f32.mrb[0].mxu0
        %v3557 = vadd.f32 %v3357, %v3556
        %v3558 = vpop.f32.mrb[0].mxu0
        %v3559 = vadd.f32 %v3353, %v3558
        %v3560 = vpop.f32.mrb[0].mxu0
        %v3561 = vadd.f32 %v3357, %v3560
        %3562 = vmatprep.mubr.bf16.mxu0 %v3303
        %3563 = vmatmul.mubr.bf16.gmra.mrb[0].mxu0 %v3302
        %v3564 = vpop.f32.mrb[0].mxu0
        %v3565 = vadd.f32 %v3353, %v3564
        %v3566 = vpop.f32.mrb[0].mxu0
        %v3567 = vadd.f32 %v3357, %v3566
        %v3568 = vpop.f32.mrb[0].mxu0
        %v3569 = vadd.f32 %v3353, %v3568
        %v3570 = vpop.f32.mrb[0].mxu0
        %v3571 = vadd.f32 %v3357, %v3570
        %3572 = vmatprep.mubr.bf16.mxu0 %v3305
        %3573 = vmatmul.mubr.bf16.gmra.mrb[0].mxu0 %v3304
        %v3574 = vpop.f32.mrb[0].mxu0
        %v3575 = vadd.f32 %v3353, %v3574
        %v3576 = vpop.f32.mrb[0].mxu0
        %v3577 = vadd.f32 %v3357, %v3576
        %v3578 = vpop.f32.mrb[0].mxu0
        %v3579 = vadd.f32 %v3353, %v3578
        %v3580 = vpop.f32.mrb[0].mxu0
        %v3581 = vadd.f32 %v3357, %v3580
        %3582 = vmatprep.mubr.bf16.mxu0 %v3307
        %3583 = vmatmul.mubr.bf16.gmra.mrb[0].mxu0 %v3306
        %v3584 = vpop.f32.mrb[0].mxu0
        %v3585 = vadd.f32 %v3353, %v3584
        %v3586 = vpop.f32.mrb[0].mxu0
        %v3587 = vadd.f32 %v3357, %v3586
        %v3588 = vpop.f32.mrb[0].mxu0
        %v3589 = vadd.f32 %v3353, %v3588
        %v3590 = vpop.f32.mrb[0].mxu0
        %v3591 = vadd.f32 %v3357, %v3590
        %3592 = vmatprep.mubr.bf16.mxu0 %v3309
        %3593 = vmatmul.mubr.bf16.gmra.mrb[0].mxu0 %v3308
        %v3594 = vpop.f32.mrb[0].mxu0
        %v3595 = vadd.f32 %v3353, %v3594
        %v3596 = vpop.f32.mrb[0].mxu0
        %v3597 = vadd.f32 %v3357, %v3596
        %v3598 = vpop.f32.mrb[0].mxu0
        %v3599 = vadd.f32 %v3353, %v3598
        %v3600 = vpop.f32.mrb[0].mxu0
        %v3601 = vadd.f32 %v3357, %v3600
        %3602 = vmatprep.mubr.bf16.mxu0 %v3311
        %3603 = vmatmul.mubr.bf16.gmra.mrb[0].mxu0 %v3310
        %v3604 = vpop.f32.mrb[0].mxu0
        %v3605 = vadd.f32 %v3353, %v3604
        %v3606 = vpop.f32.mrb[0].mxu0
        %v3607 = vadd.f32 %v3357, %v3606
        %v3608 = vpop.f32.mrb[0].mxu0
        %v3609 = vadd.f32 %v3353, %v3608
        %v3610 = vpop.f32.mrb[0].mxu0
        %v3611 = vadd.f32 %v3357, %v3610
        %3612 = vmatprep.mubr.bf16.mxu0 %v3313
        %3613 = vmatmul.mubr.bf16.gmra.mrb[0].mxu0 %v3312
        %v3614 = vpop.f32.mrb[0].mxu0
        %v3615 = vadd.f32 %v3353, %v3614
        %v3616 = vpop.f32.mrb[0].mxu0
        %v3617 = vadd.f32 %v3357, %v3616
        %v3618 = vpop.f32.mrb[0].mxu0
        %v3619 = vadd.f32 %v3353, %v3618
        %v3620 = vpop.f32.mrb[0].mxu0
        %v3621 = vadd.f32 %v3357, %v3620
        %3622 = vmatprep.mubr.bf16.mxu0 %v3315
        %3623 = vmatmul.mubr.bf16.gmra.mrb[0].mxu0 %v3314
        %v3624 = vpop.f32.mrb[0].mxu0
        %v3625 = vadd.f32 %v3353, %v3624
        %v3626 = vpop.f32.mrb[0].mxu0
        %v3627 = vadd.f32 %v3357, %v3626
        %v3628 = vpop.f32.mrb[0].mxu0
        %v3629 = vadd.f32 %v3353, %v3628
        %v3630 = vpop.f32.mrb[0].mxu0
        %v3631 = vadd.f32 %v3357, %v3630
        %3632 = vdwg.mxu0
        %3633 = vst [vmem:[%s371] sm:$0xff] %v3555
        %3634 = vst [vmem:[%s371 + $0x8] sm:$0xff] %v3557
        %3635 = vst [vmem:[%s371 + $0x10] sm:$0xff] %v3559
        %3636 = vst [vmem:[%s371 + $0x18] sm:$0xff] %v3561
        %3637 = vst [vmem:[%s371 + $0x20] sm:$0xff] %v3565
        %3638 = vst [vmem:[%s371 + $0x28] sm:$0xff] %v3567
        %3639 = vst [vmem:[%s371 + $0x30] sm:$0xff] %v3569
        %3640 = vst [vmem:[%s371 + $0x38] sm:$0xff] %v3571
        %3641 = vst [vmem:[%s371 + $0x40] sm:$0xff] %v3575
        %3642 = vst [vmem:[%s371 + $0x48] sm:$0xff] %v3577
        %3643 = vst [vmem:[%s371 + $0x50] sm:$0xff] %v3579
        %3644 = vst [vmem:[%s371 + $0x58] sm:$0xff] %v3581
        %3645 = vst [vmem:[%s371 + $0x60] sm:$0xff] %v3585
        %3646 = vst [vmem:[%s371 + $0x68] sm:$0xff] %v3587
        %3647 = vst [vmem:[%s371 + $0x70] sm:$0xff] %v3589
        %3648 = vst [vmem:[%s371 + $0x78] sm:$0xff] %v3591
        %3649 = vst [vmem:[%s371 + $0x80] sm:$0xff] %v3595
        %3650 = vst [vmem:[%s371 + $0x88] sm:$0xff] %v3597
        %3651 = vst [vmem:[%s371 + $0x90] sm:$0xff] %v3599
        %3652 = vst [vmem:[%s371 + $0x98] sm:$0xff] %v3601
        %3653 = vst [vmem:[%s371 + $0xa0] sm:$0xff] %v3605
        %3654 = vst [vmem:[%s371 + $0xa8] sm:$0xff] %v3607
        %3655 = vst [vmem:[%s371 + $0xb0] sm:$0xff] %v3609
        %3656 = vst [vmem:[%s371 + $0xb8] sm:$0xff] %v3611
        %3657 = vst [vmem:[%s371 + $0xc0] sm:$0xff] %v3615
        %3658 = vst [vmem:[%s371 + $0xc8] sm:$0xff] %v3617
        %3659 = vst [vmem:[%s371 + $0xd0] sm:$0xff] %v3619
        %3660 = vst [vmem:[%s371 + $0xd8] sm:$0xff] %v3621
        %3661 = vst [vmem:[%s371 + $0xe0] sm:$0xff] %v3625
        %3662 = vst [vmem:[%s371 + $0xe8] sm:$0xff] %v3627
        %3663 = vst [vmem:[%s371 + $0xf0] sm:$0xff] %v3629
        %3664 = vst [vmem:[%s371 + $0xf8] sm:$0xff] %v3631
        %s3665 = sand.u32 %s187, 1
        %s3666 = scalar_lea.sflag [#allocation5], %s3665
        %s3667 = sand.u32 %s187, 1
        %s3668 = smul.addr %s3667, 256
        %s3669 = scalar_lea.vmem [#allocation12], %s3668
        // Predicated region
        $region65: #{cross_attention.1} parent=43 // pred_check
          %p3670 = pneg %p197
        $region66: #{cross_attention.1} parent=43 // pred_check_branch
          %3672 = sbr.rel (%p3670) target = $region68
        $region67: #{cross_attention.1} parent=43 // pred_region
          %s3673 = smul.u32 16, %s32
          %s3675 = ssub.s32 4096, 4096
          %3676 = vsyncadd %s3666, %s3675
          %s3677 = smul.addr %s3673, 2
          %s3678 = smul.addr %s31, 32
          %s3679 = sadd.s32 %s3677, %s3678
          %s3680 = smul.addr %s3679, 128
          %s3681 = scalar_lea.hbm %s6, %s3680
          %s3682 = sshll.u32 %s3669, 4
          %s3683 = int_to_ptr.vmem [resolvable:$true] %s3682
          %3688 = dma.vmem_to_hbm [thread:$0]  %s3683, 4096, %s3681, %s3666, 256, 256, 16
        $region68: #{cross_attention.1} parent=43 // pred_fallthru
          _
      $region44: #{cross_attention.1} parent=5 // pred_fallthru
        _
      %p3689 = scmp.le.s32.totalorder 2, %s22
      // Predicated region
      $region69: #{cross_attention.1} parent=5 // pred_check
        %p3690 = pneg %p3689
      $region70: #{cross_attention.1} parent=5 // pred_check_branch
        %3692 = sbr.rel (%p3690) target = $region72
      $region71: #{cross_attention.1} parent=5 // pred_region
        %s3693 = ssub.s32 %s22, 2
        // Predicated region
        $region73: #{cross_attention.1} parent=71 // pred_check
          %p3694 = pneg %p203
        $region74: #{cross_attention.1} parent=71 // pred_check_branch
          %3696 = sbr.rel (%p3694) target = $region76
        $region75: #{cross_attention.1} parent=71 // pred_region
          %s3697 = sand.u32 %s188, 1
          %s3698 = scalar_lea.sflag [#allocation5], %s3697
          %s3699 = sand.u32 %s188, 1
          %s3700 = smul.addr %s3699, 256
          %s3701 = scalar_lea.vmem [#allocation12], %s3700
          %3702 = dma.done %s3698, 4096
        $region76: #{cross_attention.1} parent=71 // pred_fallthru
          _
      $region72: #{cross_attention.1} parent=5 // pred_fallthru
        _
    $region6: #{cross_attention.1} parent=1 // loop_footer
      %s26 = sadd.s32 1, %s22
    $region7: #{cross_attention.1} parent=1 // loop_footer_branch
      %21 = sbr.rel target = $region3
    $region8: #{cross_attention.1} parent=1 // loop_exit
      _
    %3703 = vsyncpa [#allocation4], 1
    %s3704 = scalar_lea.sflag [#allocation4], 1
    %3705 = vsyncpa %s3704, 1
    %3706 = vsyncpa [#allocation7], 1
    %s3707 = scalar_lea.sflag [#allocation7], 1
    %3708 = vsyncpa %s3707, 1
    %3709 = vsyncpa [#allocation10], 1
    %3710 = vsyncpa [#allocation5], 1
    %s3711 = scalar_lea.sflag [#allocation5], 1
    %3712 = vsyncpa %s3711, 1

</llo_original>
